<compile_context>
chip_gen: v5e
topology: v5e:2x2
jax: 0.10.0
libtpu: 0.0.40
codegen_flags: <defaults>
</compile_context>

<pallas_src>
import numpy as np
import jax
import jax.numpy as jnp
from jax import lax
from jax.experimental import pallas as pl
from jax.experimental.pallas import tpu as pltpu

D = 768          # encoder hidden size (fixed by w_context / w_candidate shapes)
H = 128          # BiDirectionalAttentionLayer hidden_size
EPS = 1e-8       # torch.cosine_similarity eps


# ---------------------------------------------------------------------------
# Fused per-item kernel: 2x BiDirectionalAttentionLayer + all cosine scores
# ---------------------------------------------------------------------------
def _reranker_kernel(qc_ref, ans_ref, cand_ref, kw_ref,
                     wqkv_ref, bqkv_ref, wo_ref, bo_ref,
                     nwc_ref, nwctx_ref, nwkw_ref, out_ref):
    f32 = jnp.float32
    bf16 = jnp.bfloat16
    dnums = (((1,), (1,)), ((), ()))            # contract last dims, no batch dims

    qc = qc_ref[...]                            # (2B, D) f32: rows 0..B-1 question, B..2B-1 context
    twoB = qc.shape[0]
    B = twoB // 2
    BC = cand_ref.shape[0]
    K = kw_ref.shape[0]
    scale = f32(1.0 / np.sqrt(H))
    eps2 = f32(EPS * EPS)

    def inv_norm(x):
        # 1 / max(||x||, eps) per row == rsqrt(max(||x||^2, eps^2)): one EUP op
        return lax.rsqrt(jnp.maximum(jnp.sum(x * x, axis=-1, keepdims=True), eps2))

    def attend(q, k, v):
        # softmax(q k^T / sqrt(H)) v ; MXU operands bf16, f32 accumulate
        s = lax.dot_general(q.astype(bf16), k.astype(bf16), dnums,
                            preferred_element_type=f32) * scale          # (B, B)
        s = s - jnp.max(s, axis=-1, keepdims=True)
        e = jnp.exp(s)
        p = e * pl.reciprocal(jnp.sum(e, axis=-1, keepdims=True), approx=True)
        return jnp.dot(p.astype(bf16), v.astype(bf16),
                       preferred_element_type=f32)                        # (B, H)

    bo = bo_ref[...]                            # (1, D) f32

    def out_proj(q, ctx):
        # Linear(cat([q, ctx])): lane concat at exact 128 boundary, single full-Wo matmul
        h = jnp.concatenate([q, ctx], axis=-1).astype(bf16)               # (B, 2H)
        return jnp.dot(h, wo_ref[...], preferred_element_type=f32) + bo   # (B, D)

    # ---- pass 1 projections fused: one (2B, D) @ (D, 3H) matmul -----------
    qkv = (jnp.dot(qc.astype(bf16), wqkv_ref[...], preferred_element_type=f32)
           + bqkv_ref[...])                                               # (2B, 3H)
    q1 = qkv[:B, :H]          # question @ Wq
    q2 = qkv[B:, :H]          # context  @ Wq  (reused by pass 2)
    k1 = qkv[B:, H:2 * H]     # context  @ Wk
    v1 = qkv[B:, 2 * H:]      # context  @ Wv
    q_new = out_proj(q1, attend(q1, k1, v1))                              # (B, D)

    # ---- pass 2: (context, q_new) ------------------------------------------
    kv2 = (jnp.dot(q_new.astype(bf16), wqkv_ref[:, H:], preferred_element_type=f32)
           + bqkv_ref[:, H:])                                             # (B, 2H)
    ctx_new = out_proj(q2, attend(q2, kv2[:, :H], kv2[:, H:]))            # (B, D)

    # ---- cosine scores: row-normalize once, contract D on the MXU ----------
    cand = cand_ref[...]                                                  # (BC, D)
    cand_n = cand * inv_norm(cand)                                        # unit rows
    wc = cand * nwc_ref[...]                                              # candidate * nw_cand
    wc_n = wc * inv_norm(wc)

    q_new_n = q_new * inv_norm(q_new)                                     # (B, D)
    wctx = ctx_new * nwctx_ref[...]
    wctx_n = wctx * inv_norm(wctx)

    # (B, BC) lane-oriented cosine matrices (block-diagonal entries are the scores)
    score = lax.dot_general(q_new_n, cand_n, dnums, preferred_element_type=f32)
    cks = lax.dot_general(wctx_n, wc_n, dnums, preferred_element_type=f32)

    # extra_score = mean_k cos(kw_k*nw_kw, cand*nw_cand)
    #             = (1/K) * (sum_k wkw_k / max(|wkw_k|,eps)) . wc_n
    wkw = kw_ref[...] * nwkw_ref[...]                                     # (K, D)
    u_sum = jnp.sum(wkw * inv_norm(wkw), axis=0, keepdims=True)           # (1, D)
    extra = (lax.dot_general(u_sum, wc_n, dnums, preferred_element_type=f32)
             * f32(1.0 / K))                                              # (1, BC)

    # answer_score = cos(answer_emb, RAW question_emb)
    ans = ans_ref[...]                                                    # (B, D)
    q_raw = qc[:B, :]
    a_score = (jnp.sum(ans * q_raw, axis=-1, keepdims=True)
               * inv_norm(ans) * inv_norm(q_raw))                         # (B, 1)

    out_ref[0] = score
    out_ref[1] = cks
    out_ref[2] = jnp.broadcast_to(extra, (B, BC))
    out_ref[3] = jnp.broadcast_to(a_score, (B, BC))


# ---------------------------------------------------------------------------
# One-time parameter preprocessing (outside the per-call hot path)
# ---------------------------------------------------------------------------
def prepare_params(params, batch_size):
    wqkv = jnp.concatenate([params["wq"].T, params["wk"].T, params["wv"].T],
                           axis=1)                                        # (D, 3H)
    bqkv = jnp.concatenate([params["bq"], params["bk"], params["bv"]])
    nw_cand = params["w_candidate"] / jnp.sum(params["w_candidate"])      # (C, D)
    return {
        "wqkv": wqkv.astype(jnp.bfloat16),
        "bqkv": bqkv.reshape(1, 3 * H).astype(jnp.float32),
        "wo": params["wo"].T.astype(jnp.bfloat16),                        # (2H, D)
        "bo": params["bo"].reshape(1, D).astype(jnp.float32),
        "nw_candidate_tiled": jnp.tile(nw_cand, (batch_size, 1)).astype(jnp.float32),
        "nw_context": (params["w_context"]
                       / jnp.sum(params["w_context"])).astype(jnp.float32),
        "nw_keyword": (params["w_keyword"]
                       / jnp.sum(params["w_keyword"])).astype(jnp.float32),
    }


# ---------------------------------------------------------------------------
# Wrappers
# ---------------------------------------------------------------------------
@jax.jit
def reranker_forward_batched(question_emb, context_emb, answer_emb,
                             candidate_emb, keyword_embs, prep):
    """N independent reranker items in one pallas_call (weights VMEM-resident)."""
    N, B, C, _ = candidate_emb.shape
    K = keyword_embs.shape[1]
    BC = B * C

    qc = jnp.concatenate([question_emb, context_emb], axis=1)             # (N, 2B, D)
    cand = candidate_emb.reshape(N, BC, D)                                # row-major: b*C + c

    args = (qc, answer_emb, cand, keyword_embs,
            prep["wqkv"], prep["bqkv"], prep["wo"], prep["bo"],
            prep["nw_candidate_tiled"], prep["nw_context"], prep["nw_keyword"])

    in_specs = [
        pl.BlockSpec((None, 2 * B, D), lambda n: (n, 0, 0)),   # qc        (per item)
        pl.BlockSpec((None, B, D), lambda n: (n, 0, 0)),       # answers   (per item)
        pl.BlockSpec((None, BC, D), lambda n: (n, 0, 0)),      # candidates(per item)
        pl.BlockSpec((None, K, D), lambda n: (n, 0, 0)),       # keywords  (per item)
    ] + [pl.BlockSpec(w.shape, lambda n: (0, 0)) for w in args[4:]]   # weights: resident

    packed = pl.pallas_call(
        _reranker_kernel,
        grid=(N,),
        out_shape=jax.ShapeDtypeStruct((N, 4, B, BC), jnp.float32),
        in_specs=in_specs,
        out_specs=pl.BlockSpec((None, 4, B, BC), lambda n: (n, 0, 0, 0)),
        compiler_params=pltpu.CompilerParams(
            dimension_semantics=("parallel",),                  # v7x megacore sharding
            vmem_limit_bytes=32 * 1024 * 1024),
    )(*args)                                                    # (N, 4, B, BC)

    # extract the block-diagonal (b, b*C + c) entries of each (B, BC) cosine matrix
    p4 = packed.reshape(N, 4, B, B, C)
    idx = jnp.arange(B)
    sel = p4[:, :, idx, idx, :]                                 # (N, 4, B, C)
    return {
        "score": sel[:, 0],
        "knowledge_score": sel[:, 1],
        "extra_score": sel[:, 2],
        "external_knowledge_score": None,
        "answer_score": sel[:, 3, :, 0],
    }


def reranker_forward(question_emb, context_emb, answer_emb, candidate_emb,
                     keyword_embs, prep):
    """Single-call forward matching ReRanker.forward on precomputed [CLS] embeddings."""
    out = reranker_forward_batched(
        question_emb[None], context_emb[None], answer_emb[None],
        candidate_emb[None], keyword_embs[None], prep)
    return {
        "score": out["score"][0],
        "knowledge_score": out["knowledge_score"][0],
        "extra_score": out["extra_score"][0],
        "external_knowledge_score": None,
        "answer_score": out["answer_score"][0],
    }


# ---------------------------------------------------------------------------
# Pure-JAX reference (f32, for the sanity check only)
# ---------------------------------------------------------------------------
def _cos_ref(a, b):
    dot = jnp.sum(a * b, axis=-1)
    na = jnp.sqrt(jnp.sum(a * a, axis=-1))
    nb = jnp.sqrt(jnp.sum(b * b, axis=-1))
    return dot / (jnp.maximum(na, EPS) * jnp.maximum(nb, EPS))


def _bidir_ref(x, y, p):
    q = x @ p["wq"].T + p["bq"]
    k = y @ p["wk"].T + p["bk"]
    v = y @ p["wv"].T + p["bv"]
    s = (q @ k.T) / np.sqrt(H)
    a = jax.nn.softmax(s, axis=-1)
    ctx = a @ v
    return jnp.concatenate([q, ctx], axis=-1) @ p["wo"].T + p["bo"]


def _forward_ref(q_raw, c_raw, ans, cand, kw, p):
    q_new = _bidir_ref(q_raw, c_raw, p)
    c_new = _bidir_ref(c_raw, q_new, p)
    score = _cos_ref(cand, q_new[:, None, :])
    nw_cand = p["w_candidate"] / jnp.sum(p["w_candidate"])
    nw_ctx = p["w_context"] / jnp.sum(p["w_context"])
    nw_kw = p["w_keyword"] / jnp.sum(p["w_keyword"])
    cks = _cos_ref(cand * nw_cand[None], c_new[:, None, :] * nw_ctx)
    extras = []
    for i in range(kw.shape[0]):
        extras.append(_cos_ref(kw[i][None, None, :] * nw_kw, cand * nw_cand[None]))
    extra = jnp.mean(jnp.stack(extras, 0), axis=0)
    ans_score = _cos_ref(ans, q_raw)
    return score, cks, extra, ans_score


# ---------------------------------------------------------------------------
def init_params(key):
    ks = jax.random.split(key, 9)
    s_in = 1.0 / np.sqrt(D)
    s_hid = 1.0 / np.sqrt(2 * H)
    xavier_bound = np.sqrt(6.0 / (D + 1))   # xavier_uniform_ on (1, 768)
    return {
        "wq": jax.random.normal(ks[0], (H, D), jnp.float32) * s_in,
        "bq": jax.random.normal(ks[1], (H,), jnp.float32) * s_in,
        "wk": jax.random.normal(ks[2], (H, D), jnp.float32) * s_in,
        "bk": jax.random.normal(ks[3], (H,), jnp.float32) * s_in,
        "wv": jax.random.normal(ks[4], (H, D), jnp.float32) * s_in,
        "bv": jax.random.normal(ks[5], (H,), jnp.float32) * s_in,
        "wo": jax.random.normal(ks[6], (D, 2 * H), jnp.float32) * s_hid,
        "bo": jax.random.normal(ks[7], (D,), jnp.float32) * s_hid,
        "w_context": jax.random.uniform(ks[8], (1, D), jnp.float32,
                                        -xavier_bound, xavier_bound),
        "w_candidate": jnp.ones((5, D), jnp.float32),
        "w_keyword": jnp.ones((1, D), jnp.float32),
    }


if __name__ == "__main__":
    N, B, C, K = 3, 2, 5, 4   # items, batch, candidate_num (fixed by w_candidate), keywords
    key = jax.random.PRNGKey(0)
    kq, kc, ka, kcand, kkw, kp = jax.random.split(key, 6)

    question_emb = jax.random.normal(kq, (N, B, D), jnp.float32)
    context_emb = jax.random.normal(kc, (N, B, D), jnp.float32)
    answer_emb = jax.random.normal(ka, (N, B, D), jnp.float32)
    candidate_emb = jax.random.normal(kcand, (N, B, C, D), jnp.float32)
    keyword_embs = jax.random.normal(kkw, (N, K, D), jnp.float32)
    params = init_params(kp)
    prep = prepare_params(params, batch_size=B)   # one-time precompute

    # batched path: many independent items per pallas_call, weights VMEM-resident
    out = reranker_forward_batched(question_emb, context_emb, answer_emb,
                                   candidate_emb, keyword_embs, prep)
    jax.block_until_ready(out["score"])
    jax.block_until_ready(out["answer_score"])

    # single-call path (module-equivalent forward)
    out1 = reranker_forward(question_emb[0], context_emb[0], answer_emb[0],
                            candidate_emb[0], keyword_embs[0], prep)
    jax.block_until_ready(out1["score"])

    assert out["score"].shape == (N, B, C)
    assert out["knowledge_score"].shape == (N, B, C)
    assert out["extra_score"].shape == (N, B, C)
    assert out["answer_score"].shape == (N, B)
    assert out1["score"].shape == (B, C)
    np.testing.assert_allclose(np.asarray(out1["score"]),
                               np.asarray(out["score"][0]), rtol=1e-5, atol=1e-5)

    # sanity check vs pure-JAX f32 reference (bf16 MXU operands -> ~1e-2 abs tolerance)
    TOL = 4e-2
    for n in range(N):
        r_score, r_cks, r_extra, r_ans = _forward_ref(
            question_emb[n], context_emb[n], answer_emb[n],
            candidate_emb[n], keyword_embs[n], params)
        np.testing.assert_allclose(np.asarray(out["score"][n]), np.asarray(r_score),
                                   rtol=TOL, atol=TOL)
        np.testing.assert_allclose(np.asarray(out["knowledge_score"][n]),
                                   np.asarray(r_cks), rtol=TOL, atol=TOL)
        np.testing.assert_allclose(np.asarray(out["extra_score"][n]),
                                   np.asarray(r_extra), rtol=TOL, atol=TOL)
        np.testing.assert_allclose(np.asarray(out["answer_score"][n]),
                                   np.asarray(r_ans), rtol=TOL, atol=TOL)
    print("KERNEL_OK")
</pallas_src>

<mosaic_0001>
module attributes {stable_mosaic.version = 11 : i64} {
  func.func @_reranker_kernel(%arg0: i32, %arg1: memref<1x4x768xf32, #tpu.memory_space<vmem>>, %arg2: memref<1x2x768xf32, #tpu.memory_space<vmem>>, %arg3: memref<1x10x768xf32, #tpu.memory_space<vmem>>, %arg4: memref<1x4x768xf32, #tpu.memory_space<vmem>>, %arg5: memref<768x384xbf16, #tpu.memory_space<vmem>>, %arg6: memref<1x384xf32, #tpu.memory_space<vmem>>, %arg7: memref<256x768xbf16, #tpu.memory_space<vmem>>, %arg8: memref<1x768xf32, #tpu.memory_space<vmem>>, %arg9: memref<10x768xf32, #tpu.memory_space<vmem>>, %arg10: memref<1x768xf32, #tpu.memory_space<vmem>>, %arg11: memref<1x768xf32, #tpu.memory_space<vmem>>, %arg12: memref<1x4x2x10xf32, #tpu.memory_space<vmem>>) attributes {dimension_semantics = [#tpu.dimension_semantics<parallel>], iteration_bounds = array<i64: 3>, scalar_prefetch = 0 : i64, scratch_operands = 0 : i64, tpu.core_type = #tpu.core_type<tc>, window_params = [{transform_indices = @transform_0, window_bounds = array<i64: 1, 4, 768>}, {transform_indices = @transform_1, window_bounds = array<i64: 1, 2, 768>}, {transform_indices = @transform_2, window_bounds = array<i64: 1, 10, 768>}, {transform_indices = @transform_3, window_bounds = array<i64: 1, 4, 768>}, {pipeline_mode = #tpu.pipeline_mode<synchronous>, transform_indices = @transform_4, window_bounds = array<i64: 768, 384>}, {pipeline_mode = #tpu.pipeline_mode<synchronous>, transform_indices = @transform_5, window_bounds = array<i64: 1, 384>}, {pipeline_mode = #tpu.pipeline_mode<synchronous>, transform_indices = @transform_6, window_bounds = array<i64: 256, 768>}, {pipeline_mode = #tpu.pipeline_mode<synchronous>, transform_indices = @transform_7, window_bounds = array<i64: 1, 768>}, {pipeline_mode = #tpu.pipeline_mode<synchronous>, transform_indices = @transform_8, window_bounds = array<i64: 10, 768>}, {pipeline_mode = #tpu.pipeline_mode<synchronous>, transform_indices = @transform_9, window_bounds = array<i64: 1, 768>}, {pipeline_mode = #tpu.pipeline_mode<synchronous>, transform_indices = @transform_10, window_bounds = array<i64: 1, 768>}, {transform_indices = @transform_11, window_bounds = array<i64: 1, 4, 2, 10>}]} {
    %c0 = arith.constant 0 : index
    %c0_0 = arith.constant 0 : index
    %c0_1 = arith.constant 0 : index
    %0 = vector.load %arg1[%c0, %c0_0, %c0_1] : memref<1x4x768xf32, #tpu.memory_space<vmem>>, vector<1x4x768xf32>
    %1 = vector.shape_cast %0 : vector<1x4x768xf32> to vector<4x768xf32>
    %c0_2 = arith.constant 0 : index
    %c0_3 = arith.constant 0 : index
    %2 = vector.load %arg8[%c0_2, %c0_3] : memref<1x768xf32, #tpu.memory_space<vmem>>, vector<1x768xf32>
    %3 = arith.truncf %1 : vector<4x768xf32> to vector<4x768xbf16>
    %c0_4 = arith.constant 0 : index
    %c0_5 = arith.constant 0 : index
    %4 = vector.load %arg5[%c0_4, %c0_5] : memref<768x384xbf16, #tpu.memory_space<vmem>>, vector<768x384xbf16>
    %cst = arith.constant dense<0.000000e+00> : vector<4x384xf32>
    %5 = tpu.matmul %3, %4, %cst {dimension_numbers = #tpu.dot_dimension_numbers<[1], [0], [0], [1], [0, 0, 1, 1], [], []>} : vector<4x768xbf16>, vector<768x384xbf16>, vector<4x384xf32> -> vector<4x384xf32>
    %c0_6 = arith.constant 0 : index
    %c0_7 = arith.constant 0 : index
    %6 = vector.load %arg6[%c0_6, %c0_7] : memref<1x384xf32, #tpu.memory_space<vmem>>, vector<1x384xf32>
    %7 = vector.broadcast %6 : vector<1x384xf32> to vector<4x384xf32>
    %8 = arith.addf %5, %7 : vector<4x384xf32>
    %9 = vector.extract_strided_slice %8 {offsets = [0, 0], sizes = [2, 128], strides = [1, 1]} : vector<4x384xf32> to vector<2x128xf32>
    %10 = vector.extract_strided_slice %8 {offsets = [2, 0], sizes = [2, 128], strides = [1, 1]} : vector<4x384xf32> to vector<2x128xf32>
    %11 = vector.extract_strided_slice %8 {offsets = [2, 128], sizes = [2, 128], strides = [1, 1]} : vector<4x384xf32> to vector<2x128xf32>
    %12 = vector.extract_strided_slice %8 {offsets = [2, 256], sizes = [2, 128], strides = [1, 1]} : vector<4x384xf32> to vector<2x128xf32>
    %13 = arith.truncf %9 : vector<2x128xf32> to vector<2x128xbf16>
    %14 = arith.truncf %11 : vector<2x128xf32> to vector<2x128xbf16>
    %cst_8 = arith.constant dense<0.000000e+00> : vector<2x2xf32>
    %15 = tpu.matmul %13, %14, %cst_8 {dimension_numbers = #tpu.dot_dimension_numbers<[1], [1], [0], [0], [0, 0, 1, 0], [], []>} : vector<2x128xbf16>, vector<2x128xbf16>, vector<2x2xf32> -> vector<2x2xf32>
    %cst_9 = arith.constant 0.0883883461 : f32
    %16 = vector.broadcast %cst_9 : f32 to vector<2x2xf32>
    %17 = arith.mulf %15, %16 : vector<2x2xf32>
    %cst_10 = arith.constant dense<0xFF800000> : vector<2xf32>
    %18 = vector.multi_reduction <maximumf>, %17, %cst_10 [1] : vector<2x2xf32> to vector<2xf32>
    %19 = vector.shape_cast %18 : vector<2xf32> to vector<2x1xf32>
    %20 = vector.broadcast %19 : vector<2x1xf32> to vector<2x2xf32>
    %21 = arith.subf %17, %20 : vector<2x2xf32>
    %22 = math.exp %21 : vector<2x2xf32>
    %cst_11 = arith.constant dense<0.000000e+00> : vector<2xf32>
    %23 = vector.multi_reduction <add>, %22, %cst_11 [1] : vector<2x2xf32> to vector<2xf32>
    %24 = vector.shape_cast %23 : vector<2xf32> to vector<2x1xf32>
    %25 = tpu.reciprocal %24 {approx = true} : vector<2x1xf32> -> vector<2x1xf32>
    %26 = vector.broadcast %25 : vector<2x1xf32> to vector<2x2xf32>
    %27 = arith.mulf %22, %26 : vector<2x2xf32>
    %28 = arith.truncf %27 : vector<2x2xf32> to vector<2x2xbf16>
    %29 = arith.truncf %12 : vector<2x128xf32> to vector<2x128xbf16>
    %cst_12 = arith.constant dense<0.000000e+00> : vector<2x128xf32>
    %30 = tpu.matmul %28, %29, %cst_12 {dimension_numbers = #tpu.dot_dimension_numbers<[1], [0], [0], [1], [0, 0, 1, 1], [], []>} : vector<2x2xbf16>, vector<2x128xbf16>, vector<2x128xf32> -> vector<2x128xf32>
    %31 = tpu.concatenate %9, %30 in 1 : vector<2x128xf32>, vector<2x128xf32> -> vector<2x256xf32>
    %32 = arith.truncf %31 : vector<2x256xf32> to vector<2x256xbf16>
    %c0_13 = arith.constant 0 : index
    %c0_14 = arith.constant 0 : index
    %33 = vector.load %arg7[%c0_13, %c0_14] : memref<256x768xbf16, #tpu.memory_space<vmem>>, vector<256x768xbf16>
    %cst_15 = arith.constant dense<0.000000e+00> : vector<2x768xf32>
    %34 = tpu.matmul %32, %33, %cst_15 {dimension_numbers = #tpu.dot_dimension_numbers<[1], [0], [0], [1], [0, 0, 1, 1], [], []>} : vector<2x256xbf16>, vector<256x768xbf16>, vector<2x768xf32> -> vector<2x768xf32>
    %35 = vector.broadcast %2 : vector<1x768xf32> to vector<2x768xf32>
    %36 = arith.addf %34, %35 : vector<2x768xf32>
    %37 = arith.truncf %36 : vector<2x768xf32> to vector<2x768xbf16>
    %c0_16 = arith.constant 0 : index
    %c128 = arith.constant 128 : index
    %38 = vector.load %arg5[%c0_16, %c128] : memref<768x384xbf16, #tpu.memory_space<vmem>>, vector<768x256xbf16>
    %cst_17 = arith.constant dense<0.000000e+00> : vector<2x256xf32>
    %39 = tpu.matmul %37, %38, %cst_17 {dimension_numbers = #tpu.dot_dimension_numbers<[1], [0], [0], [1], [0, 0, 1, 1], [], []>} : vector<2x768xbf16>, vector<768x256xbf16>, vector<2x256xf32> -> vector<2x256xf32>
    %c0_18 = arith.constant 0 : index
    %c128_19 = arith.constant 128 : index
    %40 = vector.load %arg6[%c0_18, %c128_19] : memref<1x384xf32, #tpu.memory_space<vmem>>, vector<1x256xf32>
    %41 = vector.broadcast %40 : vector<1x256xf32> to vector<2x256xf32>
    %42 = arith.addf %39, %41 : vector<2x256xf32>
    %43 = vector.extract_strided_slice %42 {offsets = [0, 0], sizes = [2, 128], strides = [1, 1]} : vector<2x256xf32> to vector<2x128xf32>
    %44 = vector.extract_strided_slice %42 {offsets = [0, 128], sizes = [2, 128], strides = [1, 1]} : vector<2x256xf32> to vector<2x128xf32>
    %45 = arith.truncf %10 : vector<2x128xf32> to vector<2x128xbf16>
    %46 = arith.truncf %43 : vector<2x128xf32> to vector<2x128xbf16>
    %cst_20 = arith.constant dense<0.000000e+00> : vector<2x2xf32>
    %47 = tpu.matmul %45, %46, %cst_20 {dimension_numbers = #tpu.dot_dimension_numbers<[1], [1], [0], [0], [0, 0, 1, 0], [], []>} : vector<2x128xbf16>, vector<2x128xbf16>, vector<2x2xf32> -> vector<2x2xf32>
    %cst_21 = arith.constant 0.0883883461 : f32
    %48 = vector.broadcast %cst_21 : f32 to vector<2x2xf32>
    %49 = arith.mulf %47, %48 : vector<2x2xf32>
    %cst_22 = arith.constant dense<0xFF800000> : vector<2xf32>
    %50 = vector.multi_reduction <maximumf>, %49, %cst_22 [1] : vector<2x2xf32> to vector<2xf32>
    %51 = vector.shape_cast %50 : vector<2xf32> to vector<2x1xf32>
    %52 = vector.broadcast %51 : vector<2x1xf32> to vector<2x2xf32>
    %53 = arith.subf %49, %52 : vector<2x2xf32>
    %54 = math.exp %53 : vector<2x2xf32>
    %cst_23 = arith.constant dense<0.000000e+00> : vector<2xf32>
    %55 = vector.multi_reduction <add>, %54, %cst_23 [1] : vector<2x2xf32> to vector<2xf32>
    %56 = vector.shape_cast %55 : vector<2xf32> to vector<2x1xf32>
    %57 = tpu.reciprocal %56 {approx = true} : vector<2x1xf32> -> vector<2x1xf32>
    %58 = vector.broadcast %57 : vector<2x1xf32> to vector<2x2xf32>
    %59 = arith.mulf %54, %58 : vector<2x2xf32>
    %60 = arith.truncf %59 : vector<2x2xf32> to vector<2x2xbf16>
    %61 = arith.truncf %44 : vector<2x128xf32> to vector<2x128xbf16>
    %cst_24 = arith.constant dense<0.000000e+00> : vector<2x128xf32>
    %62 = tpu.matmul %60, %61, %cst_24 {dimension_numbers = #tpu.dot_dimension_numbers<[1], [0], [0], [1], [0, 0, 1, 1], [], []>} : vector<2x2xbf16>, vector<2x128xbf16>, vector<2x128xf32> -> vector<2x128xf32>
    %63 = tpu.concatenate %10, %62 in 1 : vector<2x128xf32>, vector<2x128xf32> -> vector<2x256xf32>
    %64 = arith.truncf %63 : vector<2x256xf32> to vector<2x256xbf16>
    %c0_25 = arith.constant 0 : index
    %c0_26 = arith.constant 0 : index
    %65 = vector.load %arg7[%c0_25, %c0_26] : memref<256x768xbf16, #tpu.memory_space<vmem>>, vector<256x768xbf16>
    %cst_27 = arith.constant dense<0.000000e+00> : vector<2x768xf32>
    %66 = tpu.matmul %64, %65, %cst_27 {dimension_numbers = #tpu.dot_dimension_numbers<[1], [0], [0], [1], [0, 0, 1, 1], [], []>} : vector<2x256xbf16>, vector<256x768xbf16>, vector<2x768xf32> -> vector<2x768xf32>
    %67 = vector.broadcast %2 : vector<1x768xf32> to vector<2x768xf32>
    %68 = arith.addf %66, %67 : vector<2x768xf32>
    %c0_28 = arith.constant 0 : index
    %c0_29 = arith.constant 0 : index
    %c0_30 = arith.constant 0 : index
    %69 = vector.load %arg3[%c0_28, %c0_29, %c0_30] : memref<1x10x768xf32, #tpu.memory_space<vmem>>, vector<1x10x768xf32>
    %70 = vector.shape_cast %69 : vector<1x10x768xf32> to vector<10x768xf32>
    %71 = arith.mulf %70, %70 : vector<10x768xf32>
    %cst_31 = arith.constant dense<0.000000e+00> : vector<10xf32>
    %72 = vector.multi_reduction <add>, %71, %cst_31 [1] : vector<10x768xf32> to vector<10xf32>
    %73 = vector.shape_cast %72 : vector<10xf32> to vector<10x1xf32>
    %cst_32 = arith.constant 1.000000e-16 : f32
    %74 = vector.broadcast %cst_32 : f32 to vector<10x1xf32>
    %75 = arith.maximumf %73, %74 : vector<10x1xf32>
    %76 = math.rsqrt %75 : vector<10x1xf32>
    %77 = vector.broadcast %76 : vector<10x1xf32> to vector<10x768xf32>
    %78 = arith.mulf %70, %77 : vector<10x768xf32>
    %c0_33 = arith.constant 0 : index
    %c0_34 = arith.constant 0 : index
    %79 = vector.load %arg9[%c0_33, %c0_34] : memref<10x768xf32, #tpu.memory_space<vmem>>, vector<10x768xf32>
    %80 = arith.mulf %70, %79 : vector<10x768xf32>
    %81 = arith.mulf %80, %80 : vector<10x768xf32>
    %cst_35 = arith.constant dense<0.000000e+00> : vector<10xf32>
    %82 = vector.multi_reduction <add>, %81, %cst_35 [1] : vector<10x768xf32> to vector<10xf32>
    %83 = vector.shape_cast %82 : vector<10xf32> to vector<10x1xf32>
    %cst_36 = arith.constant 1.000000e-16 : f32
    %84 = vector.broadcast %cst_36 : f32 to vector<10x1xf32>
    %85 = arith.maximumf %83, %84 : vector<10x1xf32>
    %86 = math.rsqrt %85 : vector<10x1xf32>
    %87 = vector.broadcast %86 : vector<10x1xf32> to vector<10x768xf32>
    %88 = arith.mulf %80, %87 : vector<10x768xf32>
    %89 = arith.mulf %36, %36 : vector<2x768xf32>
    %cst_37 = arith.constant dense<0.000000e+00> : vector<2xf32>
    %90 = vector.multi_reduction <add>, %89, %cst_37 [1] : vector<2x768xf32> to vector<2xf32>
    %91 = vector.shape_cast %90 : vector<2xf32> to vector<2x1xf32>
    %cst_38 = arith.constant 1.000000e-16 : f32
    %92 = vector.broadcast %cst_38 : f32 to vector<2x1xf32>
    %93 = arith.maximumf %91, %92 : vector<2x1xf32>
    %94 = math.rsqrt %93 : vector<2x1xf32>
    %95 = vector.broadcast %94 : vector<2x1xf32> to vector<2x768xf32>
    %96 = arith.mulf %36, %95 : vector<2x768xf32>
    %c0_39 = arith.constant 0 : index
    %c0_40 = arith.constant 0 : index
    %97 = vector.load %arg10[%c0_39, %c0_40] : memref<1x768xf32, #tpu.memory_space<vmem>>, vector<1x768xf32>
    %98 = vector.broadcast %97 : vector<1x768xf32> to vector<2x768xf32>
    %99 = arith.mulf %68, %98 : vector<2x768xf32>
    %100 = arith.mulf %99, %99 : vector<2x768xf32>
    %cst_41 = arith.constant dense<0.000000e+00> : vector<2xf32>
    %101 = vector.multi_reduction <add>, %100, %cst_41 [1] : vector<2x768xf32> to vector<2xf32>
    %102 = vector.shape_cast %101 : vector<2xf32> to vector<2x1xf32>
    %cst_42 = arith.constant 1.000000e-16 : f32
    %103 = vector.broadcast %cst_42 : f32 to vector<2x1xf32>
    %104 = arith.maximumf %102, %103 : vector<2x1xf32>
    %105 = math.rsqrt %104 : vector<2x1xf32>
    %106 = vector.broadcast %105 : vector<2x1xf32> to vector<2x768xf32>
    %107 = arith.mulf %99, %106 : vector<2x768xf32>
    %cst_43 = arith.constant dense<0.000000e+00> : vector<2x10xf32>
    %108 = tpu.matmul %96, %78, %cst_43 {dimension_numbers = #tpu.dot_dimension_numbers<[1], [1], [0], [0], [0, 0, 1, 0], [], []>} : vector<2x768xf32>, vector<10x768xf32>, vector<2x10xf32> -> vector<2x10xf32>
    %cst_44 = arith.constant dense<0.000000e+00> : vector<2x10xf32>
    %109 = tpu.matmul %107, %88, %cst_44 {dimension_numbers = #tpu.dot_dimension_numbers<[1], [1], [0], [0], [0, 0, 1, 0], [], []>} : vector<2x768xf32>, vector<10x768xf32>, vector<2x10xf32> -> vector<2x10xf32>
    %c0_45 = arith.constant 0 : index
    %c0_46 = arith.constant 0 : index
    %c0_47 = arith.constant 0 : index
    %110 = vector.load %arg4[%c0_45, %c0_46, %c0_47] : memref<1x4x768xf32, #tpu.memory_space<vmem>>, vector<1x4x768xf32>
    %111 = vector.shape_cast %110 : vector<1x4x768xf32> to vector<4x768xf32>
    %c0_48 = arith.constant 0 : index
    %c0_49 = arith.constant 0 : index
    %112 = vector.load %arg11[%c0_48, %c0_49] : memref<1x768xf32, #tpu.memory_space<vmem>>, vector<1x768xf32>
    %113 = vector.broadcast %112 : vector<1x768xf32> to vector<4x768xf32>
    %114 = arith.mulf %111, %113 : vector<4x768xf32>
    %115 = arith.mulf %114, %114 : vector<4x768xf32>
    %cst_50 = arith.constant dense<0.000000e+00> : vector<4xf32>
    %116 = vector.multi_reduction <add>, %115, %cst_50 [1] : vector<4x768xf32> to vector<4xf32>
    %117 = vector.shape_cast %116 : vector<4xf32> to vector<4x1xf32>
    %cst_51 = arith.constant 1.000000e-16 : f32
    %118 = vector.broadcast %cst_51 : f32 to vector<4x1xf32>
    %119 = arith.maximumf %117, %118 : vector<4x1xf32>
    %120 = math.rsqrt %119 : vector<4x1xf32>
    %121 = vector.broadcast %120 : vector<4x1xf32> to vector<4x768xf32>
    %122 = arith.mulf %114, %121 : vector<4x768xf32>
    %cst_52 = arith.constant dense<0.000000e+00> : vector<768xf32>
    %123 = vector.multi_reduction <add>, %122, %cst_52 [0] : vector<4x768xf32> to vector<768xf32>
    %124 = vector.shape_cast %123 : vector<768xf32> to vector<1x768xf32>
    %cst_53 = arith.constant dense<0.000000e+00> : vector<1x10xf32>
    %125 = tpu.matmul %124, %88, %cst_53 {dimension_numbers = #tpu.dot_dimension_numbers<[1], [1], [0], [0], [0, 0, 1, 0], [], []>} : vector<1x768xf32>, vector<10x768xf32>, vector<1x10xf32> -> vector<1x10xf32>
    %cst_54 = arith.constant 2.500000e-01 : f32
    %126 = vector.broadcast %cst_54 : f32 to vector<1x10xf32>
    %127 = arith.mulf %125, %126 : vector<1x10xf32>
    %c0_55 = arith.constant 0 : index
    %c0_56 = arith.constant 0 : index
    %c0_57 = arith.constant 0 : index
    %128 = vector.load %arg2[%c0_55, %c0_56, %c0_57] : memref<1x2x768xf32, #tpu.memory_space<vmem>>, vector<1x2x768xf32>
    %129 = vector.shape_cast %128 : vector<1x2x768xf32> to vector<2x768xf32>
    %130 = vector.extract_strided_slice %1 {offsets = [0, 0], sizes = [2, 768], strides = [1, 1]} : vector<4x768xf32> to vector<2x768xf32>
    %131 = arith.mulf %129, %130 : vector<2x768xf32>
    %cst_58 = arith.constant dense<0.000000e+00> : vector<2xf32>
    %132 = vector.multi_reduction <add>, %131, %cst_58 [1] : vector<2x768xf32> to vector<2xf32>
    %133 = vector.shape_cast %132 : vector<2xf32> to vector<2x1xf32>
    %134 = arith.mulf %129, %129 : vector<2x768xf32>
    %cst_59 = arith.constant dense<0.000000e+00> : vector<2xf32>
    %135 = vector.multi_reduction <add>, %134, %cst_59 [1] : vector<2x768xf32> to vector<2xf32>
    %136 = vector.shape_cast %135 : vector<2xf32> to vector<2x1xf32>
    %cst_60 = arith.constant 1.000000e-16 : f32
    %137 = vector.broadcast %cst_60 : f32 to vector<2x1xf32>
    %138 = arith.maximumf %136, %137 : vector<2x1xf32>
    %139 = math.rsqrt %138 : vector<2x1xf32>
    %140 = arith.mulf %133, %139 : vector<2x1xf32>
    %141 = arith.mulf %130, %130 : vector<2x768xf32>
    %cst_61 = arith.constant dense<0.000000e+00> : vector<2xf32>
    %142 = vector.multi_reduction <add>, %141, %cst_61 [1] : vector<2x768xf32> to vector<2xf32>
    %143 = vector.shape_cast %142 : vector<2xf32> to vector<2x1xf32>
    %cst_62 = arith.constant 1.000000e-16 : f32
    %144 = vector.broadcast %cst_62 : f32 to vector<2x1xf32>
    %145 = arith.maximumf %143, %144 : vector<2x1xf32>
    %146 = math.rsqrt %145 : vector<2x1xf32>
    %147 = arith.mulf %140, %146 : vector<2x1xf32>
    %c0_63 = arith.constant 0 : index
    %c0_64 = arith.constant 0 : index
    %c0_65 = arith.constant 0 : index
    %c0_66 = arith.constant 0 : index
    %148 = vector.load %arg12[%c0_63, %c0_64, %c0_65, %c0_66] : memref<1x4x2x10xf32, #tpu.memory_space<vmem>>, vector<1x1x2x10xf32>
    %149 = vector.shape_cast %148 : vector<1x1x2x10xf32> to vector<2x10xf32>
    %150 = vector.shape_cast %108 : vector<2x10xf32> to vector<1x1x2x10xf32>
    tpu.vector_store %arg12[%c0_63, %c0_64, %c0_65, %c0_66], %150 {strides = array<i32>} : memref<1x4x2x10xf32, #tpu.memory_space<vmem>>, vector<1x1x2x10xf32>,
    %c0_67 = arith.constant 0 : index
    %c1 = arith.constant 1 : index
    %c0_68 = arith.constant 0 : index
    %c0_69 = arith.constant 0 : index
    %151 = vector.load %arg12[%c0_67, %c1, %c0_68, %c0_69] : memref<1x4x2x10xf32, #tpu.memory_space<vmem>>, vector<1x1x2x10xf32>
    %152 = vector.shape_cast %151 : vector<1x1x2x10xf32> to vector<2x10xf32>
    %153 = vector.shape_cast %109 : vector<2x10xf32> to vector<1x1x2x10xf32>
    tpu.vector_store %arg12[%c0_67, %c1, %c0_68, %c0_69], %153 {strides = array<i32>} : memref<1x4x2x10xf32, #tpu.memory_space<vmem>>, vector<1x1x2x10xf32>,
    %154 = vector.shape_cast %127 : vector<1x10xf32> to vector<1x10xf32>
    %155 = vector.broadcast %154 : vector<1x10xf32> to vector<2x10xf32>
    %c0_70 = arith.constant 0 : index
    %c2 = arith.constant 2 : index
    %c0_71 = arith.constant 0 : index
    %c0_72 = arith.constant 0 : index
    %156 = vector.load %arg12[%c0_70, %c2, %c0_71, %c0_72] : memref<1x4x2x10xf32, #tpu.memory_space<vmem>>, vector<1x1x2x10xf32>
    %157 = vector.shape_cast %156 : vector<1x1x2x10xf32> to vector<2x10xf32>
    %158 = vector.shape_cast %155 : vector<2x10xf32> to vector<1x1x2x10xf32>
    tpu.vector_store %arg12[%c0_70, %c2, %c0_71, %c0_72], %158 {strides = array<i32>} : memref<1x4x2x10xf32, #tpu.memory_space<vmem>>, vector<1x1x2x10xf32>,
    %159 = vector.shape_cast %147 : vector<2x1xf32> to vector<2x1xf32>
    %160 = vector.broadcast %159 : vector<2x1xf32> to vector<2x10xf32>
    %c0_73 = arith.constant 0 : index
    %c3 = arith.constant 3 : index
    %c0_74 = arith.constant 0 : index
    %c0_75 = arith.constant 0 : index
    %161 = vector.load %arg12[%c0_73, %c3, %c0_74, %c0_75] : memref<1x4x2x10xf32, #tpu.memory_space<vmem>>, vector<1x1x2x10xf32>
    %162 = vector.shape_cast %161 : vector<1x1x2x10xf32> to vector<2x10xf32>
    %163 = vector.shape_cast %160 : vector<2x10xf32> to vector<1x1x2x10xf32>
    tpu.vector_store %arg12[%c0_73, %c3, %c0_74, %c0_75], %163 {strides = array<i32>} : memref<1x4x2x10xf32, #tpu.memory_space<vmem>>, vector<1x1x2x10xf32>,
    return
  }
  func.func @transform_0(%arg0: i32) -> (i32, i32, i32) {
    %c0_i32 = arith.constant 0 : i32
    %c0_i32_0 = arith.constant 0 : i32
    %c0_i32_1 = arith.constant 0 : i32
    return %arg0, %c0_i32, %c0_i32_0 : i32, i32, i32
  }
  func.func @transform_1(%arg0: i32) -> (i32, i32, i32) {
    %c0_i32 = arith.constant 0 : i32
    %c0_i32_0 = arith.constant 0 : i32
    %c0_i32_1 = arith.constant 0 : i32
    return %arg0, %c0_i32, %c0_i32_0 : i32, i32, i32
  }
  func.func @transform_2(%arg0: i32) -> (i32, i32, i32) {
    %c0_i32 = arith.constant 0 : i32
    %c0_i32_0 = arith.constant 0 : i32
    %c0_i32_1 = arith.constant 0 : i32
    return %arg0, %c0_i32, %c0_i32_0 : i32, i32, i32
  }
  func.func @transform_3(%arg0: i32) -> (i32, i32, i32) {
    %c0_i32 = arith.constant 0 : i32
    %c0_i32_0 = arith.constant 0 : i32
    %c0_i32_1 = arith.constant 0 : i32
    return %arg0, %c0_i32, %c0_i32_0 : i32, i32, i32
  }
  func.func @transform_4(%arg0: i32) -> (i32, i32) {
    %c0_i32 = arith.constant 0 : i32
    %c0_i32_0 = arith.constant 0 : i32
    %c0_i32_1 = arith.constant 0 : i32
    return %c0_i32, %c0_i32_0 : i32, i32
  }
  func.func @transform_5(%arg0: i32) -> (i32, i32) {
    %c0_i32 = arith.constant 0 : i32
    %c0_i32_0 = arith.constant 0 : i32
    %c0_i32_1 = arith.constant 0 : i32
    return %c0_i32, %c0_i32_0 : i32, i32
  }
  func.func @transform_6(%arg0: i32) -> (i32, i32) {
    %c0_i32 = arith.constant 0 : i32
    %c0_i32_0 = arith.constant 0 : i32
    %c0_i32_1 = arith.constant 0 : i32
    return %c0_i32, %c0_i32_0 : i32, i32
  }
  func.func @transform_7(%arg0: i32) -> (i32, i32) {
    %c0_i32 = arith.constant 0 : i32
    %c0_i32_0 = arith.constant 0 : i32
    %c0_i32_1 = arith.constant 0 : i32
    return %c0_i32, %c0_i32_0 : i32, i32
  }
  func.func @transform_8(%arg0: i32) -> (i32, i32) {
    %c0_i32 = arith.constant 0 : i32
    %c0_i32_0 = arith.constant 0 : i32
    %c0_i32_1 = arith.constant 0 : i32
    return %c0_i32, %c0_i32_0 : i32, i32
  }
  func.func @transform_9(%arg0: i32) -> (i32, i32) {
    %c0_i32 = arith.constant 0 : i32
    %c0_i32_0 = arith.constant 0 : i32
    %c0_i32_1 = arith.constant 0 : i32
    return %c0_i32, %c0_i32_0 : i32, i32
  }
  func.func @transform_10(%arg0: i32) -> (i32, i32) {
    %c0_i32 = arith.constant 0 : i32
    %c0_i32_0 = arith.constant 0 : i32
    %c0_i32_1 = arith.constant 0 : i32
    return %c0_i32, %c0_i32_0 : i32, i32
  }
  func.func @transform_11(%arg0: i32) -> (i32, i32, i32, i32) {
    %c0_i32 = arith.constant 0 : i32
    %c0_i32_0 = arith.constant 0 : i32
    %c0_i32_1 = arith.constant 0 : i32
    %c0_i32_2 = arith.constant 0 : i32
    return %arg0, %c0_i32, %c0_i32_0, %c0_i32_1 : i32, i32, i32, i32
  }
}

</mosaic_0001>

<llo_original>
// kernel: reranker_forward_batched.1
$region0: #{reranker_forward_batched.1}
  #allocation0 [shape = 'u32[]', space=smem, size = 0x4, offset = 0x4, fixed_abs, tag = 'smem constant byte address 0x4 - core index']
  #allocation1 [shape = 'u32[72,128]{1,0:T(1,128)}', space=vmem, size = 0x9000, scoped, tag = 'internal scratch']
  %s0 = inlined_call_operand.vmem [shape: f32[3,4,768], index: 0, kind: input, shape index: {}]
  %s1 = inlined_call_operand.vmem [shape: f32[3,2,768], index: 1, kind: input, shape index: {}]
  %s2 = inlined_call_operand.vmem [shape: f32[3,10,768], index: 2, kind: input, shape index: {}]
  %s3 = inlined_call_operand.vmem [shape: f32[3,4,768], index: 3, kind: input, shape index: {}]
  %s4 = inlined_call_operand.hbm [shape: bf16[768,384], index: 4, kind: input, shape index: {}]
  %s5 = inlined_call_operand.vmem [shape: f32[1,384], index: 5, kind: input, shape index: {}]
  %s6 = inlined_call_operand.vmem [shape: bf16[256,768], index: 6, kind: input, shape index: {}]
  %s7 = inlined_call_operand.vmem [shape: f32[1,768], index: 7, kind: input, shape index: {}]
  %s8 = inlined_call_operand.vmem [shape: f32[10,768], index: 8, kind: input, shape index: {}]
  %s9 = inlined_call_operand.vmem [shape: f32[1,768], index: 9, kind: input, shape index: {}]
  %s10 = inlined_call_operand.vmem [shape: f32[1,768], index: 10, kind: input, shape index: {}]
  %s11 = inlined_call_operand.vmem [shape: f32[3,4,2,10], index: 11, kind: output, shape index: {}]
  %s12 = sld [smem:[#allocation0]]
  $region81: #{reranker_forward_batched.1} parent=0
    _
  %s14 = ssub.s32 1, %s12
  %s15 = scalar_select 0, %s14, %s12
  $region1: #{reranker_forward_batched.1} parent=0
    #allocation2 [shape = 'u8[589824]{0}', space=vmem, size = 0x90000, scoped, tag = 'input window, operand 4, single buffered']
    #allocation3 [shape = 's32[2]{0}', space=sflag, size = 0x8, scoped, tag = 'scoped memory for reranker_forward_batched.1']
    %16 = vsyncpa [#allocation3], 0
    loop: start=0, step=1, limit=5
    $region2: #{reranker_forward_batched.1} parent=1 // loop_pre_header
      _
    $region3: #{reranker_forward_batched.1} parent=1 // loop_header
      %s18 = sphi 0, %s22
      %p19 = scmp.ge.s32.totalorder %s18, 5
      %s28 = sphi 0, %s30
      %s31 = sphi 0, %s28
      %s32 = sphi 0, %s31
      %s48 = sphi 0, %s32
      %s54 = sphi 0, %s56
      %s57 = sphi 0, %s54
      %s58 = sphi 0, %s57
      %s74 = sphi 0, %s58
      %s80 = sphi 0, %s82
      %s83 = sphi 0, %s80
      %s84 = sphi 0, %s83
      %s100 = sphi 0, %s84
      %s106 = sphi 0, %s108
      %s109 = sphi 0, %s106
      %s110 = sphi 0, %s109
      %s126 = sphi 0, %s110
      %s130 = sphi 0, %s130
      %s132 = sphi 0, %s130
      %s133 = sphi 0, %s132
      %s147 = sphi 0, %s133
      %s151 = sphi 0, %s151
      %s153 = sphi 0, %s151
      %s154 = sphi 0, %s153
      %s168 = sphi 0, %s154
      %s172 = sphi 0, %s172
      %s174 = sphi 0, %s172
      %s175 = sphi 0, %s174
      %s189 = sphi 0, %s175
      %s193 = sphi 0, %s193
      %s195 = sphi 0, %s193
      %s196 = sphi 0, %s195
      %s210 = sphi 0, %s196
      %s214 = sphi 0, %s214
      %s216 = sphi 0, %s214
      %s217 = sphi 0, %s216
      %s231 = sphi 0, %s217
      %s235 = sphi 0, %s235
      %s237 = sphi 0, %s235
      %s238 = sphi 0, %s237
      %s252 = sphi 0, %s238
      %s256 = sphi 0, %s256
      %s258 = sphi 0, %s256
      %s259 = sphi 0, %s258
      %s273 = sphi 0, %s259
      %s279 = sphi 0, %s281
      %s282 = sphi 0, %s279
      %s283 = sphi 0, %s282
      %s299 = sphi 0, %s283
    $region4: #{reranker_forward_batched.1} parent=1 // loop_header_branch
      %21 = sbr.rel (%p19) target = $region8
    $region5: #{reranker_forward_batched.1} parent=1 // loop_body
      %s23 = ssub.s32 %s18, 1
      %s24 = ssub.s32 %s18, 2
      %s25 = sadd.s32 %s18, 1
      %s26 = ssub.s32 %s18, %s25
      %p27 = scmp.eq.s32.totalorder %s26, 0
      %s29 = sadd.s32 %s28, 1
      %s30 = scalar_select %p27, %s28, %s29
      %p33 = pneg %p27
      %p34 = scmp.eq.s32.totalorder %s18, 2
      %p35 = por %p33, %p34
      %p36 = scmp.ne.s32.totalorder %s28, %s31
      %p37 = scmp.eq.s32.totalorder %s18, 0
      %p38 = por %p36, %p37
      %p39 = scmp.ne.s32.totalorder %s28, %s31
      %p40 = scmp.eq.s32.totalorder %s23, 2
      %p41 = por %p39, %p40
      %p42 = scmp.ne.s32.totalorder %s31, %s32
      %p43 = scmp.eq.s32.totalorder %s23, 0
      %p44 = por %p42, %p43
      %p45 = scmp.ne.s32.totalorder %s31, %s32
      %p46 = scmp.eq.s32.totalorder %s24, 2
      %p47 = por %p45, %p46
      %p49 = scmp.ne.s32.totalorder %s32, %s48
      %p50 = scmp.eq.s32.totalorder %s24, 0
      %p51 = por %p49, %p50
      %s52 = ssub.s32 %s18, %s25
      %p53 = scmp.eq.s32.totalorder %s52, 0
      %s55 = sadd.s32 %s54, 1
      %s56 = scalar_select %p53, %s54, %s55
      %p59 = pneg %p53
      %p60 = scmp.eq.s32.totalorder %s18, 2
      %p61 = por %p59, %p60
      %p62 = scmp.ne.s32.totalorder %s54, %s57
      %p63 = scmp.eq.s32.totalorder %s18, 0
      %p64 = por %p62, %p63
      %p65 = scmp.ne.s32.totalorder %s54, %s57
      %p66 = scmp.eq.s32.totalorder %s23, 2
      %p67 = por %p65, %p66
      %p68 = scmp.ne.s32.totalorder %s57, %s58
      %p69 = scmp.eq.s32.totalorder %s23, 0
      %p70 = por %p68, %p69
      %p71 = scmp.ne.s32.totalorder %s57, %s58
      %p72 = scmp.eq.s32.totalorder %s24, 2
      %p73 = por %p71, %p72
      %p75 = scmp.ne.s32.totalorder %s58, %s74
      %p76 = scmp.eq.s32.totalorder %s24, 0
      %p77 = por %p75, %p76
      %s78 = ssub.s32 %s18, %s25
      %p79 = scmp.eq.s32.totalorder %s78, 0
      %s81 = sadd.s32 %s80, 1
      %s82 = scalar_select %p79, %s80, %s81
      %p85 = pneg %p79
      %p86 = scmp.eq.s32.totalorder %s18, 2
      %p87 = por %p85, %p86
      %p88 = scmp.ne.s32.totalorder %s80, %s83
      %p89 = scmp.eq.s32.totalorder %s18, 0
      %p90 = por %p88, %p89
      %p91 = scmp.ne.s32.totalorder %s80, %s83
      %p92 = scmp.eq.s32.totalorder %s23, 2
      %p93 = por %p91, %p92
      %p94 = scmp.ne.s32.totalorder %s83, %s84
      %p95 = scmp.eq.s32.totalorder %s23, 0
      %p96 = por %p94, %p95
      %p97 = scmp.ne.s32.totalorder %s83, %s84
      %p98 = scmp.eq.s32.totalorder %s24, 2
      %p99 = por %p97, %p98
      %p101 = scmp.ne.s32.totalorder %s84, %s100
      %p102 = scmp.eq.s32.totalorder %s24, 0
      %p103 = por %p101, %p102
      %s104 = ssub.s32 %s18, %s25
      %p105 = scmp.eq.s32.totalorder %s104, 0
      %s107 = sadd.s32 %s106, 1
      %s108 = scalar_select %p105, %s106, %s107
      %p111 = pneg %p105
      %p112 = scmp.eq.s32.totalorder %s18, 2
      %p113 = por %p111, %p112
      %p114 = scmp.ne.s32.totalorder %s106, %s109
      %p115 = scmp.eq.s32.totalorder %s18, 0
      %p116 = por %p114, %p115
      %p117 = scmp.ne.s32.totalorder %s106, %s109
      %p118 = scmp.eq.s32.totalorder %s23, 2
      %p119 = por %p117, %p118
      %p120 = scmp.ne.s32.totalorder %s109, %s110
      %p121 = scmp.eq.s32.totalorder %s23, 0
      %p122 = por %p120, %p121
      %p123 = scmp.ne.s32.totalorder %s109, %s110
      %p124 = scmp.eq.s32.totalorder %s24, 2
      %p125 = por %p123, %p124
      %p127 = scmp.ne.s32.totalorder %s110, %s126
      %p128 = scmp.eq.s32.totalorder %s24, 0
      %p129 = por %p127, %p128
      %s131 = sadd.s32 %s130, 1
      %p134 = scmp.eq.s32.totalorder %s18, 2
      %p135 = scmp.ne.s32.totalorder %s130, %s132
      %p136 = scmp.eq.s32.totalorder %s18, 0
      %p137 = por %p135, %p136
      %p138 = scmp.ne.s32.totalorder %s130, %s132
      %p139 = scmp.eq.s32.totalorder %s23, 2
      %p140 = por %p138, %p139
      %p141 = scmp.ne.s32.totalorder %s132, %s133
      %p142 = scmp.eq.s32.totalorder %s23, 0
      %p143 = por %p141, %p142
      %p144 = scmp.ne.s32.totalorder %s132, %s133
      %p145 = scmp.eq.s32.totalorder %s24, 2
      %p146 = por %p144, %p145
      %p148 = scmp.ne.s32.totalorder %s133, %s147
      %p149 = scmp.eq.s32.totalorder %s24, 0
      %p150 = por %p148, %p149
      %s152 = sadd.s32 %s151, 1
      %p155 = scmp.eq.s32.totalorder %s18, 2
      %p156 = scmp.ne.s32.totalorder %s151, %s153
      %p157 = scmp.eq.s32.totalorder %s18, 0
      %p158 = por %p156, %p157
      %p159 = scmp.ne.s32.totalorder %s151, %s153
      %p160 = scmp.eq.s32.totalorder %s23, 2
      %p161 = por %p159, %p160
      %p162 = scmp.ne.s32.totalorder %s153, %s154
      %p163 = scmp.eq.s32.totalorder %s23, 0
      %p164 = por %p162, %p163
      %p165 = scmp.ne.s32.totalorder %s153, %s154
      %p166 = scmp.eq.s32.totalorder %s24, 2
      %p167 = por %p165, %p166
      %p169 = scmp.ne.s32.totalorder %s154, %s168
      %p170 = scmp.eq.s32.totalorder %s24, 0
      %p171 = por %p169, %p170
      %s173 = sadd.s32 %s172, 1
      %p176 = scmp.eq.s32.totalorder %s18, 2
      %p177 = scmp.ne.s32.totalorder %s172, %s174
      %p178 = scmp.eq.s32.totalorder %s18, 0
      %p179 = por %p177, %p178
      %p180 = scmp.ne.s32.totalorder %s172, %s174
      %p181 = scmp.eq.s32.totalorder %s23, 2
      %p182 = por %p180, %p181
      %p183 = scmp.ne.s32.totalorder %s174, %s175
      %p184 = scmp.eq.s32.totalorder %s23, 0
      %p185 = por %p183, %p184
      %p186 = scmp.ne.s32.totalorder %s174, %s175
      %p187 = scmp.eq.s32.totalorder %s24, 2
      %p188 = por %p186, %p187
      %p190 = scmp.ne.s32.totalorder %s175, %s189
      %p191 = scmp.eq.s32.totalorder %s24, 0
      %p192 = por %p190, %p191
      %s194 = sadd.s32 %s193, 1
      %p197 = scmp.eq.s32.totalorder %s18, 2
      %p198 = scmp.ne.s32.totalorder %s193, %s195
      %p199 = scmp.eq.s32.totalorder %s18, 0
      %p200 = por %p198, %p199
      %p201 = scmp.ne.s32.totalorder %s193, %s195
      %p202 = scmp.eq.s32.totalorder %s23, 2
      %p203 = por %p201, %p202
      %p204 = scmp.ne.s32.totalorder %s195, %s196
      %p205 = scmp.eq.s32.totalorder %s23, 0
      %p206 = por %p204, %p205
      %p207 = scmp.ne.s32.totalorder %s195, %s196
      %p208 = scmp.eq.s32.totalorder %s24, 2
      %p209 = por %p207, %p208
      %p211 = scmp.ne.s32.totalorder %s196, %s210
      %p212 = scmp.eq.s32.totalorder %s24, 0
      %p213 = por %p211, %p212
      %s215 = sadd.s32 %s214, 1
      %p218 = scmp.eq.s32.totalorder %s18, 2
      %p219 = scmp.ne.s32.totalorder %s214, %s216
      %p220 = scmp.eq.s32.totalorder %s18, 0
      %p221 = por %p219, %p220
      %p222 = scmp.ne.s32.totalorder %s214, %s216
      %p223 = scmp.eq.s32.totalorder %s23, 2
      %p224 = por %p222, %p223
      %p225 = scmp.ne.s32.totalorder %s216, %s217
      %p226 = scmp.eq.s32.totalorder %s23, 0
      %p227 = por %p225, %p226
      %p228 = scmp.ne.s32.totalorder %s216, %s217
      %p229 = scmp.eq.s32.totalorder %s24, 2
      %p230 = por %p228, %p229
      %p232 = scmp.ne.s32.totalorder %s217, %s231
      %p233 = scmp.eq.s32.totalorder %s24, 0
      %p234 = por %p232, %p233
      %s236 = sadd.s32 %s235, 1
      %p239 = scmp.eq.s32.totalorder %s18, 2
      %p240 = scmp.ne.s32.totalorder %s235, %s237
      %p241 = scmp.eq.s32.totalorder %s18, 0
      %p242 = por %p240, %p241
      %p243 = scmp.ne.s32.totalorder %s235, %s237
      %p244 = scmp.eq.s32.totalorder %s23, 2
      %p245 = por %p243, %p244
      %p246 = scmp.ne.s32.totalorder %s237, %s238
      %p247 = scmp.eq.s32.totalorder %s23, 0
      %p248 = por %p246, %p247
      %p249 = scmp.ne.s32.totalorder %s237, %s238
      %p250 = scmp.eq.s32.totalorder %s24, 2
      %p251 = por %p249, %p250
      %p253 = scmp.ne.s32.totalorder %s238, %s252
      %p254 = scmp.eq.s32.totalorder %s24, 0
      %p255 = por %p253, %p254
      %s257 = sadd.s32 %s256, 1
      %p260 = scmp.eq.s32.totalorder %s18, 2
      %p261 = scmp.ne.s32.totalorder %s256, %s258
      %p262 = scmp.eq.s32.totalorder %s18, 0
      %p263 = por %p261, %p262
      %p264 = scmp.ne.s32.totalorder %s256, %s258
      %p265 = scmp.eq.s32.totalorder %s23, 2
      %p266 = por %p264, %p265
      %p267 = scmp.ne.s32.totalorder %s258, %s259
      %p268 = scmp.eq.s32.totalorder %s23, 0
      %p269 = por %p267, %p268
      %p270 = scmp.ne.s32.totalorder %s258, %s259
      %p271 = scmp.eq.s32.totalorder %s24, 2
      %p272 = por %p270, %p271
      %p274 = scmp.ne.s32.totalorder %s259, %s273
      %p275 = scmp.eq.s32.totalorder %s24, 0
      %p276 = por %p274, %p275
      %s277 = ssub.s32 %s18, %s25
      %p278 = scmp.eq.s32.totalorder %s277, 0
      %s280 = sadd.s32 %s279, 1
      %s281 = scalar_select %p278, %s279, %s280
      %p284 = pneg %p278
      %p285 = scmp.eq.s32.totalorder %s18, 2
      %p286 = por %p284, %p285
      %p287 = scmp.ne.s32.totalorder %s279, %s282
      %p288 = scmp.eq.s32.totalorder %s18, 0
      %p289 = por %p287, %p288
      %p290 = scmp.ne.s32.totalorder %s279, %s282
      %p291 = scmp.eq.s32.totalorder %s23, 2
      %p292 = por %p290, %p291
      %p293 = scmp.ne.s32.totalorder %s282, %s283
      %p294 = scmp.eq.s32.totalorder %s23, 0
      %p295 = por %p293, %p294
      %p296 = scmp.ne.s32.totalorder %s282, %s283
      %p297 = scmp.eq.s32.totalorder %s24, 2
      %p298 = por %p296, %p297
      %p300 = scmp.ne.s32.totalorder %s283, %s299
      %p301 = scmp.eq.s32.totalorder %s24, 0
      %p302 = por %p300, %p301
      %p303 = scmp.le.s32.totalorder 1, %s18
      %p304 = scmp.lt.s32.totalorder %s18, 4
      %p305 = pnand %p303, %p304
      %p306 = pneg %p305
      // Predicated region
      $region9: #{reranker_forward_batched.1} parent=5 // pred_check
        _
      $region10: #{reranker_forward_batched.1} parent=5 // pred_check_branch
        %308 = sbr.rel (%p305) target = $region12
      $region11: #{reranker_forward_batched.1} parent=5 // pred_region
        %s309 = ssub.s32 %s18, 1
        // Predicated region
        $region13: #{reranker_forward_batched.1} parent=11 // pred_check
          %p310 = pneg %p143
        $region14: #{reranker_forward_batched.1} parent=11 // pred_check_branch
          %312 = sbr.rel (%p310) target = $region16
        $region15: #{reranker_forward_batched.1} parent=11 // pred_region
          %314 = vsyncadd [#allocation3], 0
          %s315 = sshll.u32 %s4, 4
          %s316 = int_to_ptr.hbm [resolvable:$true] %s315
          %s317 = sshll.u32 [#allocation2], 4
          %s318 = int_to_ptr.vmem [resolvable:$true] %s317
          %323 = dma.hbm_to_vmem [thread:$0]  %s316, 18432, %s318, [#allocation3], 192, 192, 12
        $region16: #{reranker_forward_batched.1} parent=11 // pred_fallthru
          _
        // Predicated region
        $region17: #{reranker_forward_batched.1} parent=11 // pred_check
          %p324 = pneg %p164
        $region18: #{reranker_forward_batched.1} parent=11 // pred_check_branch
          %326 = sbr.rel (%p324) target = $region20
        $region19: #{reranker_forward_batched.1} parent=11 // pred_region
          _
        $region20: #{reranker_forward_batched.1} parent=11 // pred_fallthru
          _
        // Predicated region
        $region21: #{reranker_forward_batched.1} parent=11 // pred_check
          %p327 = pneg %p185
        $region22: #{reranker_forward_batched.1} parent=11 // pred_check_branch
          %329 = sbr.rel (%p327) target = $region24
        $region23: #{reranker_forward_batched.1} parent=11 // pred_region
          _
        $region24: #{reranker_forward_batched.1} parent=11 // pred_fallthru
          _
        // Predicated region
        $region25: #{reranker_forward_batched.1} parent=11 // pred_check
          %p330 = pneg %p206
        $region26: #{reranker_forward_batched.1} parent=11 // pred_check_branch
          %332 = sbr.rel (%p330) target = $region28
        $region27: #{reranker_forward_batched.1} parent=11 // pred_region
          _
        $region28: #{reranker_forward_batched.1} parent=11 // pred_fallthru
          _
        // Predicated region
        $region29: #{reranker_forward_batched.1} parent=11 // pred_check
          %p333 = pneg %p227
        $region30: #{reranker_forward_batched.1} parent=11 // pred_check_branch
          %335 = sbr.rel (%p333) target = $region32
        $region31: #{reranker_forward_batched.1} parent=11 // pred_region
          _
        $region32: #{reranker_forward_batched.1} parent=11 // pred_fallthru
          _
        // Predicated region
        $region33: #{reranker_forward_batched.1} parent=11 // pred_check
          %p336 = pneg %p248
        $region34: #{reranker_forward_batched.1} parent=11 // pred_check_branch
          %338 = sbr.rel (%p336) target = $region36
        $region35: #{reranker_forward_batched.1} parent=11 // pred_region
          _
        $region36: #{reranker_forward_batched.1} parent=11 // pred_fallthru
          _
        // Predicated region
        $region37: #{reranker_forward_batched.1} parent=11 // pred_check
          %p339 = pneg %p269
        $region38: #{reranker_forward_batched.1} parent=11 // pred_check_branch
          %341 = sbr.rel (%p339) target = $region40
        $region39: #{reranker_forward_batched.1} parent=11 // pred_region
          _
        $region40: #{reranker_forward_batched.1} parent=11 // pred_fallthru
          _
      $region12: #{reranker_forward_batched.1} parent=5 // pred_fallthru
        _
      %p342 = scmp.lt.s32.totalorder %s18, 3
      // Predicated region
      $region41: #{reranker_forward_batched.1} parent=5 // pred_check
        %p343 = pneg %p342
      $region42: #{reranker_forward_batched.1} parent=5 // pred_check_branch
        %345 = sbr.rel (%p343) target = $region44
      $region43: #{reranker_forward_batched.1} parent=5 // pred_region
        // Predicated region
        $region45: #{reranker_forward_batched.1} parent=43 // pred_check
          %p346 = pneg %p38
        $region46: #{reranker_forward_batched.1} parent=43 // pred_check_branch
          %348 = sbr.rel (%p346) target = $region48
        $region47: #{reranker_forward_batched.1} parent=43 // pred_region
          %p349 = scmp.lt.s32.totalorder %s18, 2
          %s350 = scalar_select %p349, %s18, 2
          %s351 = smul.addr %s350, 6
          %s352 = smul.addr %s351, 4
          %s353 = scalar_lea.vmem %s0, %s352
        $region48: #{reranker_forward_batched.1} parent=43 // pred_fallthru
          _
        // Predicated region
        $region49: #{reranker_forward_batched.1} parent=43 // pred_check
          %p354 = pneg %p64
        $region50: #{reranker_forward_batched.1} parent=43 // pred_check_branch
          %356 = sbr.rel (%p354) target = $region52
        $region51: #{reranker_forward_batched.1} parent=43 // pred_region
          %p357 = scmp.lt.s32.totalorder %s18, 2
          %s358 = scalar_select %p357, %s18, 2
          %s359 = smul.addr %s358, 6
          %s360 = smul.addr %s359, 2
          %s361 = scalar_lea.vmem %s1, %s360
        $region52: #{reranker_forward_batched.1} parent=43 // pred_fallthru
          _
        // Predicated region
        $region53: #{reranker_forward_batched.1} parent=43 // pred_check
          %p362 = pneg %p90
        $region54: #{reranker_forward_batched.1} parent=43 // pred_check_branch
          %364 = sbr.rel (%p362) target = $region56
        $region55: #{reranker_forward_batched.1} parent=43 // pred_region
          %p365 = scmp.lt.s32.totalorder %s18, 2
          %s366 = scalar_select %p365, %s18, 2
          %s367 = smul.addr %s366, 12
          %s368 = smul.addr %s367, 8
          %s369 = scalar_lea.vmem %s2, %s368
        $region56: #{reranker_forward_batched.1} parent=43 // pred_fallthru
          _
        // Predicated region
        $region57: #{reranker_forward_batched.1} parent=43 // pred_check
          %p370 = pneg %p116
        $region58: #{reranker_forward_batched.1} parent=43 // pred_check_branch
          %372 = sbr.rel (%p370) target = $region60
        $region59: #{reranker_forward_batched.1} parent=43 // pred_region
          %p373 = scmp.lt.s32.totalorder %s18, 2
          %s374 = scalar_select %p373, %s18, 2
          %s375 = smul.addr %s374, 6
          %s376 = smul.addr %s375, 4
          %s377 = scalar_lea.vmem %s3, %s376
        $region60: #{reranker_forward_batched.1} parent=43 // pred_fallthru
          _
      $region44: #{reranker_forward_batched.1} parent=5 // pred_fallthru
        _
      %p378 = scmp.le.s32.totalorder 1, %s18
      %p379 = scmp.lt.s32.totalorder %s18, 4
      %p380 = pnand %p378, %p379
      %p381 = pneg %p380
      // Predicated region
      $region61: #{reranker_forward_batched.1} parent=5 // pred_check
        _
      $region62: #{reranker_forward_batched.1} parent=5 // pred_check_branch
        %383 = sbr.rel (%p380) target = $region64
      $region63: #{reranker_forward_batched.1} parent=5 // pred_region
        %s384 = ssub.s32 %s18, 1
        // Predicated region
        $region65: #{reranker_forward_batched.1} parent=63 // pred_check
          %p385 = pneg %p143
        $region66: #{reranker_forward_batched.1} parent=63 // pred_check_branch
          %387 = sbr.rel (%p385) target = $region68
        $region67: #{reranker_forward_batched.1} parent=63 // pred_region
          %389 = dma.done [#allocation3], 18432
        $region68: #{reranker_forward_batched.1} parent=63 // pred_fallthru
          _
        %p390 = scmp.lt.s32.totalorder %s23, 2
        %s391 = scalar_select %p390, %s23, 2
        %s392 = smul.addr %s391, 6
        %s393 = smul.addr %s392, 4
        %s394 = scalar_lea.vmem %s0, %s393
        %p395 = pneg %p44
        %p396 = pneg %p41
        %p397 = scmp.lt.s32.totalorder %s23, 2
        %s398 = scalar_select %p397, %s23, 2
        %s399 = smul.addr %s398, 6
        %s400 = smul.addr %s399, 2
        %s401 = scalar_lea.vmem %s1, %s400
        %p402 = pneg %p70
        %p403 = pneg %p67
        %p404 = scmp.lt.s32.totalorder %s23, 2
        %s405 = scalar_select %p404, %s23, 2
        %s406 = smul.addr %s405, 12
        %s407 = smul.addr %s406, 8
        %s408 = scalar_lea.vmem %s2, %s407
        %p409 = pneg %p96
        %p410 = pneg %p93
        %p411 = scmp.lt.s32.totalorder %s23, 2
        %s412 = scalar_select %p411, %s23, 2
        %s413 = smul.addr %s412, 6
        %s414 = smul.addr %s413, 4
        %s415 = scalar_lea.vmem %s3, %s414
        %p416 = pneg %p122
        %p417 = pneg %p119
        %p418 = pneg %p143
        %p419 = pneg %p140
        %p420 = pneg %p164
        %p421 = pneg %p161
        %p422 = pneg %p185
        %p423 = pneg %p182
        %p424 = pneg %p206
        %p425 = pneg %p203
        %p426 = pneg %p227
        %p427 = pneg %p224
        %p428 = pneg %p248
        %p429 = pneg %p245
        %p430 = pneg %p269
        %p431 = pneg %p266
        %p432 = pneg %p295
        %p433 = pneg %p292
        %p434 = scmp.lt.s32.totalorder %s23, 2
        %s435 = scalar_select %p434, %s23, 2
        %s436 = smul.addr %s435, 4
        %s437 = smul.addr %s436, 2
        %s438 = scalar_lea.vmem %s11, %s437
        %p439 = scmp.lt.s32.totalorder %s23, 2
        %s440 = scalar_select %p439, %s23, 2
        %s441 = smul.addr %s440, 6
        %s442 = smul.addr %s441, 4
        %s443 = scalar_lea.vmem %s0, %s442
        %p444 = scmp.lt.s32.totalorder %s23, 2
        %s445 = scalar_select %p444, %s23, 2
        %s446 = smul.addr %s445, 6
        %s447 = smul.addr %s446, 2
        %s448 = scalar_lea.vmem %s1, %s447
        %p449 = scmp.lt.s32.totalorder %s23, 2
        %s450 = scalar_select %p449, %s23, 2
        %s451 = smul.addr %s450, 12
        %s452 = smul.addr %s451, 8
        %s453 = scalar_lea.vmem %s2, %s452
        %p454 = scmp.lt.s32.totalorder %s23, 2
        %s455 = scalar_select %p454, %s23, 2
        %s456 = smul.addr %s455, 6
        %s457 = smul.addr %s456, 4
        %s458 = scalar_lea.vmem %s3, %s457
        %p459 = scmp.lt.s32.totalorder %s23, 2
        %s460 = scalar_select %p459, %s23, 2
        %s461 = smul.addr %s460, 4
        %s462 = smul.addr %s461, 2
        %s463 = scalar_lea.vmem %s11, %s462
        %v465 = vld [vmem:[%s443] sm:$0xff]
        %v466 = vld [vmem:[%s443 + $0x8] sm:$0xff]
        %v467 = vld [vmem:[%s443 + $0x10] sm:$0xff]
        %v468 = vld [vmem:[%s7] sm:$0x3f]
        %472 = vst [vmem:[#allocation1] ss:$2 sm:$0xff] %v465
        %s473 = scalar_lea.vmem [#allocation1], 16
        %474 = vst [vmem:[%s473] ss:$2 sm:$0xff] %v466
        %s475 = scalar_lea.vmem [#allocation1], 32
        %476 = vst [vmem:[%s475] ss:$2 sm:$0xff] %v467
        %v477 = vld.sshfl [vmem:[#allocation1] sm:$0xff pattern:$0x75316420]
        %v478 = vld.sshfl [vmem:[#allocation1 + $0x8] sm:$0xff pattern:$0x75316420]
        %v479 = vld.sshfl [vmem:[#allocation1 + $0x10] sm:$0xff pattern:$0x75316420]
        %v480 = vld.sshfl [vmem:[#allocation1 + $0x18] sm:$0xff pattern:$0x75316420]
        %v481 = vld.sshfl [vmem:[#allocation1 + $0x20] sm:$0xff pattern:$0x75316420]
        %v482 = vld.sshfl [vmem:[#allocation1 + $0x28] sm:$0xff pattern:$0x75316420]
        %v489 = vpack.c.bf16 %v477, %v477
        %v490 = vpack.c.bf16 %v478, %v478
        %v491 = vpack.c.bf16 %v479, %v479
        %v492 = vpack.c.bf16 %v480, %v480
        %v493 = vpack.c.bf16 %v481, %v481
        %v494 = vpack.c.bf16 %v482, %v482
        %v495 = vld [vmem:[#allocation2] sm:$0xff]
        %v496 = vld [vmem:[#allocation2 + $0x8] sm:$0xf]
        %v497 = vld [vmem:[#allocation2 + $0xc] sm:$0xff]
        %v498 = vld [vmem:[#allocation2 + $0x14] sm:$0xf]
        %v499 = vld [vmem:[#allocation2 + $0x18] sm:$0xff]
        %v500 = vld [vmem:[#allocation2 + $0x20] sm:$0xf]
        %v501 = vld [vmem:[#allocation2 + $0x24] sm:$0xff]
        %v502 = vld [vmem:[#allocation2 + $0x2c] sm:$0xf]
        %v503 = vld [vmem:[#allocation2 + $0x30] sm:$0xff]
        %v504 = vld [vmem:[#allocation2 + $0x38] sm:$0xf]
        %v505 = vld [vmem:[#allocation2 + $0x3c] sm:$0xff]
        %v506 = vld [vmem:[#allocation2 + $0x44] sm:$0xf]
        %v507 = vld [vmem:[#allocation2 + $0x48] sm:$0xff]
        %v508 = vld [vmem:[#allocation2 + $0x50] sm:$0xf]
        %v509 = vld [vmem:[#allocation2 + $0x54] sm:$0xff]
        %v510 = vld [vmem:[#allocation2 + $0x5c] sm:$0xf]
        %v511 = vld [vmem:[#allocation2 + $0x60] sm:$0xff]
        %v512 = vld [vmem:[#allocation2 + $0x68] sm:$0xf]
        %v513 = vld [vmem:[#allocation2 + $0x6c] sm:$0xff]
        %v514 = vld [vmem:[#allocation2 + $0x74] sm:$0xf]
        %v515 = vld [vmem:[#allocation2 + $0x78] sm:$0xff]
        %v516 = vld [vmem:[#allocation2 + $0x80] sm:$0xf]
        %v517 = vld [vmem:[#allocation2 + $0x84] sm:$0xff]
        %v518 = vld [vmem:[#allocation2 + $0x8c] sm:$0xf]
        %v519 = vld [vmem:[#allocation2 + $0x90] sm:$0xff]
        %v520 = vld [vmem:[#allocation2 + $0x98] sm:$0xf]
        %v521 = vld [vmem:[#allocation2 + $0x9c] sm:$0xff]
        %v522 = vld [vmem:[#allocation2 + $0xa4] sm:$0xf]
        %v523 = vld [vmem:[#allocation2 + $0xa8] sm:$0xff]
        %v524 = vld [vmem:[#allocation2 + $0xb0] sm:$0xf]
        %v525 = vld [vmem:[#allocation2 + $0xb4] sm:$0xff]
        %v526 = vld [vmem:[#allocation2 + $0xbc] sm:$0xf]
        %v527 = vld [vmem:[#allocation2 + $0xc0] sm:$0xff]
        %v528 = vld [vmem:[#allocation2 + $0xc8] sm:$0xf]
        %v529 = vld [vmem:[#allocation2 + $0xcc] sm:$0xff]
        %v530 = vld [vmem:[#allocation2 + $0xd4] sm:$0xf]
        %v531 = vld [vmem:[#allocation2 + $0xd8] sm:$0xff]
        %v532 = vld [vmem:[#allocation2 + $0xe0] sm:$0xf]
        %v533 = vld [vmem:[#allocation2 + $0xe4] sm:$0xff]
        %v534 = vld [vmem:[#allocation2 + $0xec] sm:$0xf]
        %v535 = vld [vmem:[#allocation2 + $0xf0] sm:$0xff]
        %v536 = vld [vmem:[#allocation2 + $0xf8] sm:$0xf]
        %v537 = vld [vmem:[#allocation2 + $0xfc] sm:$0xff]
        %v538 = vld [vmem:[#allocation2 + $0x104] sm:$0xf]
        %v539 = vld [vmem:[#allocation2 + $0x108] sm:$0xff]
        %v540 = vld [vmem:[#allocation2 + $0x110] sm:$0xf]
        %v541 = vld [vmem:[#allocation2 + $0x114] sm:$0xff]
        %v542 = vld [vmem:[#allocation2 + $0x11c] sm:$0xf]
        %v543 = vld [vmem:[#allocation2 + $0x120] sm:$0xff]
        %v544 = vld [vmem:[#allocation2 + $0x128] sm:$0xf]
        %v545 = vld [vmem:[#allocation2 + $0x12c] sm:$0xff]
        %v546 = vld [vmem:[#allocation2 + $0x134] sm:$0xf]
        %v547 = vld [vmem:[#allocation2 + $0x138] sm:$0xff]
        %v548 = vld [vmem:[#allocation2 + $0x140] sm:$0xf]
        %v549 = vld [vmem:[#allocation2 + $0x144] sm:$0xff]
        %v550 = vld [vmem:[#allocation2 + $0x14c] sm:$0xf]
        %v551 = vld [vmem:[#allocation2 + $0x150] sm:$0xff]
        %v552 = vld [vmem:[#allocation2 + $0x158] sm:$0xf]
        %v553 = vld [vmem:[#allocation2 + $0x15c] sm:$0xff]
        %v554 = vld [vmem:[#allocation2 + $0x164] sm:$0xf]
        %v555 = vld [vmem:[#allocation2 + $0x168] sm:$0xff]
        %v556 = vld [vmem:[#allocation2 + $0x170] sm:$0xf]
        %v557 = vld [vmem:[#allocation2 + $0x174] sm:$0xff]
        %v558 = vld [vmem:[#allocation2 + $0x17c] sm:$0xf]
        %v559 = vld [vmem:[#allocation2 + $0x180] sm:$0xff]
        %v560 = vld [vmem:[#allocation2 + $0x188] sm:$0xf]
        %v561 = vld [vmem:[#allocation2 + $0x18c] sm:$0xff]
        %v562 = vld [vmem:[#allocation2 + $0x194] sm:$0xf]
        %v563 = vld [vmem:[#allocation2 + $0x198] sm:$0xff]
        %v564 = vld [vmem:[#allocation2 + $0x1a0] sm:$0xf]
        %v565 = vld [vmem:[#allocation2 + $0x1a4] sm:$0xff]
        %v566 = vld [vmem:[#allocation2 + $0x1ac] sm:$0xf]
        %v567 = vld [vmem:[#allocation2 + $0x1b0] sm:$0xff]
        %v568 = vld [vmem:[#allocation2 + $0x1b8] sm:$0xf]
        %v569 = vld [vmem:[#allocation2 + $0x1bc] sm:$0xff]
        %v570 = vld [vmem:[#allocation2 + $0x1c4] sm:$0xf]
        %v571 = vld [vmem:[#allocation2 + $0x1c8] sm:$0xff]
        %v572 = vld [vmem:[#allocation2 + $0x1d0] sm:$0xf]
        %v573 = vld [vmem:[#allocation2 + $0x1d4] sm:$0xff]
        %v574 = vld [vmem:[#allocation2 + $0x1dc] sm:$0xf]
        %v575 = vld [vmem:[#allocation2 + $0x1e0] sm:$0xff]
        %v576 = vld [vmem:[#allocation2 + $0x1e8] sm:$0xf]
        %v577 = vld [vmem:[#allocation2 + $0x1ec] sm:$0xff]
        %v578 = vld [vmem:[#allocation2 + $0x1f4] sm:$0xf]
        %v579 = vld [vmem:[#allocation2 + $0x1f8] sm:$0xff]
        %v580 = vld [vmem:[#allocation2 + $0x200] sm:$0xf]
        %v581 = vld [vmem:[#allocation2 + $0x204] sm:$0xff]
        %v582 = vld [vmem:[#allocation2 + $0x20c] sm:$0xf]
        %v583 = vld [vmem:[#allocation2 + $0x210] sm:$0xff]
        %v584 = vld [vmem:[#allocation2 + $0x218] sm:$0xf]
        %v585 = vld [vmem:[#allocation2 + $0x21c] sm:$0xff]
        %v586 = vld [vmem:[#allocation2 + $0x224] sm:$0xf]
        %v587 = vld [vmem:[#allocation2 + $0x228] sm:$0xff]
        %v588 = vld [vmem:[#allocation2 + $0x230] sm:$0xf]
        %v589 = vld [vmem:[#allocation2 + $0x234] sm:$0xff]
        %v590 = vld [vmem:[#allocation2 + $0x23c] sm:$0xf]
        %v591 = vld [vmem:[#allocation2 + $0x240] sm:$0xff]
        %v592 = vld [vmem:[#allocation2 + $0x248] sm:$0xf]
        %v593 = vld [vmem:[#allocation2 + $0x24c] sm:$0xff]
        %v594 = vld [vmem:[#allocation2 + $0x254] sm:$0xf]
        %v595 = vld [vmem:[#allocation2 + $0x258] sm:$0xff]
        %v596 = vld [vmem:[#allocation2 + $0x260] sm:$0xf]
        %v597 = vld [vmem:[#allocation2 + $0x264] sm:$0xff]
        %v598 = vld [vmem:[#allocation2 + $0x26c] sm:$0xf]
        %v599 = vld [vmem:[#allocation2 + $0x270] sm:$0xff]
        %v600 = vld [vmem:[#allocation2 + $0x278] sm:$0xf]
        %v601 = vld [vmem:[#allocation2 + $0x27c] sm:$0xff]
        %v602 = vld [vmem:[#allocation2 + $0x284] sm:$0xf]
        %v603 = vld [vmem:[#allocation2 + $0x288] sm:$0xff]
        %v604 = vld [vmem:[#allocation2 + $0x290] sm:$0xf]
        %v605 = vld [vmem:[#allocation2 + $0x294] sm:$0xff]
        %v606 = vld [vmem:[#allocation2 + $0x29c] sm:$0xf]
        %v607 = vld [vmem:[#allocation2 + $0x2a0] sm:$0xff]
        %v608 = vld [vmem:[#allocation2 + $0x2a8] sm:$0xf]
        %v609 = vld [vmem:[#allocation2 + $0x2ac] sm:$0xff]
        %v610 = vld [vmem:[#allocation2 + $0x2b4] sm:$0xf]
        %v611 = vld [vmem:[#allocation2 + $0x2b8] sm:$0xff]
        %v612 = vld [vmem:[#allocation2 + $0x2c0] sm:$0xf]
        %v613 = vld [vmem:[#allocation2 + $0x2c4] sm:$0xff]
        %v614 = vld [vmem:[#allocation2 + $0x2cc] sm:$0xf]
        %v615 = vld [vmem:[#allocation2 + $0x2d0] sm:$0xff]
        %v616 = vld [vmem:[#allocation2 + $0x2d8] sm:$0xf]
        %v617 = vld [vmem:[#allocation2 + $0x2dc] sm:$0xff]
        %v618 = vld [vmem:[#allocation2 + $0x2e4] sm:$0xf]
        %v619 = vld [vmem:[#allocation2 + $0x2e8] sm:$0xff]
        %v620 = vld [vmem:[#allocation2 + $0x2f0] sm:$0xf]
        %v621 = vld [vmem:[#allocation2 + $0x2f4] sm:$0xff]
        %v622 = vld [vmem:[#allocation2 + $0x2fc] sm:$0xf]
        %v623 = vld [vmem:[#allocation2 + $0x300] sm:$0xff]
        %v624 = vld [vmem:[#allocation2 + $0x308] sm:$0xf]
        %v625 = vld [vmem:[#allocation2 + $0x30c] sm:$0xff]
        %v626 = vld [vmem:[#allocation2 + $0x314] sm:$0xf]
        %v627 = vld [vmem:[#allocation2 + $0x318] sm:$0xff]
        %v628 = vld [vmem:[#allocation2 + $0x320] sm:$0xf]
        %v629 = vld [vmem:[#allocation2 + $0x324] sm:$0xff]
        %v630 = vld [vmem:[#allocation2 + $0x32c] sm:$0xf]
        %v631 = vld [vmem:[#allocation2 + $0x330] sm:$0xff]
        %v632 = vld [vmem:[#allocation2 + $0x338] sm:$0xf]
        %v633 = vld [vmem:[#allocation2 + $0x33c] sm:$0xff]
        %v634 = vld [vmem:[#allocation2 + $0x344] sm:$0xf]
        %v635 = vld [vmem:[#allocation2 + $0x348] sm:$0xff]
        %v636 = vld [vmem:[#allocation2 + $0x350] sm:$0xf]
        %v637 = vld [vmem:[#allocation2 + $0x354] sm:$0xff]
        %v638 = vld [vmem:[#allocation2 + $0x35c] sm:$0xf]
        %v639 = vld [vmem:[#allocation2 + $0x360] sm:$0xff]
        %v640 = vld [vmem:[#allocation2 + $0x368] sm:$0xf]
        %v641 = vld [vmem:[#allocation2 + $0x36c] sm:$0xff]
        %v642 = vld [vmem:[#allocation2 + $0x374] sm:$0xf]
        %v643 = vld [vmem:[#allocation2 + $0x378] sm:$0xff]
        %v644 = vld [vmem:[#allocation2 + $0x380] sm:$0xf]
        %v645 = vld [vmem:[#allocation2 + $0x384] sm:$0xff]
        %v646 = vld [vmem:[#allocation2 + $0x38c] sm:$0xf]
        %v647 = vld [vmem:[#allocation2 + $0x390] sm:$0xff]
        %v648 = vld [vmem:[#allocation2 + $0x398] sm:$0xf]
        %v649 = vld [vmem:[#allocation2 + $0x39c] sm:$0xff]
        %v650 = vld [vmem:[#allocation2 + $0x3a4] sm:$0xf]
        %v651 = vld [vmem:[#allocation2 + $0x3a8] sm:$0xff]
        %v652 = vld [vmem:[#allocation2 + $0x3b0] sm:$0xf]
        %v653 = vld [vmem:[#allocation2 + $0x3b4] sm:$0xff]
        %v654 = vld [vmem:[#allocation2 + $0x3bc] sm:$0xf]
        %v655 = vld [vmem:[#allocation2 + $0x3c0] sm:$0xff]
        %v656 = vld [vmem:[#allocation2 + $0x3c8] sm:$0xf]
        %v657 = vld [vmem:[#allocation2 + $0x3cc] sm:$0xff]
        %v658 = vld [vmem:[#allocation2 + $0x3d4] sm:$0xf]
        %v659 = vld [vmem:[#allocation2 + $0x3d8] sm:$0xff]
        %v660 = vld [vmem:[#allocation2 + $0x3e0] sm:$0xf]
        %v661 = vld [vmem:[#allocation2 + $0x3e4] sm:$0xff]
        %v662 = vld [vmem:[#allocation2 + $0x3ec] sm:$0xf]
        %v663 = vld [vmem:[#allocation2 + $0x3f0] sm:$0xff]
        %v664 = vld [vmem:[#allocation2 + $0x3f8] sm:$0xf]
        %v665 = vld [vmem:[#allocation2 + $0x3fc] sm:$0xff]
        %v666 = vld [vmem:[#allocation2 + $0x404] sm:$0xf]
        %v667 = vld [vmem:[#allocation2 + $0x408] sm:$0xff]
        %v668 = vld [vmem:[#allocation2 + $0x410] sm:$0xf]
        %v669 = vld [vmem:[#allocation2 + $0x414] sm:$0xff]
        %v670 = vld [vmem:[#allocation2 + $0x41c] sm:$0xf]
        %v671 = vld [vmem:[#allocation2 + $0x420] sm:$0xff]
        %v672 = vld [vmem:[#allocation2 + $0x428] sm:$0xf]
        %v673 = vld [vmem:[#allocation2 + $0x42c] sm:$0xff]
        %v674 = vld [vmem:[#allocation2 + $0x434] sm:$0xf]
        %v675 = vld [vmem:[#allocation2 + $0x438] sm:$0xff]
        %v676 = vld [vmem:[#allocation2 + $0x440] sm:$0xf]
        %v677 = vld [vmem:[#allocation2 + $0x444] sm:$0xff]
        %v678 = vld [vmem:[#allocation2 + $0x44c] sm:$0xf]
        %v679 = vld [vmem:[#allocation2 + $0x450] sm:$0xff]
        %v680 = vld [vmem:[#allocation2 + $0x458] sm:$0xf]
        %v681 = vld [vmem:[#allocation2 + $0x45c] sm:$0xff]
        %v682 = vld [vmem:[#allocation2 + $0x464] sm:$0xf]
        %v683 = vld [vmem:[#allocation2 + $0x468] sm:$0xff]
        %v684 = vld [vmem:[#allocation2 + $0x470] sm:$0xf]
        %v685 = vld [vmem:[#allocation2 + $0x474] sm:$0xff]
        %v686 = vld [vmem:[#allocation2 + $0x47c] sm:$0xf]
        %v687 = vld [vmem:[%s5] sm:$0x7]
        %v689 = vperm.slane %v687, 0
        %v690 = vperm.slane %v687, 1
        %v691 = vperm.slane %v687, 2
        %v887 = vunpack.c.l.b16 %v495
        %v888 = vunpack.c.h.b16 %v495
        %v889 = vunpack.c.l.b16 %v496
        %v890 = vunpack.c.l.b16 %v497
        %v891 = vunpack.c.h.b16 %v497
        %v892 = vunpack.c.l.b16 %v498
        %v893 = vunpack.c.l.b16 %v499
        %v894 = vunpack.c.h.b16 %v499
        %v895 = vunpack.c.l.b16 %v500
        %v896 = vunpack.c.l.b16 %v501
        %v897 = vunpack.c.h.b16 %v501
        %v898 = vunpack.c.l.b16 %v502
        %v899 = vunpack.c.l.b16 %v503
        %v900 = vunpack.c.h.b16 %v503
        %v901 = vunpack.c.l.b16 %v504
        %v902 = vunpack.c.l.b16 %v505
        %v903 = vunpack.c.h.b16 %v505
        %v904 = vunpack.c.l.b16 %v506
        %v905 = vunpack.c.l.b16 %v507
        %v906 = vunpack.c.h.b16 %v507
        %v907 = vunpack.c.l.b16 %v508
        %v908 = vunpack.c.l.b16 %v509
        %v909 = vunpack.c.h.b16 %v509
        %v910 = vunpack.c.l.b16 %v510
        %v911 = vunpack.c.l.b16 %v511
        %v912 = vunpack.c.h.b16 %v511
        %v913 = vunpack.c.l.b16 %v512
        %v914 = vunpack.c.l.b16 %v513
        %v915 = vunpack.c.h.b16 %v513
        %v916 = vunpack.c.l.b16 %v514
        %v917 = vunpack.c.l.b16 %v515
        %v918 = vunpack.c.h.b16 %v515
        %v919 = vunpack.c.l.b16 %v516
        %v920 = vunpack.c.l.b16 %v517
        %v921 = vunpack.c.h.b16 %v517
        %v922 = vunpack.c.l.b16 %v518
        %v923 = vunpack.c.l.b16 %v519
        %v924 = vunpack.c.h.b16 %v519
        %v925 = vunpack.c.l.b16 %v520
        %v926 = vunpack.c.l.b16 %v521
        %v927 = vunpack.c.h.b16 %v521
        %v928 = vunpack.c.l.b16 %v522
        %v929 = vunpack.c.l.b16 %v523
        %v930 = vunpack.c.h.b16 %v523
        %v931 = vunpack.c.l.b16 %v524
        %v932 = vunpack.c.l.b16 %v525
        %v933 = vunpack.c.h.b16 %v525
        %v934 = vunpack.c.l.b16 %v526
        %v935 = vunpack.c.l.b16 %v527
        %v936 = vunpack.c.h.b16 %v527
        %v937 = vunpack.c.l.b16 %v528
        %v938 = vunpack.c.l.b16 %v529
        %v939 = vunpack.c.h.b16 %v529
        %v940 = vunpack.c.l.b16 %v530
        %v941 = vunpack.c.l.b16 %v531
        %v942 = vunpack.c.h.b16 %v531
        %v943 = vunpack.c.l.b16 %v532
        %v944 = vunpack.c.l.b16 %v533
        %v945 = vunpack.c.h.b16 %v533
        %v946 = vunpack.c.l.b16 %v534
        %v947 = vunpack.c.l.b16 %v535
        %v948 = vunpack.c.h.b16 %v535
        %v949 = vunpack.c.l.b16 %v536
        %v950 = vunpack.c.l.b16 %v537
        %v951 = vunpack.c.h.b16 %v537
        %v952 = vunpack.c.l.b16 %v538
        %v953 = vunpack.c.l.b16 %v539
        %v954 = vunpack.c.h.b16 %v539
        %v955 = vunpack.c.l.b16 %v540
        %v956 = vunpack.c.l.b16 %v541
        %v957 = vunpack.c.h.b16 %v541
        %v958 = vunpack.c.l.b16 %v542
        %v959 = vunpack.c.l.b16 %v543
        %v960 = vunpack.c.h.b16 %v543
        %v961 = vunpack.c.l.b16 %v544
        %v962 = vunpack.c.l.b16 %v545
        %v963 = vunpack.c.h.b16 %v545
        %v964 = vunpack.c.l.b16 %v546
        %v965 = vunpack.c.l.b16 %v547
        %v966 = vunpack.c.h.b16 %v547
        %v967 = vunpack.c.l.b16 %v548
        %v968 = vunpack.c.l.b16 %v549
        %v969 = vunpack.c.h.b16 %v549
        %v970 = vunpack.c.l.b16 %v550
        %v971 = vunpack.c.l.b16 %v551
        %v972 = vunpack.c.h.b16 %v551
        %v973 = vunpack.c.l.b16 %v552
        %v974 = vunpack.c.l.b16 %v553
        %v975 = vunpack.c.h.b16 %v553
        %v976 = vunpack.c.l.b16 %v554
        %v977 = vunpack.c.l.b16 %v555
        %v978 = vunpack.c.h.b16 %v555
        %v979 = vunpack.c.l.b16 %v556
        %v980 = vunpack.c.l.b16 %v557
        %v981 = vunpack.c.h.b16 %v557
        %v982 = vunpack.c.l.b16 %v558
        %v983 = vunpack.c.l.b16 %v559
        %v984 = vunpack.c.h.b16 %v559
        %v985 = vunpack.c.l.b16 %v560
        %v986 = vunpack.c.l.b16 %v561
        %v987 = vunpack.c.h.b16 %v561
        %v988 = vunpack.c.l.b16 %v562
        %v989 = vunpack.c.l.b16 %v563
        %v990 = vunpack.c.h.b16 %v563
        %v991 = vunpack.c.l.b16 %v564
        %v992 = vunpack.c.l.b16 %v565
        %v993 = vunpack.c.h.b16 %v565
        %v994 = vunpack.c.l.b16 %v566
        %v995 = vunpack.c.l.b16 %v567
        %v996 = vunpack.c.h.b16 %v567
        %v997 = vunpack.c.l.b16 %v568
        %v998 = vunpack.c.l.b16 %v569
        %v999 = vunpack.c.h.b16 %v569
        %v1000 = vunpack.c.l.b16 %v570
        %v1001 = vunpack.c.l.b16 %v571
        %v1002 = vunpack.c.h.b16 %v571
        %v1003 = vunpack.c.l.b16 %v572
        %v1004 = vunpack.c.l.b16 %v573
        %v1005 = vunpack.c.h.b16 %v573
        %v1006 = vunpack.c.l.b16 %v574
        %v1007 = vunpack.c.l.b16 %v575
        %v1008 = vunpack.c.h.b16 %v575
        %v1009 = vunpack.c.l.b16 %v576
        %v1010 = vunpack.c.l.b16 %v577
        %v1011 = vunpack.c.h.b16 %v577
        %v1012 = vunpack.c.l.b16 %v578
        %v1013 = vunpack.c.l.b16 %v579
        %v1014 = vunpack.c.h.b16 %v579
        %v1015 = vunpack.c.l.b16 %v580
        %v1016 = vunpack.c.l.b16 %v581
        %v1017 = vunpack.c.h.b16 %v581
        %v1018 = vunpack.c.l.b16 %v582
        %v1019 = vunpack.c.l.b16 %v583
        %v1020 = vunpack.c.h.b16 %v583
        %v1021 = vunpack.c.l.b16 %v584
        %v1022 = vunpack.c.l.b16 %v585
        %v1023 = vunpack.c.h.b16 %v585
        %v1024 = vunpack.c.l.b16 %v586
        %v1025 = vunpack.c.l.b16 %v587
        %v1026 = vunpack.c.h.b16 %v587
        %v1027 = vunpack.c.l.b16 %v588
        %v1028 = vunpack.c.l.b16 %v589
        %v1029 = vunpack.c.h.b16 %v589
        %v1030 = vunpack.c.l.b16 %v590
        %v1031 = vunpack.c.l.b16 %v591
        %v1032 = vunpack.c.h.b16 %v591
        %v1033 = vunpack.c.l.b16 %v592
        %v1034 = vunpack.c.l.b16 %v593
        %v1035 = vunpack.c.h.b16 %v593
        %v1036 = vunpack.c.l.b16 %v594
        %v1037 = vunpack.c.l.b16 %v595
        %v1038 = vunpack.c.h.b16 %v595
        %v1039 = vunpack.c.l.b16 %v596
        %v1040 = vunpack.c.l.b16 %v597
        %v1041 = vunpack.c.h.b16 %v597
        %v1042 = vunpack.c.l.b16 %v598
        %v1043 = vunpack.c.l.b16 %v599
        %v1044 = vunpack.c.h.b16 %v599
        %v1045 = vunpack.c.l.b16 %v600
        %v1046 = vunpack.c.l.b16 %v601
        %v1047 = vunpack.c.h.b16 %v601
        %v1048 = vunpack.c.l.b16 %v602
        %v1049 = vunpack.c.l.b16 %v603
        %v1050 = vunpack.c.h.b16 %v603
        %v1051 = vunpack.c.l.b16 %v604
        %v1052 = vunpack.c.l.b16 %v605
        %v1053 = vunpack.c.h.b16 %v605
        %v1054 = vunpack.c.l.b16 %v606
        %v1055 = vunpack.c.l.b16 %v607
        %v1056 = vunpack.c.h.b16 %v607
        %v1057 = vunpack.c.l.b16 %v608
        %v1058 = vunpack.c.l.b16 %v609
        %v1059 = vunpack.c.h.b16 %v609
        %v1060 = vunpack.c.l.b16 %v610
        %v1061 = vunpack.c.l.b16 %v611
        %v1062 = vunpack.c.h.b16 %v611
        %v1063 = vunpack.c.l.b16 %v612
        %v1064 = vunpack.c.l.b16 %v613
        %v1065 = vunpack.c.h.b16 %v613
        %v1066 = vunpack.c.l.b16 %v614
        %v1067 = vunpack.c.l.b16 %v615
        %v1068 = vunpack.c.h.b16 %v615
        %v1069 = vunpack.c.l.b16 %v616
        %v1070 = vunpack.c.l.b16 %v617
        %v1071 = vunpack.c.h.b16 %v617
        %v1072 = vunpack.c.l.b16 %v618
        %v1073 = vunpack.c.l.b16 %v619
        %v1074 = vunpack.c.h.b16 %v619
        %v1075 = vunpack.c.l.b16 %v620
        %v1076 = vunpack.c.l.b16 %v621
        %v1077 = vunpack.c.h.b16 %v621
        %v1078 = vunpack.c.l.b16 %v622
        %v1079 = vunpack.c.l.b16 %v623
        %v1080 = vunpack.c.h.b16 %v623
        %v1081 = vunpack.c.l.b16 %v624
        %v1082 = vunpack.c.l.b16 %v625
        %v1083 = vunpack.c.h.b16 %v625
        %v1084 = vunpack.c.l.b16 %v626
        %v1085 = vunpack.c.l.b16 %v627
        %v1086 = vunpack.c.h.b16 %v627
        %v1087 = vunpack.c.l.b16 %v628
        %v1088 = vunpack.c.l.b16 %v629
        %v1089 = vunpack.c.h.b16 %v629
        %v1090 = vunpack.c.l.b16 %v630
        %v1091 = vunpack.c.l.b16 %v631
        %v1092 = vunpack.c.h.b16 %v631
        %v1093 = vunpack.c.l.b16 %v632
        %v1094 = vunpack.c.l.b16 %v633
        %v1095 = vunpack.c.h.b16 %v633
        %v1096 = vunpack.c.l.b16 %v634
        %v1097 = vunpack.c.l.b16 %v635
        %v1098 = vunpack.c.h.b16 %v635
        %v1099 = vunpack.c.l.b16 %v636
        %v1100 = vunpack.c.l.b16 %v637
        %v1101 = vunpack.c.h.b16 %v637
        %v1102 = vunpack.c.l.b16 %v638
        %v1103 = vunpack.c.l.b16 %v639
        %v1104 = vunpack.c.h.b16 %v639
        %v1105 = vunpack.c.l.b16 %v640
        %v1106 = vunpack.c.l.b16 %v641
        %v1107 = vunpack.c.h.b16 %v641
        %v1108 = vunpack.c.l.b16 %v642
        %v1109 = vunpack.c.l.b16 %v643
        %v1110 = vunpack.c.h.b16 %v643
        %v1111 = vunpack.c.l.b16 %v644
        %v1112 = vunpack.c.l.b16 %v645
        %v1113 = vunpack.c.h.b16 %v645
        %v1114 = vunpack.c.l.b16 %v646
        %v1115 = vunpack.c.l.b16 %v647
        %v1116 = vunpack.c.h.b16 %v647
        %v1117 = vunpack.c.l.b16 %v648
        %v1118 = vunpack.c.l.b16 %v649
        %v1119 = vunpack.c.h.b16 %v649
        %v1120 = vunpack.c.l.b16 %v650
        %v1121 = vunpack.c.l.b16 %v651
        %v1122 = vunpack.c.h.b16 %v651
        %v1123 = vunpack.c.l.b16 %v652
        %v1124 = vunpack.c.l.b16 %v653
        %v1125 = vunpack.c.h.b16 %v653
        %v1126 = vunpack.c.l.b16 %v654
        %v1127 = vunpack.c.l.b16 %v655
        %v1128 = vunpack.c.h.b16 %v655
        %v1129 = vunpack.c.l.b16 %v656
        %v1130 = vunpack.c.l.b16 %v657
        %v1131 = vunpack.c.h.b16 %v657
        %v1132 = vunpack.c.l.b16 %v658
        %v1133 = vunpack.c.l.b16 %v659
        %v1134 = vunpack.c.h.b16 %v659
        %v1135 = vunpack.c.l.b16 %v660
        %v1136 = vunpack.c.l.b16 %v661
        %v1137 = vunpack.c.h.b16 %v661
        %v1138 = vunpack.c.l.b16 %v662
        %v1139 = vunpack.c.l.b16 %v663
        %v1140 = vunpack.c.h.b16 %v663
        %v1141 = vunpack.c.l.b16 %v664
        %v1142 = vunpack.c.l.b16 %v665
        %v1143 = vunpack.c.h.b16 %v665
        %v1144 = vunpack.c.l.b16 %v666
        %v1145 = vunpack.c.l.b16 %v667
        %v1146 = vunpack.c.h.b16 %v667
        %v1147 = vunpack.c.l.b16 %v668
        %v1148 = vunpack.c.l.b16 %v669
        %v1149 = vunpack.c.h.b16 %v669
        %v1150 = vunpack.c.l.b16 %v670
        %v1151 = vunpack.c.l.b16 %v671
        %v1152 = vunpack.c.h.b16 %v671
        %v1153 = vunpack.c.l.b16 %v672
        %v1154 = vunpack.c.l.b16 %v673
        %v1155 = vunpack.c.h.b16 %v673
        %v1156 = vunpack.c.l.b16 %v674
        %v1157 = vunpack.c.l.b16 %v675
        %v1158 = vunpack.c.h.b16 %v675
        %v1159 = vunpack.c.l.b16 %v676
        %v1160 = vunpack.c.l.b16 %v677
        %v1161 = vunpack.c.h.b16 %v677
        %v1162 = vunpack.c.l.b16 %v678
        %v1163 = vunpack.c.l.b16 %v679
        %v1164 = vunpack.c.h.b16 %v679
        %v1165 = vunpack.c.l.b16 %v680
        %v1166 = vunpack.c.l.b16 %v681
        %v1167 = vunpack.c.h.b16 %v681
        %v1168 = vunpack.c.l.b16 %v682
        %v1169 = vunpack.c.l.b16 %v683
        %v1170 = vunpack.c.h.b16 %v683
        %v1171 = vunpack.c.l.b16 %v684
        %v1172 = vunpack.c.l.b16 %v685
        %v1173 = vunpack.c.h.b16 %v685
        %v1174 = vunpack.c.l.b16 %v686
        %v1175 = vpack.c.b16 %v890, %v887
        %v1176 = vpack.c.b16 %v891, %v888
        %v1177 = vpack.c.b16 %v892, %v889
        %v1178 = vpack.c.b16 %v896, %v893
        %v1179 = vpack.c.b16 %v897, %v894
        %v1180 = vpack.c.b16 %v898, %v895
        %v1181 = vpack.c.b16 %v902, %v899
        %v1182 = vpack.c.b16 %v903, %v900
        %v1183 = vpack.c.b16 %v904, %v901
        %v1184 = vpack.c.b16 %v908, %v905
        %v1185 = vpack.c.b16 %v909, %v906
        %v1186 = vpack.c.b16 %v910, %v907
        %v1187 = vpack.c.b16 %v914, %v911
        %v1188 = vpack.c.b16 %v915, %v912
        %v1189 = vpack.c.b16 %v916, %v913
        %v1190 = vpack.c.b16 %v920, %v917
        %v1191 = vpack.c.b16 %v921, %v918
        %v1192 = vpack.c.b16 %v922, %v919
        %v1193 = vpack.c.b16 %v926, %v923
        %v1194 = vpack.c.b16 %v927, %v924
        %v1195 = vpack.c.b16 %v928, %v925
        %v1196 = vpack.c.b16 %v932, %v929
        %v1197 = vpack.c.b16 %v933, %v930
        %v1198 = vpack.c.b16 %v934, %v931
        %v1199 = vpack.c.b16 %v938, %v935
        %v1200 = vpack.c.b16 %v939, %v936
        %v1201 = vpack.c.b16 %v940, %v937
        %v1202 = vpack.c.b16 %v944, %v941
        %v1203 = vpack.c.b16 %v945, %v942
        %v1204 = vpack.c.b16 %v946, %v943
        %v1205 = vpack.c.b16 %v950, %v947
        %v1206 = vpack.c.b16 %v951, %v948
        %v1207 = vpack.c.b16 %v952, %v949
        %v1208 = vpack.c.b16 %v956, %v953
        %v1209 = vpack.c.b16 %v957, %v954
        %v1210 = vpack.c.b16 %v958, %v955
        %v1211 = vpack.c.b16 %v962, %v959
        %v1212 = vpack.c.b16 %v963, %v960
        %v1213 = vpack.c.b16 %v964, %v961
        %v1214 = vpack.c.b16 %v968, %v965
        %v1215 = vpack.c.b16 %v969, %v966
        %v1216 = vpack.c.b16 %v970, %v967
        %v1217 = vpack.c.b16 %v974, %v971
        %v1218 = vpack.c.b16 %v975, %v972
        %v1219 = vpack.c.b16 %v976, %v973
        %v1220 = vpack.c.b16 %v980, %v977
        %v1221 = vpack.c.b16 %v981, %v978
        %v1222 = vpack.c.b16 %v982, %v979
        %v1223 = vpack.c.b16 %v986, %v983
        %v1224 = vpack.c.b16 %v987, %v984
        %v1225 = vpack.c.b16 %v988, %v985
        %v1226 = vpack.c.b16 %v992, %v989
        %v1227 = vpack.c.b16 %v993, %v990
        %v1228 = vpack.c.b16 %v994, %v991
        %v1229 = vpack.c.b16 %v998, %v995
        %v1230 = vpack.c.b16 %v999, %v996
        %v1231 = vpack.c.b16 %v1000, %v997
        %v1232 = vpack.c.b16 %v1004, %v1001
        %v1233 = vpack.c.b16 %v1005, %v1002
        %v1234 = vpack.c.b16 %v1006, %v1003
        %v1235 = vpack.c.b16 %v1010, %v1007
        %v1236 = vpack.c.b16 %v1011, %v1008
        %v1237 = vpack.c.b16 %v1012, %v1009
        %v1238 = vpack.c.b16 %v1016, %v1013
        %v1239 = vpack.c.b16 %v1017, %v1014
        %v1240 = vpack.c.b16 %v1018, %v1015
        %v1241 = vpack.c.b16 %v1022, %v1019
        %v1242 = vpack.c.b16 %v1023, %v1020
        %v1243 = vpack.c.b16 %v1024, %v1021
        %v1244 = vpack.c.b16 %v1028, %v1025
        %v1245 = vpack.c.b16 %v1029, %v1026
        %v1246 = vpack.c.b16 %v1030, %v1027
        %v1247 = vpack.c.b16 %v1034, %v1031
        %v1248 = vpack.c.b16 %v1035, %v1032
        %v1249 = vpack.c.b16 %v1036, %v1033
        %v1250 = vpack.c.b16 %v1040, %v1037
        %v1251 = vpack.c.b16 %v1041, %v1038
        %v1252 = vpack.c.b16 %v1042, %v1039
        %v1253 = vpack.c.b16 %v1046, %v1043
        %v1254 = vpack.c.b16 %v1047, %v1044
        %v1255 = vpack.c.b16 %v1048, %v1045
        %v1256 = vpack.c.b16 %v1052, %v1049
        %v1257 = vpack.c.b16 %v1053, %v1050
        %v1258 = vpack.c.b16 %v1054, %v1051
        %v1259 = vpack.c.b16 %v1058, %v1055
        %v1260 = vpack.c.b16 %v1059, %v1056
        %v1261 = vpack.c.b16 %v1060, %v1057
        %v1262 = vpack.c.b16 %v1064, %v1061
        %v1263 = vpack.c.b16 %v1065, %v1062
        %v1264 = vpack.c.b16 %v1066, %v1063
        %v1265 = vpack.c.b16 %v1070, %v1067
        %v1266 = vpack.c.b16 %v1071, %v1068
        %v1267 = vpack.c.b16 %v1072, %v1069
        %v1268 = vpack.c.b16 %v1076, %v1073
        %v1269 = vpack.c.b16 %v1077, %v1074
        %v1270 = vpack.c.b16 %v1078, %v1075
        %v1271 = vpack.c.b16 %v1082, %v1079
        %v1272 = vpack.c.b16 %v1083, %v1080
        %v1273 = vpack.c.b16 %v1084, %v1081
        %v1274 = vpack.c.b16 %v1088, %v1085
        %v1275 = vpack.c.b16 %v1089, %v1086
        %v1276 = vpack.c.b16 %v1090, %v1087
        %v1277 = vpack.c.b16 %v1094, %v1091
        %v1278 = vpack.c.b16 %v1095, %v1092
        %v1279 = vpack.c.b16 %v1096, %v1093
        %v1280 = vpack.c.b16 %v1100, %v1097
        %v1281 = vpack.c.b16 %v1101, %v1098
        %v1282 = vpack.c.b16 %v1102, %v1099
        %v1283 = vpack.c.b16 %v1106, %v1103
        %v1284 = vpack.c.b16 %v1107, %v1104
        %v1285 = vpack.c.b16 %v1108, %v1105
        %v1286 = vpack.c.b16 %v1112, %v1109
        %v1287 = vpack.c.b16 %v1113, %v1110
        %v1288 = vpack.c.b16 %v1114, %v1111
        %v1289 = vpack.c.b16 %v1118, %v1115
        %v1290 = vpack.c.b16 %v1119, %v1116
        %v1291 = vpack.c.b16 %v1120, %v1117
        %v1292 = vpack.c.b16 %v1124, %v1121
        %v1293 = vpack.c.b16 %v1125, %v1122
        %v1294 = vpack.c.b16 %v1126, %v1123
        %v1295 = vpack.c.b16 %v1130, %v1127
        %v1296 = vpack.c.b16 %v1131, %v1128
        %v1297 = vpack.c.b16 %v1132, %v1129
        %v1298 = vpack.c.b16 %v1136, %v1133
        %v1299 = vpack.c.b16 %v1137, %v1134
        %v1300 = vpack.c.b16 %v1138, %v1135
        %v1301 = vpack.c.b16 %v1142, %v1139
        %v1302 = vpack.c.b16 %v1143, %v1140
        %v1303 = vpack.c.b16 %v1144, %v1141
        %v1304 = vpack.c.b16 %v1148, %v1145
        %v1305 = vpack.c.b16 %v1149, %v1146
        %v1306 = vpack.c.b16 %v1150, %v1147
        %v1307 = vpack.c.b16 %v1154, %v1151
        %v1308 = vpack.c.b16 %v1155, %v1152
        %v1309 = vpack.c.b16 %v1156, %v1153
        %v1310 = vpack.c.b16 %v1160, %v1157
        %v1311 = vpack.c.b16 %v1161, %v1158
        %v1312 = vpack.c.b16 %v1162, %v1159
        %v1313 = vpack.c.b16 %v1166, %v1163
        %v1314 = vpack.c.b16 %v1167, %v1164
        %v1315 = vpack.c.b16 %v1168, %v1165
        %v1316 = vpack.c.b16 %v1172, %v1169
        %v1317 = vpack.c.b16 %v1173, %v1170
        %v1318 = vpack.c.b16 %v1174, %v1171
        %1463 = vmatpush.bf16.msra.mxu0 %v1196
        %1464 = vmatpush.bf16.msra.mxu0 %v1193
        %1465 = vmatpush.bf16.msra.mxu0 %v1190
        %1466 = vmatpush.bf16.msra.mxu0 %v1187
        %1467 = vmatpush.bf16.msra.mxu0 %v1184
        %1468 = vmatpush.bf16.msra.mxu0 %v1181
        %1469 = vmatpush.bf16.msra.mxu0 %v1178
        %1470 = vmatpush.bf16.msra.mxu0 %v1175
        %1471 = vmatmul.bf16.gmra.mxu0 %v489
        %v1472 = vpop.f32.mrf.mxu0
        %v1473 = vadd.f32 %v689, %v1472
        %v1474 = vpop.f32.mrf.mxu0
        %1475 = vdwg.mxu0
        %1476 = vmatpush.bf16.msra.mxu0 %v1220
        %1477 = vmatpush.bf16.msra.mxu0 %v1217
        %1478 = vmatpush.bf16.msra.mxu0 %v1214
        %1479 = vmatpush.bf16.msra.mxu0 %v1211
        %1480 = vmatpush.bf16.msra.mxu0 %v1208
        %1481 = vmatpush.bf16.msra.mxu0 %v1205
        %1482 = vmatpush.bf16.msra.mxu0 %v1202
        %1483 = vmatpush.bf16.msra.mxu0 %v1199
        %1484 = vmatmul.bf16.gmra.mxu0 %v490
        %v1485 = vpop.f32.mrf.mxu0
        %v1486 = vadd.f32 %v1473, %v1485
        %v1487 = vpop.f32.mrf.mxu0
        %1488 = vdwg.mxu0
        %1489 = vmatpush.bf16.msra.mxu0 %v1244
        %1490 = vmatpush.bf16.msra.mxu0 %v1241
        %1491 = vmatpush.bf16.msra.mxu0 %v1238
        %1492 = vmatpush.bf16.msra.mxu0 %v1235
        %1493 = vmatpush.bf16.msra.mxu0 %v1232
        %1494 = vmatpush.bf16.msra.mxu0 %v1229
        %1495 = vmatpush.bf16.msra.mxu0 %v1226
        %1496 = vmatpush.bf16.msra.mxu0 %v1223
        %1497 = vmatmul.bf16.gmra.mxu0 %v491
        %v1498 = vpop.f32.mrf.mxu0
        %v1499 = vadd.f32 %v1486, %v1498
        %v1500 = vpop.f32.mrf.mxu0
        %1501 = vdwg.mxu0
        %1502 = vmatpush.bf16.msra.mxu0 %v1268
        %1503 = vmatpush.bf16.msra.mxu0 %v1265
        %1504 = vmatpush.bf16.msra.mxu0 %v1262
        %1505 = vmatpush.bf16.msra.mxu0 %v1259
        %1506 = vmatpush.bf16.msra.mxu0 %v1256
        %1507 = vmatpush.bf16.msra.mxu0 %v1253
        %1508 = vmatpush.bf16.msra.mxu0 %v1250
        %1509 = vmatpush.bf16.msra.mxu0 %v1247
        %1510 = vmatmul.bf16.gmra.mxu0 %v492
        %v1511 = vpop.f32.mrf.mxu0
        %v1512 = vadd.f32 %v1499, %v1511
        %v1513 = vpop.f32.mrf.mxu0
        %1514 = vdwg.mxu0
        %1515 = vmatpush.bf16.msra.mxu0 %v1292
        %1516 = vmatpush.bf16.msra.mxu0 %v1289
        %1517 = vmatpush.bf16.msra.mxu0 %v1286
        %1518 = vmatpush.bf16.msra.mxu0 %v1283
        %1519 = vmatpush.bf16.msra.mxu0 %v1280
        %1520 = vmatpush.bf16.msra.mxu0 %v1277
        %1521 = vmatpush.bf16.msra.mxu0 %v1274
        %1522 = vmatpush.bf16.msra.mxu0 %v1271
        %1523 = vmatmul.bf16.gmra.mxu0 %v493
        %v1524 = vpop.f32.mrf.mxu0
        %v1525 = vadd.f32 %v1512, %v1524
        %v1526 = vpop.f32.mrf.mxu0
        %1527 = vdwg.mxu0
        %1528 = vmatpush.bf16.msra.mxu0 %v1316
        %1529 = vmatpush.bf16.msra.mxu0 %v1313
        %1530 = vmatpush.bf16.msra.mxu0 %v1310
        %1531 = vmatpush.bf16.msra.mxu0 %v1307
        %1532 = vmatpush.bf16.msra.mxu0 %v1304
        %1533 = vmatpush.bf16.msra.mxu0 %v1301
        %1534 = vmatpush.bf16.msra.mxu0 %v1298
        %1535 = vmatpush.bf16.msra.mxu0 %v1295
        %1536 = vmatmul.bf16.gmra.mxu0 %v494
        %v1537 = vpop.f32.mrf.mxu0
        %v1538 = vadd.f32 %v1525, %v1537
        %v1539 = vpop.f32.mrf.mxu0
        %1540 = vdwg.mxu0
        %1541 = vmatpush.bf16.msra.mxu0 %v1197
        %1542 = vmatpush.bf16.msra.mxu0 %v1194
        %1543 = vmatpush.bf16.msra.mxu0 %v1191
        %1544 = vmatpush.bf16.msra.mxu0 %v1188
        %1545 = vmatpush.bf16.msra.mxu0 %v1185
        %1546 = vmatpush.bf16.msra.mxu0 %v1182
        %1547 = vmatpush.bf16.msra.mxu0 %v1179
        %1548 = vmatpush.bf16.msra.mxu0 %v1176
        %1549 = vmatmul.bf16.gmra.mxu0 %v489
        %v1550 = vpop.f32.mrf.mxu0
        %v1551 = vadd.f32 %v690, %v1550
        %v1552 = vpop.f32.mrf.mxu0
        %1553 = vdwg.mxu0
        %1554 = vmatpush.bf16.msra.mxu0 %v1221
        %1555 = vmatpush.bf16.msra.mxu0 %v1218
        %1556 = vmatpush.bf16.msra.mxu0 %v1215
        %1557 = vmatpush.bf16.msra.mxu0 %v1212
        %1558 = vmatpush.bf16.msra.mxu0 %v1209
        %1559 = vmatpush.bf16.msra.mxu0 %v1206
        %1560 = vmatpush.bf16.msra.mxu0 %v1203
        %1561 = vmatpush.bf16.msra.mxu0 %v1200
        %1562 = vmatmul.bf16.gmra.mxu0 %v490
        %v1563 = vpop.f32.mrf.mxu0
        %v1564 = vadd.f32 %v1551, %v1563
        %v1565 = vpop.f32.mrf.mxu0
        %1566 = vdwg.mxu0
        %1567 = vmatpush.bf16.msra.mxu0 %v1245
        %1568 = vmatpush.bf16.msra.mxu0 %v1242
        %1569 = vmatpush.bf16.msra.mxu0 %v1239
        %1570 = vmatpush.bf16.msra.mxu0 %v1236
        %1571 = vmatpush.bf16.msra.mxu0 %v1233
        %1572 = vmatpush.bf16.msra.mxu0 %v1230
        %1573 = vmatpush.bf16.msra.mxu0 %v1227
        %1574 = vmatpush.bf16.msra.mxu0 %v1224
        %1575 = vmatmul.bf16.gmra.mxu0 %v491
        %v1576 = vpop.f32.mrf.mxu0
        %v1577 = vadd.f32 %v1564, %v1576
        %v1578 = vpop.f32.mrf.mxu0
        %1579 = vdwg.mxu0
        %1580 = vmatpush.bf16.msra.mxu0 %v1269
        %1581 = vmatpush.bf16.msra.mxu0 %v1266
        %1582 = vmatpush.bf16.msra.mxu0 %v1263
        %1583 = vmatpush.bf16.msra.mxu0 %v1260
        %1584 = vmatpush.bf16.msra.mxu0 %v1257
        %1585 = vmatpush.bf16.msra.mxu0 %v1254
        %1586 = vmatpush.bf16.msra.mxu0 %v1251
        %1587 = vmatpush.bf16.msra.mxu0 %v1248
        %1588 = vmatmul.bf16.gmra.mxu0 %v492
        %v1589 = vpop.f32.mrf.mxu0
        %v1590 = vadd.f32 %v1577, %v1589
        %v1591 = vpop.f32.mrf.mxu0
        %1592 = vdwg.mxu0
        %1593 = vmatpush.bf16.msra.mxu0 %v1293
        %1594 = vmatpush.bf16.msra.mxu0 %v1290
        %1595 = vmatpush.bf16.msra.mxu0 %v1287
        %1596 = vmatpush.bf16.msra.mxu0 %v1284
        %1597 = vmatpush.bf16.msra.mxu0 %v1281
        %1598 = vmatpush.bf16.msra.mxu0 %v1278
        %1599 = vmatpush.bf16.msra.mxu0 %v1275
        %1600 = vmatpush.bf16.msra.mxu0 %v1272
        %1601 = vmatmul.bf16.gmra.mxu0 %v493
        %v1602 = vpop.f32.mrf.mxu0
        %v1603 = vadd.f32 %v1590, %v1602
        %v1604 = vpop.f32.mrf.mxu0
        %1605 = vdwg.mxu0
        %1606 = vmatpush.bf16.msra.mxu0 %v1317
        %1607 = vmatpush.bf16.msra.mxu0 %v1314
        %1608 = vmatpush.bf16.msra.mxu0 %v1311
        %1609 = vmatpush.bf16.msra.mxu0 %v1308
        %1610 = vmatpush.bf16.msra.mxu0 %v1305
        %1611 = vmatpush.bf16.msra.mxu0 %v1302
        %1612 = vmatpush.bf16.msra.mxu0 %v1299
        %1613 = vmatpush.bf16.msra.mxu0 %v1296
        %1614 = vmatmul.bf16.gmra.mxu0 %v494
        %v1615 = vpop.f32.mrf.mxu0
        %v1616 = vadd.f32 %v1603, %v1615
        %v1617 = vpop.f32.mrf.mxu0
        %1618 = vdwg.mxu0
        %1619 = vmatpush.bf16.msra.mxu0 %v1198
        %1620 = vmatpush.bf16.msra.mxu0 %v1195
        %1621 = vmatpush.bf16.msra.mxu0 %v1192
        %1622 = vmatpush.bf16.msra.mxu0 %v1189
        %1623 = vmatpush.bf16.msra.mxu0 %v1186
        %1624 = vmatpush.bf16.msra.mxu0 %v1183
        %1625 = vmatpush.bf16.msra.mxu0 %v1180
        %1626 = vmatpush.bf16.msra.mxu0 %v1177
        %1627 = vmatmul.bf16.gmra.mxu0 %v489
        %v1628 = vpop.f32.mrf.mxu0
        %v1629 = vadd.f32 %v691, %v1628
        %v1630 = vpop.f32.mrf.mxu0
        %1631 = vdwg.mxu0
        %1632 = vmatpush.bf16.msra.mxu0 %v1222
        %1633 = vmatpush.bf16.msra.mxu0 %v1219
        %1634 = vmatpush.bf16.msra.mxu0 %v1216
        %1635 = vmatpush.bf16.msra.mxu0 %v1213
        %1636 = vmatpush.bf16.msra.mxu0 %v1210
        %1637 = vmatpush.bf16.msra.mxu0 %v1207
        %1638 = vmatpush.bf16.msra.mxu0 %v1204
        %1639 = vmatpush.bf16.msra.mxu0 %v1201
        %1640 = vmatmul.bf16.gmra.mxu0 %v490
        %v1641 = vpop.f32.mrf.mxu0
        %v1642 = vadd.f32 %v1629, %v1641
        %v1643 = vpop.f32.mrf.mxu0
        %1644 = vdwg.mxu0
        %1645 = vmatpush.bf16.msra.mxu0 %v1246
        %1646 = vmatpush.bf16.msra.mxu0 %v1243
        %1647 = vmatpush.bf16.msra.mxu0 %v1240
        %1648 = vmatpush.bf16.msra.mxu0 %v1237
        %1649 = vmatpush.bf16.msra.mxu0 %v1234
        %1650 = vmatpush.bf16.msra.mxu0 %v1231
        %1651 = vmatpush.bf16.msra.mxu0 %v1228
        %1652 = vmatpush.bf16.msra.mxu0 %v1225
        %1653 = vmatmul.bf16.gmra.mxu0 %v491
        %v1654 = vpop.f32.mrf.mxu0
        %v1655 = vadd.f32 %v1642, %v1654
        %v1656 = vpop.f32.mrf.mxu0
        %1657 = vdwg.mxu0
        %1658 = vmatpush.bf16.msra.mxu0 %v1270
        %1659 = vmatpush.bf16.msra.mxu0 %v1267
        %1660 = vmatpush.bf16.msra.mxu0 %v1264
        %1661 = vmatpush.bf16.msra.mxu0 %v1261
        %1662 = vmatpush.bf16.msra.mxu0 %v1258
        %1663 = vmatpush.bf16.msra.mxu0 %v1255
        %1664 = vmatpush.bf16.msra.mxu0 %v1252
        %1665 = vmatpush.bf16.msra.mxu0 %v1249
        %1666 = vmatmul.bf16.gmra.mxu0 %v492
        %v1667 = vpop.f32.mrf.mxu0
        %v1668 = vadd.f32 %v1655, %v1667
        %v1669 = vpop.f32.mrf.mxu0
        %1670 = vdwg.mxu0
        %1671 = vmatpush.bf16.msra.mxu0 %v1294
        %1672 = vmatpush.bf16.msra.mxu0 %v1291
        %1673 = vmatpush.bf16.msra.mxu0 %v1288
        %1674 = vmatpush.bf16.msra.mxu0 %v1285
        %1675 = vmatpush.bf16.msra.mxu0 %v1282
        %1676 = vmatpush.bf16.msra.mxu0 %v1279
        %1677 = vmatpush.bf16.msra.mxu0 %v1276
        %1678 = vmatpush.bf16.msra.mxu0 %v1273
        %1679 = vmatmul.bf16.gmra.mxu0 %v493
        %v1680 = vpop.f32.mrf.mxu0
        %v1681 = vadd.f32 %v1668, %v1680
        %v1682 = vpop.f32.mrf.mxu0
        %1683 = vdwg.mxu0
        %1684 = vmatpush.bf16.msra.mxu0 %v1318
        %1685 = vmatpush.bf16.msra.mxu0 %v1315
        %1686 = vmatpush.bf16.msra.mxu0 %v1312
        %1687 = vmatpush.bf16.msra.mxu0 %v1309
        %1688 = vmatpush.bf16.msra.mxu0 %v1306
        %1689 = vmatpush.bf16.msra.mxu0 %v1303
        %1690 = vmatpush.bf16.msra.mxu0 %v1300
        %1691 = vmatpush.bf16.msra.mxu0 %v1297
        %1692 = vmatmul.bf16.gmra.mxu0 %v494
        %v1693 = vpop.f32.mrf.mxu0
        %v1694 = vadd.f32 %v1681, %v1693
        %v1695 = vpop.f32.mrf.mxu0
        %1696 = vdwg.mxu0
        %v1697 = vpack.c.bf16 %v1538, %v1538
        %v1698 = vpack.c.bf16 %v1616, %v1616
        %v1700 = vrot.slane %v1698, 1
        %1702 = vmatpush.bf16.xpose.msra.mxu0 0
        %1703 = vmatpush.bf16.xpose.msra.mxu0 0
        %1704 = vmatpush.bf16.xpose.msra.mxu0 0
        %1705 = vmatpush.bf16.xpose.msra.mxu0 0
        %1706 = vmatpush.bf16.xpose.msra.mxu0 0
        %1707 = vmatpush.bf16.xpose.msra.mxu0 0
        %1708 = vmatpush.bf16.xpose.msra.mxu0 0
        %1709 = vmatpush.bf16.xpose.msra.mxu0 %v1700
        %1710 = vmatmul.bf16.gmra.mxu0 %v1697
        %v1711 = vpop.f32.mrf.mxu0
        %v1712 = vadd.f32 0.0, %v1711
        %v1713 = vpop.f32.mrf.mxu0
        %1714 = vdwg.mxu0
        %v1715 = vmul.f32 %v1712, 0.088388346
        %vm1716 = vcmask 9216
        %v1717 = vsel %vm1716, %v1715, -inf
        %1718 = vmax.xlane.f32.xlu0 %v1717
        %v1719 = vpop.xlane.xlu0 %1718
        %v1720 = vsub.f32 %v1715, %v1719
        %v1721 = vmul.f32 %v1720, 1.442695
        %v1722 = vpow.pop %v1721
        %v1723 = vsel %vm1716, %v1722, 0.0
        %1724 = vadd.xlane.f32.xlu0 %v1723
        %v1725 = vpop.xlane.xlu0 %1724
        %v1726 = vrcp.pop %v1725
        %v1727 = vmul.f32 %v1722, %v1726
        %v1728 = vpack.c.bf16 %v1727, %v1727
        %v1729 = vpack.c.bf16 %v1694, %v1694
        %v1731 = vrot.slane %v1729, 1
        %vm1732 = vcmask 15360
        %v1734 = vsel %vm1732, %v1728, 0
        %vm1736 = vcmask 1040384
        %v1738 = vsel %vm1736, %v1731, 0
        %1740 = vmatpush.bf16.msra.mxu0 0
        %1741 = vmatpush.bf16.msra.mxu0 0
        %1742 = vmatpush.bf16.msra.mxu0 0
        %1743 = vmatpush.bf16.msra.mxu0 0
        %1744 = vmatpush.bf16.msra.mxu0 0
        %1745 = vmatpush.bf16.msra.mxu0 0
        %1746 = vmatpush.bf16.msra.mxu0 0
        %1747 = vmatpush.bf16.msra.mxu0 %v1738
        %1748 = vmatmul.bf16.gmra.mxu0 %v1734
        %v1749 = vpop.f32.mrf.mxu0
        %v1750 = vadd.f32 0.0, %v1749
        %v1751 = vpop.f32.mrf.mxu0
        %1752 = vdwg.mxu0
        %v1753 = vpack.c.bf16 %v1750, %v1750
        %v1754 = vld [vmem:[%s6] sm:$0xff]
        %v1755 = vld [vmem:[%s6 + $0x8] sm:$0xff]
        %v1756 = vld [vmem:[%s6 + $0x10] sm:$0xff]
        %v1757 = vld [vmem:[%s6 + $0x18] sm:$0xff]
        %v1758 = vld [vmem:[%s6 + $0x20] sm:$0xff]
        %v1759 = vld [vmem:[%s6 + $0x28] sm:$0xff]
        %v1760 = vld [vmem:[%s6 + $0x30] sm:$0xff]
        %v1761 = vld [vmem:[%s6 + $0x38] sm:$0xff]
        %v1762 = vld [vmem:[%s6 + $0x40] sm:$0xff]
        %v1763 = vld [vmem:[%s6 + $0x48] sm:$0xff]
        %v1764 = vld [vmem:[%s6 + $0x50] sm:$0xff]
        %v1765 = vld [vmem:[%s6 + $0x58] sm:$0xff]
        %v1766 = vld [vmem:[%s6 + $0x60] sm:$0xff]
        %v1767 = vld [vmem:[%s6 + $0x68] sm:$0xff]
        %v1768 = vld [vmem:[%s6 + $0x70] sm:$0xff]
        %v1769 = vld [vmem:[%s6 + $0x78] sm:$0xff]
        %v1770 = vld [vmem:[%s6 + $0x80] sm:$0xff]
        %v1771 = vld [vmem:[%s6 + $0x88] sm:$0xff]
        %v1772 = vld [vmem:[%s6 + $0x90] sm:$0xff]
        %v1773 = vld [vmem:[%s6 + $0x98] sm:$0xff]
        %v1774 = vld [vmem:[%s6 + $0xa0] sm:$0xff]
        %v1775 = vld [vmem:[%s6 + $0xa8] sm:$0xff]
        %v1776 = vld [vmem:[%s6 + $0xb0] sm:$0xff]
        %v1777 = vld [vmem:[%s6 + $0xb8] sm:$0xff]
        %v1778 = vld [vmem:[%s6 + $0xc0] sm:$0xff]
        %v1779 = vld [vmem:[%s6 + $0xc8] sm:$0xff]
        %v1780 = vld [vmem:[%s6 + $0xd0] sm:$0xff]
        %v1781 = vld [vmem:[%s6 + $0xd8] sm:$0xff]
        %v1782 = vld [vmem:[%s6 + $0xe0] sm:$0xff]
        %v1783 = vld [vmem:[%s6 + $0xe8] sm:$0xff]
        %v1784 = vld [vmem:[%s6 + $0xf0] sm:$0xff]
        %v1785 = vld [vmem:[%s6 + $0xf8] sm:$0xff]
        %v1786 = vld [vmem:[%s6 + $0x100] sm:$0xff]
        %v1787 = vld [vmem:[%s6 + $0x108] sm:$0xff]
        %v1788 = vld [vmem:[%s6 + $0x110] sm:$0xff]
        %v1789 = vld [vmem:[%s6 + $0x118] sm:$0xff]
        %v1790 = vld [vmem:[%s6 + $0x120] sm:$0xff]
        %v1791 = vld [vmem:[%s6 + $0x128] sm:$0xff]
        %v1792 = vld [vmem:[%s6 + $0x130] sm:$0xff]
        %v1793 = vld [vmem:[%s6 + $0x138] sm:$0xff]
        %v1794 = vld [vmem:[%s6 + $0x140] sm:$0xff]
        %v1795 = vld [vmem:[%s6 + $0x148] sm:$0xff]
        %v1796 = vld [vmem:[%s6 + $0x150] sm:$0xff]
        %v1797 = vld [vmem:[%s6 + $0x158] sm:$0xff]
        %v1798 = vld [vmem:[%s6 + $0x160] sm:$0xff]
        %v1799 = vld [vmem:[%s6 + $0x168] sm:$0xff]
        %v1800 = vld [vmem:[%s6 + $0x170] sm:$0xff]
        %v1801 = vld [vmem:[%s6 + $0x178] sm:$0xff]
        %v1802 = vld [vmem:[%s6 + $0x180] sm:$0xff]
        %v1803 = vld [vmem:[%s6 + $0x188] sm:$0xff]
        %v1804 = vld [vmem:[%s6 + $0x190] sm:$0xff]
        %v1805 = vld [vmem:[%s6 + $0x198] sm:$0xff]
        %v1806 = vld [vmem:[%s6 + $0x1a0] sm:$0xff]
        %v1807 = vld [vmem:[%s6 + $0x1a8] sm:$0xff]
        %v1808 = vld [vmem:[%s6 + $0x1b0] sm:$0xff]
        %v1809 = vld [vmem:[%s6 + $0x1b8] sm:$0xff]
        %v1810 = vld [vmem:[%s6 + $0x1c0] sm:$0xff]
        %v1811 = vld [vmem:[%s6 + $0x1c8] sm:$0xff]
        %v1812 = vld [vmem:[%s6 + $0x1d0] sm:$0xff]
        %v1813 = vld [vmem:[%s6 + $0x1d8] sm:$0xff]
        %v1814 = vld [vmem:[%s6 + $0x1e0] sm:$0xff]
        %v1815 = vld [vmem:[%s6 + $0x1e8] sm:$0xff]
        %v1816 = vld [vmem:[%s6 + $0x1f0] sm:$0xff]
        %v1817 = vld [vmem:[%s6 + $0x1f8] sm:$0xff]
        %v1818 = vld [vmem:[%s6 + $0x200] sm:$0xff]
        %v1819 = vld [vmem:[%s6 + $0x208] sm:$0xff]
        %v1820 = vld [vmem:[%s6 + $0x210] sm:$0xff]
        %v1821 = vld [vmem:[%s6 + $0x218] sm:$0xff]
        %v1822 = vld [vmem:[%s6 + $0x220] sm:$0xff]
        %v1823 = vld [vmem:[%s6 + $0x228] sm:$0xff]
        %v1824 = vld [vmem:[%s6 + $0x230] sm:$0xff]
        %v1825 = vld [vmem:[%s6 + $0x238] sm:$0xff]
        %v1826 = vld [vmem:[%s6 + $0x240] sm:$0xff]
        %v1827 = vld [vmem:[%s6 + $0x248] sm:$0xff]
        %v1828 = vld [vmem:[%s6 + $0x250] sm:$0xff]
        %v1829 = vld [vmem:[%s6 + $0x258] sm:$0xff]
        %v1830 = vld [vmem:[%s6 + $0x260] sm:$0xff]
        %v1831 = vld [vmem:[%s6 + $0x268] sm:$0xff]
        %v1832 = vld [vmem:[%s6 + $0x270] sm:$0xff]
        %v1833 = vld [vmem:[%s6 + $0x278] sm:$0xff]
        %v1834 = vld [vmem:[%s6 + $0x280] sm:$0xff]
        %v1835 = vld [vmem:[%s6 + $0x288] sm:$0xff]
        %v1836 = vld [vmem:[%s6 + $0x290] sm:$0xff]
        %v1837 = vld [vmem:[%s6 + $0x298] sm:$0xff]
        %v1838 = vld [vmem:[%s6 + $0x2a0] sm:$0xff]
        %v1839 = vld [vmem:[%s6 + $0x2a8] sm:$0xff]
        %v1840 = vld [vmem:[%s6 + $0x2b0] sm:$0xff]
        %v1841 = vld [vmem:[%s6 + $0x2b8] sm:$0xff]
        %v1842 = vld [vmem:[%s6 + $0x2c0] sm:$0xff]
        %v1843 = vld [vmem:[%s6 + $0x2c8] sm:$0xff]
        %v1844 = vld [vmem:[%s6 + $0x2d0] sm:$0xff]
        %v1845 = vld [vmem:[%s6 + $0x2d8] sm:$0xff]
        %v1846 = vld [vmem:[%s6 + $0x2e0] sm:$0xff]
        %v1847 = vld [vmem:[%s6 + $0x2e8] sm:$0xff]
        %v1848 = vld [vmem:[%s6 + $0x2f0] sm:$0xff]
        %v1849 = vld [vmem:[%s6 + $0x2f8] sm:$0xff]
        %v1851 = vperm.slane %v468, 0
        %v1852 = vperm.slane %v468, 1
        %v1853 = vperm.slane %v468, 2
        %v1854 = vperm.slane %v468, 3
        %v1855 = vperm.slane %v468, 4
        %v1856 = vperm.slane %v468, 5
        %v1959 = vunpack.c.l.b16 %v1754
        %v1960 = vunpack.c.h.b16 %v1754
        %v1961 = vunpack.c.l.b16 %v1755
        %v1962 = vunpack.c.h.b16 %v1755
        %v1963 = vunpack.c.l.b16 %v1756
        %v1964 = vunpack.c.h.b16 %v1756
        %v1965 = vunpack.c.l.b16 %v1757
        %v1966 = vunpack.c.h.b16 %v1757
        %v1967 = vunpack.c.l.b16 %v1758
        %v1968 = vunpack.c.h.b16 %v1758
        %v1969 = vunpack.c.l.b16 %v1759
        %v1970 = vunpack.c.h.b16 %v1759
        %v1971 = vunpack.c.l.b16 %v1760
        %v1972 = vunpack.c.h.b16 %v1760
        %v1973 = vunpack.c.l.b16 %v1761
        %v1974 = vunpack.c.h.b16 %v1761
        %v1975 = vunpack.c.l.b16 %v1762
        %v1976 = vunpack.c.h.b16 %v1762
        %v1977 = vunpack.c.l.b16 %v1763
        %v1978 = vunpack.c.h.b16 %v1763
        %v1979 = vunpack.c.l.b16 %v1764
        %v1980 = vunpack.c.h.b16 %v1764
        %v1981 = vunpack.c.l.b16 %v1765
        %v1982 = vunpack.c.h.b16 %v1765
        %v1983 = vunpack.c.l.b16 %v1766
        %v1984 = vunpack.c.h.b16 %v1766
        %v1985 = vunpack.c.l.b16 %v1767
        %v1986 = vunpack.c.h.b16 %v1767
        %v1987 = vunpack.c.l.b16 %v1768
        %v1988 = vunpack.c.h.b16 %v1768
        %v1989 = vunpack.c.l.b16 %v1769
        %v1990 = vunpack.c.h.b16 %v1769
        %v1991 = vunpack.c.l.b16 %v1770
        %v1992 = vunpack.c.h.b16 %v1770
        %v1993 = vunpack.c.l.b16 %v1771
        %v1994 = vunpack.c.h.b16 %v1771
        %v1995 = vunpack.c.l.b16 %v1772
        %v1996 = vunpack.c.h.b16 %v1772
        %v1997 = vunpack.c.l.b16 %v1773
        %v1998 = vunpack.c.h.b16 %v1773
        %v1999 = vunpack.c.l.b16 %v1774
        %v2000 = vunpack.c.h.b16 %v1774
        %v2001 = vunpack.c.l.b16 %v1775
        %v2002 = vunpack.c.h.b16 %v1775
        %v2003 = vunpack.c.l.b16 %v1776
        %v2004 = vunpack.c.h.b16 %v1776
        %v2005 = vunpack.c.l.b16 %v1777
        %v2006 = vunpack.c.h.b16 %v1777
        %v2007 = vunpack.c.l.b16 %v1778
        %v2008 = vunpack.c.h.b16 %v1778
        %v2009 = vunpack.c.l.b16 %v1779
        %v2010 = vunpack.c.h.b16 %v1779
        %v2011 = vunpack.c.l.b16 %v1780
        %v2012 = vunpack.c.h.b16 %v1780
        %v2013 = vunpack.c.l.b16 %v1781
        %v2014 = vunpack.c.h.b16 %v1781
        %v2015 = vunpack.c.l.b16 %v1782
        %v2016 = vunpack.c.h.b16 %v1782
        %v2017 = vunpack.c.l.b16 %v1783
        %v2018 = vunpack.c.h.b16 %v1783
        %v2019 = vunpack.c.l.b16 %v1784
        %v2020 = vunpack.c.h.b16 %v1784
        %v2021 = vunpack.c.l.b16 %v1785
        %v2022 = vunpack.c.h.b16 %v1785
        %v2023 = vunpack.c.l.b16 %v1786
        %v2024 = vunpack.c.h.b16 %v1786
        %v2025 = vunpack.c.l.b16 %v1787
        %v2026 = vunpack.c.h.b16 %v1787
        %v2027 = vunpack.c.l.b16 %v1788
        %v2028 = vunpack.c.h.b16 %v1788
        %v2029 = vunpack.c.l.b16 %v1789
        %v2030 = vunpack.c.h.b16 %v1789
        %v2031 = vunpack.c.l.b16 %v1790
        %v2032 = vunpack.c.h.b16 %v1790
        %v2033 = vunpack.c.l.b16 %v1791
        %v2034 = vunpack.c.h.b16 %v1791
        %v2035 = vunpack.c.l.b16 %v1792
        %v2036 = vunpack.c.h.b16 %v1792
        %v2037 = vunpack.c.l.b16 %v1793
        %v2038 = vunpack.c.h.b16 %v1793
        %v2039 = vunpack.c.l.b16 %v1794
        %v2040 = vunpack.c.h.b16 %v1794
        %v2041 = vunpack.c.l.b16 %v1795
        %v2042 = vunpack.c.h.b16 %v1795
        %v2043 = vunpack.c.l.b16 %v1796
        %v2044 = vunpack.c.h.b16 %v1796
        %v2045 = vunpack.c.l.b16 %v1797
        %v2046 = vunpack.c.h.b16 %v1797
        %v2047 = vunpack.c.l.b16 %v1798
        %v2048 = vunpack.c.h.b16 %v1798
        %v2049 = vunpack.c.l.b16 %v1799
        %v2050 = vunpack.c.h.b16 %v1799
        %v2051 = vunpack.c.l.b16 %v1800
        %v2052 = vunpack.c.h.b16 %v1800
        %v2053 = vunpack.c.l.b16 %v1801
        %v2054 = vunpack.c.h.b16 %v1801
        %v2055 = vunpack.c.l.b16 %v1802
        %v2056 = vunpack.c.h.b16 %v1802
        %v2057 = vunpack.c.l.b16 %v1803
        %v2058 = vunpack.c.h.b16 %v1803
        %v2059 = vunpack.c.l.b16 %v1804
        %v2060 = vunpack.c.h.b16 %v1804
        %v2061 = vunpack.c.l.b16 %v1805
        %v2062 = vunpack.c.h.b16 %v1805
        %v2063 = vunpack.c.l.b16 %v1806
        %v2064 = vunpack.c.h.b16 %v1806
        %v2065 = vunpack.c.l.b16 %v1807
        %v2066 = vunpack.c.h.b16 %v1807
        %v2067 = vunpack.c.l.b16 %v1808
        %v2068 = vunpack.c.h.b16 %v1808
        %v2069 = vunpack.c.l.b16 %v1809
        %v2070 = vunpack.c.h.b16 %v1809
        %v2071 = vunpack.c.l.b16 %v1810
        %v2072 = vunpack.c.h.b16 %v1810
        %v2073 = vunpack.c.l.b16 %v1811
        %v2074 = vunpack.c.h.b16 %v1811
        %v2075 = vunpack.c.l.b16 %v1812
        %v2076 = vunpack.c.h.b16 %v1812
        %v2077 = vunpack.c.l.b16 %v1813
        %v2078 = vunpack.c.h.b16 %v1813
        %v2079 = vunpack.c.l.b16 %v1814
        %v2080 = vunpack.c.h.b16 %v1814
        %v2081 = vunpack.c.l.b16 %v1815
        %v2082 = vunpack.c.h.b16 %v1815
        %v2083 = vunpack.c.l.b16 %v1816
        %v2084 = vunpack.c.h.b16 %v1816
        %v2085 = vunpack.c.l.b16 %v1817
        %v2086 = vunpack.c.h.b16 %v1817
        %v2087 = vunpack.c.l.b16 %v1818
        %v2088 = vunpack.c.h.b16 %v1818
        %v2089 = vunpack.c.l.b16 %v1819
        %v2090 = vunpack.c.h.b16 %v1819
        %v2091 = vunpack.c.l.b16 %v1820
        %v2092 = vunpack.c.h.b16 %v1820
        %v2093 = vunpack.c.l.b16 %v1821
        %v2094 = vunpack.c.h.b16 %v1821
        %v2095 = vunpack.c.l.b16 %v1822
        %v2096 = vunpack.c.h.b16 %v1822
        %v2097 = vunpack.c.l.b16 %v1823
        %v2098 = vunpack.c.h.b16 %v1823
        %v2099 = vunpack.c.l.b16 %v1824
        %v2100 = vunpack.c.h.b16 %v1824
        %v2101 = vunpack.c.l.b16 %v1825
        %v2102 = vunpack.c.h.b16 %v1825
        %v2103 = vunpack.c.l.b16 %v1826
        %v2104 = vunpack.c.h.b16 %v1826
        %v2105 = vunpack.c.l.b16 %v1827
        %v2106 = vunpack.c.h.b16 %v1827
        %v2107 = vunpack.c.l.b16 %v1828
        %v2108 = vunpack.c.h.b16 %v1828
        %v2109 = vunpack.c.l.b16 %v1829
        %v2110 = vunpack.c.h.b16 %v1829
        %v2111 = vunpack.c.l.b16 %v1830
        %v2112 = vunpack.c.h.b16 %v1830
        %v2113 = vunpack.c.l.b16 %v1831
        %v2114 = vunpack.c.h.b16 %v1831
        %v2115 = vunpack.c.l.b16 %v1832
        %v2116 = vunpack.c.h.b16 %v1832
        %v2117 = vunpack.c.l.b16 %v1833
        %v2118 = vunpack.c.h.b16 %v1833
        %v2119 = vunpack.c.l.b16 %v1834
        %v2120 = vunpack.c.h.b16 %v1834
        %v2121 = vunpack.c.l.b16 %v1835
        %v2122 = vunpack.c.h.b16 %v1835
        %v2123 = vunpack.c.l.b16 %v1836
        %v2124 = vunpack.c.h.b16 %v1836
        %v2125 = vunpack.c.l.b16 %v1837
        %v2126 = vunpack.c.h.b16 %v1837
        %v2127 = vunpack.c.l.b16 %v1838
        %v2128 = vunpack.c.h.b16 %v1838
        %v2129 = vunpack.c.l.b16 %v1839
        %v2130 = vunpack.c.h.b16 %v1839
        %v2131 = vunpack.c.l.b16 %v1840
        %v2132 = vunpack.c.h.b16 %v1840
        %v2133 = vunpack.c.l.b16 %v1841
        %v2134 = vunpack.c.h.b16 %v1841
        %v2135 = vunpack.c.l.b16 %v1842
        %v2136 = vunpack.c.h.b16 %v1842
        %v2137 = vunpack.c.l.b16 %v1843
        %v2138 = vunpack.c.h.b16 %v1843
        %v2139 = vunpack.c.l.b16 %v1844
        %v2140 = vunpack.c.h.b16 %v1844
        %v2141 = vunpack.c.l.b16 %v1845
        %v2142 = vunpack.c.h.b16 %v1845
        %v2143 = vunpack.c.l.b16 %v1846
        %v2144 = vunpack.c.h.b16 %v1846
        %v2145 = vunpack.c.l.b16 %v1847
        %v2146 = vunpack.c.h.b16 %v1847
        %v2147 = vunpack.c.l.b16 %v1848
        %v2148 = vunpack.c.h.b16 %v1848
        %v2149 = vunpack.c.l.b16 %v1849
        %v2150 = vunpack.c.h.b16 %v1849
        %v2151 = vpack.c.b16 %v1965, %v1959
        %v2152 = vpack.c.b16 %v1966, %v1960
        %v2153 = vpack.c.b16 %v1967, %v1961
        %v2154 = vpack.c.b16 %v1968, %v1962
        %v2155 = vpack.c.b16 %v1969, %v1963
        %v2156 = vpack.c.b16 %v1970, %v1964
        %v2157 = vpack.c.b16 %v1977, %v1971
        %v2158 = vpack.c.b16 %v1978, %v1972
        %v2159 = vpack.c.b16 %v1979, %v1973
        %v2160 = vpack.c.b16 %v1980, %v1974
        %v2161 = vpack.c.b16 %v1981, %v1975
        %v2162 = vpack.c.b16 %v1982, %v1976
        %v2163 = vpack.c.b16 %v1989, %v1983
        %v2164 = vpack.c.b16 %v1990, %v1984
        %v2165 = vpack.c.b16 %v1991, %v1985
        %v2166 = vpack.c.b16 %v1992, %v1986
        %v2167 = vpack.c.b16 %v1993, %v1987
        %v2168 = vpack.c.b16 %v1994, %v1988
        %v2169 = vpack.c.b16 %v2001, %v1995
        %v2170 = vpack.c.b16 %v2002, %v1996
        %v2171 = vpack.c.b16 %v2003, %v1997
        %v2172 = vpack.c.b16 %v2004, %v1998
        %v2173 = vpack.c.b16 %v2005, %v1999
        %v2174 = vpack.c.b16 %v2006, %v2000
        %v2175 = vpack.c.b16 %v2013, %v2007
        %v2176 = vpack.c.b16 %v2014, %v2008
        %v2177 = vpack.c.b16 %v2015, %v2009
        %v2178 = vpack.c.b16 %v2016, %v2010
        %v2179 = vpack.c.b16 %v2017, %v2011
        %v2180 = vpack.c.b16 %v2018, %v2012
        %v2181 = vpack.c.b16 %v2025, %v2019
        %v2182 = vpack.c.b16 %v2026, %v2020
        %v2183 = vpack.c.b16 %v2027, %v2021
        %v2184 = vpack.c.b16 %v2028, %v2022
        %v2185 = vpack.c.b16 %v2029, %v2023
        %v2186 = vpack.c.b16 %v2030, %v2024
        %v2187 = vpack.c.b16 %v2037, %v2031
        %v2188 = vpack.c.b16 %v2038, %v2032
        %v2189 = vpack.c.b16 %v2039, %v2033
        %v2190 = vpack.c.b16 %v2040, %v2034
        %v2191 = vpack.c.b16 %v2041, %v2035
        %v2192 = vpack.c.b16 %v2042, %v2036
        %v2193 = vpack.c.b16 %v2049, %v2043
        %v2194 = vpack.c.b16 %v2050, %v2044
        %v2195 = vpack.c.b16 %v2051, %v2045
        %v2196 = vpack.c.b16 %v2052, %v2046
        %v2197 = vpack.c.b16 %v2053, %v2047
        %v2198 = vpack.c.b16 %v2054, %v2048
        %v2199 = vpack.c.b16 %v2061, %v2055
        %v2200 = vpack.c.b16 %v2062, %v2056
        %v2201 = vpack.c.b16 %v2063, %v2057
        %v2202 = vpack.c.b16 %v2064, %v2058
        %v2203 = vpack.c.b16 %v2065, %v2059
        %v2204 = vpack.c.b16 %v2066, %v2060
        %v2205 = vpack.c.b16 %v2073, %v2067
        %v2206 = vpack.c.b16 %v2074, %v2068
        %v2207 = vpack.c.b16 %v2075, %v2069
        %v2208 = vpack.c.b16 %v2076, %v2070
        %v2209 = vpack.c.b16 %v2077, %v2071
        %v2210 = vpack.c.b16 %v2078, %v2072
        %v2211 = vpack.c.b16 %v2085, %v2079
        %v2212 = vpack.c.b16 %v2086, %v2080
        %v2213 = vpack.c.b16 %v2087, %v2081
        %v2214 = vpack.c.b16 %v2088, %v2082
        %v2215 = vpack.c.b16 %v2089, %v2083
        %v2216 = vpack.c.b16 %v2090, %v2084
        %v2217 = vpack.c.b16 %v2097, %v2091
        %v2218 = vpack.c.b16 %v2098, %v2092
        %v2219 = vpack.c.b16 %v2099, %v2093
        %v2220 = vpack.c.b16 %v2100, %v2094
        %v2221 = vpack.c.b16 %v2101, %v2095
        %v2222 = vpack.c.b16 %v2102, %v2096
        %v2223 = vpack.c.b16 %v2109, %v2103
        %v2224 = vpack.c.b16 %v2110, %v2104
        %v2225 = vpack.c.b16 %v2111, %v2105
        %v2226 = vpack.c.b16 %v2112, %v2106
        %v2227 = vpack.c.b16 %v2113, %v2107
        %v2228 = vpack.c.b16 %v2114, %v2108
        %v2229 = vpack.c.b16 %v2121, %v2115
        %v2230 = vpack.c.b16 %v2122, %v2116
        %v2231 = vpack.c.b16 %v2123, %v2117
        %v2232 = vpack.c.b16 %v2124, %v2118
        %v2233 = vpack.c.b16 %v2125, %v2119
        %v2234 = vpack.c.b16 %v2126, %v2120
        %v2235 = vpack.c.b16 %v2133, %v2127
        %v2236 = vpack.c.b16 %v2134, %v2128
        %v2237 = vpack.c.b16 %v2135, %v2129
        %v2238 = vpack.c.b16 %v2136, %v2130
        %v2239 = vpack.c.b16 %v2137, %v2131
        %v2240 = vpack.c.b16 %v2138, %v2132
        %v2241 = vpack.c.b16 %v2145, %v2139
        %v2242 = vpack.c.b16 %v2146, %v2140
        %v2243 = vpack.c.b16 %v2147, %v2141
        %v2244 = vpack.c.b16 %v2148, %v2142
        %v2245 = vpack.c.b16 %v2149, %v2143
        %v2246 = vpack.c.b16 %v2150, %v2144
        %2343 = vmatpush.bf16.msra.mxu0 %v2193
        %2344 = vmatpush.bf16.msra.mxu0 %v2187
        %2345 = vmatpush.bf16.msra.mxu0 %v2181
        %2346 = vmatpush.bf16.msra.mxu0 %v2175
        %2347 = vmatpush.bf16.msra.mxu0 %v2169
        %2348 = vmatpush.bf16.msra.mxu0 %v2163
        %2349 = vmatpush.bf16.msra.mxu0 %v2157
        %2350 = vmatpush.bf16.msra.mxu0 %v2151
        %2351 = vmatmul.bf16.gmra.mxu0 %v1697
        %v2352 = vpop.f32.mrf.mxu0
        %v2353 = vadd.f32 %v1851, %v2352
        %v2354 = vpop.f32.mrf.mxu0
        %2355 = vdwg.mxu0
        %2356 = vmatpush.bf16.msra.mxu0 %v2241
        %2357 = vmatpush.bf16.msra.mxu0 %v2235
        %2358 = vmatpush.bf16.msra.mxu0 %v2229
        %2359 = vmatpush.bf16.msra.mxu0 %v2223
        %2360 = vmatpush.bf16.msra.mxu0 %v2217
        %2361 = vmatpush.bf16.msra.mxu0 %v2211
        %2362 = vmatpush.bf16.msra.mxu0 %v2205
        %2363 = vmatpush.bf16.msra.mxu0 %v2199
        %2364 = vmatmul.bf16.gmra.mxu0 %v1753
        %v2365 = vpop.f32.mrf.mxu0
        %v2366 = vadd.f32 %v2353, %v2365
        %v2367 = vpop.f32.mrf.mxu0
        %2368 = vdwg.mxu0
        %2369 = vmatpush.bf16.msra.mxu0 %v2194
        %2370 = vmatpush.bf16.msra.mxu0 %v2188
        %2371 = vmatpush.bf16.msra.mxu0 %v2182
        %2372 = vmatpush.bf16.msra.mxu0 %v2176
        %2373 = vmatpush.bf16.msra.mxu0 %v2170
        %2374 = vmatpush.bf16.msra.mxu0 %v2164
        %2375 = vmatpush.bf16.msra.mxu0 %v2158
        %2376 = vmatpush.bf16.msra.mxu0 %v2152
        %2377 = vmatmul.bf16.gmra.mxu0 %v1697
        %v2378 = vpop.f32.mrf.mxu0
        %v2379 = vadd.f32 %v1852, %v2378
        %v2380 = vpop.f32.mrf.mxu0
        %2381 = vdwg.mxu0
        %2382 = vmatpush.bf16.msra.mxu0 %v2242
        %2383 = vmatpush.bf16.msra.mxu0 %v2236
        %2384 = vmatpush.bf16.msra.mxu0 %v2230
        %2385 = vmatpush.bf16.msra.mxu0 %v2224
        %2386 = vmatpush.bf16.msra.mxu0 %v2218
        %2387 = vmatpush.bf16.msra.mxu0 %v2212
        %2388 = vmatpush.bf16.msra.mxu0 %v2206
        %2389 = vmatpush.bf16.msra.mxu0 %v2200
        %2390 = vmatmul.bf16.gmra.mxu0 %v1753
        %v2391 = vpop.f32.mrf.mxu0
        %v2392 = vadd.f32 %v2379, %v2391
        %v2393 = vpop.f32.mrf.mxu0
        %2394 = vdwg.mxu0
        %2395 = vmatpush.bf16.msra.mxu0 %v2195
        %2396 = vmatpush.bf16.msra.mxu0 %v2189
        %2397 = vmatpush.bf16.msra.mxu0 %v2183
        %2398 = vmatpush.bf16.msra.mxu0 %v2177
        %2399 = vmatpush.bf16.msra.mxu0 %v2171
        %2400 = vmatpush.bf16.msra.mxu0 %v2165
        %2401 = vmatpush.bf16.msra.mxu0 %v2159
        %2402 = vmatpush.bf16.msra.mxu0 %v2153
        %2403 = vmatmul.bf16.gmra.mxu0 %v1697
        %v2404 = vpop.f32.mrf.mxu0
        %v2405 = vadd.f32 %v1853, %v2404
        %v2406 = vpop.f32.mrf.mxu0
        %2407 = vdwg.mxu0
        %2408 = vmatpush.bf16.msra.mxu0 %v2243
        %2409 = vmatpush.bf16.msra.mxu0 %v2237
        %2410 = vmatpush.bf16.msra.mxu0 %v2231
        %2411 = vmatpush.bf16.msra.mxu0 %v2225
        %2412 = vmatpush.bf16.msra.mxu0 %v2219
        %2413 = vmatpush.bf16.msra.mxu0 %v2213
        %2414 = vmatpush.bf16.msra.mxu0 %v2207
        %2415 = vmatpush.bf16.msra.mxu0 %v2201
        %2416 = vmatmul.bf16.gmra.mxu0 %v1753
        %v2417 = vpop.f32.mrf.mxu0
        %v2418 = vadd.f32 %v2405, %v2417
        %v2419 = vpop.f32.mrf.mxu0
        %2420 = vdwg.mxu0
        %2421 = vmatpush.bf16.msra.mxu0 %v2196
        %2422 = vmatpush.bf16.msra.mxu0 %v2190
        %2423 = vmatpush.bf16.msra.mxu0 %v2184
        %2424 = vmatpush.bf16.msra.mxu0 %v2178
        %2425 = vmatpush.bf16.msra.mxu0 %v2172
        %2426 = vmatpush.bf16.msra.mxu0 %v2166
        %2427 = vmatpush.bf16.msra.mxu0 %v2160
        %2428 = vmatpush.bf16.msra.mxu0 %v2154
        %2429 = vmatmul.bf16.gmra.mxu0 %v1697
        %v2430 = vpop.f32.mrf.mxu0
        %v2431 = vadd.f32 %v1854, %v2430
        %v2432 = vpop.f32.mrf.mxu0
        %2433 = vdwg.mxu0
        %2434 = vmatpush.bf16.msra.mxu0 %v2244
        %2435 = vmatpush.bf16.msra.mxu0 %v2238
        %2436 = vmatpush.bf16.msra.mxu0 %v2232
        %2437 = vmatpush.bf16.msra.mxu0 %v2226
        %2438 = vmatpush.bf16.msra.mxu0 %v2220
        %2439 = vmatpush.bf16.msra.mxu0 %v2214
        %2440 = vmatpush.bf16.msra.mxu0 %v2208
        %2441 = vmatpush.bf16.msra.mxu0 %v2202
        %2442 = vmatmul.bf16.gmra.mxu0 %v1753
        %v2443 = vpop.f32.mrf.mxu0
        %v2444 = vadd.f32 %v2431, %v2443
        %v2445 = vpop.f32.mrf.mxu0
        %2446 = vdwg.mxu0
        %2447 = vmatpush.bf16.msra.mxu0 %v2197
        %2448 = vmatpush.bf16.msra.mxu0 %v2191
        %2449 = vmatpush.bf16.msra.mxu0 %v2185
        %2450 = vmatpush.bf16.msra.mxu0 %v2179
        %2451 = vmatpush.bf16.msra.mxu0 %v2173
        %2452 = vmatpush.bf16.msra.mxu0 %v2167
        %2453 = vmatpush.bf16.msra.mxu0 %v2161
        %2454 = vmatpush.bf16.msra.mxu0 %v2155
        %2455 = vmatmul.bf16.gmra.mxu0 %v1697
        %v2456 = vpop.f32.mrf.mxu0
        %v2457 = vadd.f32 %v1855, %v2456
        %v2458 = vpop.f32.mrf.mxu0
        %2459 = vdwg.mxu0
        %2460 = vmatpush.bf16.msra.mxu0 %v2245
        %2461 = vmatpush.bf16.msra.mxu0 %v2239
        %2462 = vmatpush.bf16.msra.mxu0 %v2233
        %2463 = vmatpush.bf16.msra.mxu0 %v2227
        %2464 = vmatpush.bf16.msra.mxu0 %v2221
        %2465 = vmatpush.bf16.msra.mxu0 %v2215
        %2466 = vmatpush.bf16.msra.mxu0 %v2209
        %2467 = vmatpush.bf16.msra.mxu0 %v2203
        %2468 = vmatmul.bf16.gmra.mxu0 %v1753
        %v2469 = vpop.f32.mrf.mxu0
        %v2470 = vadd.f32 %v2457, %v2469
        %v2471 = vpop.f32.mrf.mxu0
        %2472 = vdwg.mxu0
        %2473 = vmatpush.bf16.msra.mxu0 %v2198
        %2474 = vmatpush.bf16.msra.mxu0 %v2192
        %2475 = vmatpush.bf16.msra.mxu0 %v2186
        %2476 = vmatpush.bf16.msra.mxu0 %v2180
        %2477 = vmatpush.bf16.msra.mxu0 %v2174
        %2478 = vmatpush.bf16.msra.mxu0 %v2168
        %2479 = vmatpush.bf16.msra.mxu0 %v2162
        %2480 = vmatpush.bf16.msra.mxu0 %v2156
        %2481 = vmatmul.bf16.gmra.mxu0 %v1697
        %v2482 = vpop.f32.mrf.mxu0
        %v2483 = vadd.f32 %v1856, %v2482
        %v2484 = vpop.f32.mrf.mxu0
        %2485 = vdwg.mxu0
        %2486 = vmatpush.bf16.msra.mxu0 %v2246
        %2487 = vmatpush.bf16.msra.mxu0 %v2240
        %2488 = vmatpush.bf16.msra.mxu0 %v2234
        %2489 = vmatpush.bf16.msra.mxu0 %v2228
        %2490 = vmatpush.bf16.msra.mxu0 %v2222
        %2491 = vmatpush.bf16.msra.mxu0 %v2216
        %2492 = vmatpush.bf16.msra.mxu0 %v2210
        %2493 = vmatpush.bf16.msra.mxu0 %v2204
        %2494 = vmatmul.bf16.gmra.mxu0 %v1753
        %v2495 = vpop.f32.mrf.mxu0
        %v2496 = vadd.f32 %v2483, %v2495
        %v2497 = vpop.f32.mrf.mxu0
        %2498 = vdwg.mxu0
        %v2499 = vpack.c.bf16 %v2366, %v2366
        %v2500 = vpack.c.bf16 %v2392, %v2392
        %v2501 = vpack.c.bf16 %v2418, %v2418
        %v2502 = vpack.c.bf16 %v2444, %v2444
        %v2503 = vpack.c.bf16 %v2470, %v2470
        %v2504 = vpack.c.bf16 %v2496, %v2496
        %v2505 = vld [vmem:[#allocation2 + $0x4] sm:$0xff]
        %v2506 = vld [vmem:[#allocation2 + $0x10] sm:$0xff]
        %v2507 = vld [vmem:[#allocation2 + $0x1c] sm:$0xff]
        %v2508 = vld [vmem:[#allocation2 + $0x28] sm:$0xff]
        %v2509 = vld [vmem:[#allocation2 + $0x34] sm:$0xff]
        %v2510 = vld [vmem:[#allocation2 + $0x40] sm:$0xff]
        %v2511 = vld [vmem:[#allocation2 + $0x4c] sm:$0xff]
        %v2512 = vld [vmem:[#allocation2 + $0x58] sm:$0xff]
        %v2513 = vld [vmem:[#allocation2 + $0x64] sm:$0xff]
        %v2514 = vld [vmem:[#allocation2 + $0x70] sm:$0xff]
        %v2515 = vld [vmem:[#allocation2 + $0x7c] sm:$0xff]
        %v2516 = vld [vmem:[#allocation2 + $0x88] sm:$0xff]
        %v2517 = vld [vmem:[#allocation2 + $0x94] sm:$0xff]
        %v2518 = vld [vmem:[#allocation2 + $0xa0] sm:$0xff]
        %v2519 = vld [vmem:[#allocation2 + $0xac] sm:$0xff]
        %v2520 = vld [vmem:[#allocation2 + $0xb8] sm:$0xff]
        %v2521 = vld [vmem:[#allocation2 + $0xc4] sm:$0xff]
        %v2522 = vld [vmem:[#allocation2 + $0xd0] sm:$0xff]
        %v2523 = vld [vmem:[#allocation2 + $0xdc] sm:$0xff]
        %v2524 = vld [vmem:[#allocation2 + $0xe8] sm:$0xff]
        %v2525 = vld [vmem:[#allocation2 + $0xf4] sm:$0xff]
        %v2526 = vld [vmem:[#allocation2 + $0x100] sm:$0xff]
        %v2527 = vld [vmem:[#allocation2 + $0x10c] sm:$0xff]
        %v2528 = vld [vmem:[#allocation2 + $0x118] sm:$0xff]
        %v2529 = vld [vmem:[#allocation2 + $0x124] sm:$0xff]
        %v2530 = vld [vmem:[#allocation2 + $0x130] sm:$0xff]
        %v2531 = vld [vmem:[#allocation2 + $0x13c] sm:$0xff]
        %v2532 = vld [vmem:[#allocation2 + $0x148] sm:$0xff]
        %v2533 = vld [vmem:[#allocation2 + $0x154] sm:$0xff]
        %v2534 = vld [vmem:[#allocation2 + $0x160] sm:$0xff]
        %v2535 = vld [vmem:[#allocation2 + $0x16c] sm:$0xff]
        %v2536 = vld [vmem:[#allocation2 + $0x178] sm:$0xff]
        %v2537 = vld [vmem:[#allocation2 + $0x184] sm:$0xff]
        %v2538 = vld [vmem:[#allocation2 + $0x190] sm:$0xff]
        %v2539 = vld [vmem:[#allocation2 + $0x19c] sm:$0xff]
        %v2540 = vld [vmem:[#allocation2 + $0x1a8] sm:$0xff]
        %v2541 = vld [vmem:[#allocation2 + $0x1b4] sm:$0xff]
        %v2542 = vld [vmem:[#allocation2 + $0x1c0] sm:$0xff]
        %v2543 = vld [vmem:[#allocation2 + $0x1cc] sm:$0xff]
        %v2544 = vld [vmem:[#allocation2 + $0x1d8] sm:$0xff]
        %v2545 = vld [vmem:[#allocation2 + $0x1e4] sm:$0xff]
        %v2546 = vld [vmem:[#allocation2 + $0x1f0] sm:$0xff]
        %v2547 = vld [vmem:[#allocation2 + $0x1fc] sm:$0xff]
        %v2548 = vld [vmem:[#allocation2 + $0x208] sm:$0xff]
        %v2549 = vld [vmem:[#allocation2 + $0x214] sm:$0xff]
        %v2550 = vld [vmem:[#allocation2 + $0x220] sm:$0xff]
        %v2551 = vld [vmem:[#allocation2 + $0x22c] sm:$0xff]
        %v2552 = vld [vmem:[#allocation2 + $0x238] sm:$0xff]
        %v2553 = vld [vmem:[#allocation2 + $0x244] sm:$0xff]
        %v2554 = vld [vmem:[#allocation2 + $0x250] sm:$0xff]
        %v2555 = vld [vmem:[#allocation2 + $0x25c] sm:$0xff]
        %v2556 = vld [vmem:[#allocation2 + $0x268] sm:$0xff]
        %v2557 = vld [vmem:[#allocation2 + $0x274] sm:$0xff]
        %v2558 = vld [vmem:[#allocation2 + $0x280] sm:$0xff]
        %v2559 = vld [vmem:[#allocation2 + $0x28c] sm:$0xff]
        %v2560 = vld [vmem:[#allocation2 + $0x298] sm:$0xff]
        %v2561 = vld [vmem:[#allocation2 + $0x2a4] sm:$0xff]
        %v2562 = vld [vmem:[#allocation2 + $0x2b0] sm:$0xff]
        %v2563 = vld [vmem:[#allocation2 + $0x2bc] sm:$0xff]
        %v2564 = vld [vmem:[#allocation2 + $0x2c8] sm:$0xff]
        %v2565 = vld [vmem:[#allocation2 + $0x2d4] sm:$0xff]
        %v2566 = vld [vmem:[#allocation2 + $0x2e0] sm:$0xff]
        %v2567 = vld [vmem:[#allocation2 + $0x2ec] sm:$0xff]
        %v2568 = vld [vmem:[#allocation2 + $0x2f8] sm:$0xff]
        %v2569 = vld [vmem:[#allocation2 + $0x304] sm:$0xff]
        %v2570 = vld [vmem:[#allocation2 + $0x310] sm:$0xff]
        %v2571 = vld [vmem:[#allocation2 + $0x31c] sm:$0xff]
        %v2572 = vld [vmem:[#allocation2 + $0x328] sm:$0xff]
        %v2573 = vld [vmem:[#allocation2 + $0x334] sm:$0xff]
        %v2574 = vld [vmem:[#allocation2 + $0x340] sm:$0xff]
        %v2575 = vld [vmem:[#allocation2 + $0x34c] sm:$0xff]
        %v2576 = vld [vmem:[#allocation2 + $0x358] sm:$0xff]
        %v2577 = vld [vmem:[#allocation2 + $0x364] sm:$0xff]
        %v2578 = vld [vmem:[#allocation2 + $0x370] sm:$0xff]
        %v2579 = vld [vmem:[#allocation2 + $0x37c] sm:$0xff]
        %v2580 = vld [vmem:[#allocation2 + $0x388] sm:$0xff]
        %v2581 = vld [vmem:[#allocation2 + $0x394] sm:$0xff]
        %v2582 = vld [vmem:[#allocation2 + $0x3a0] sm:$0xff]
        %v2583 = vld [vmem:[#allocation2 + $0x3ac] sm:$0xff]
        %v2584 = vld [vmem:[#allocation2 + $0x3b8] sm:$0xff]
        %v2585 = vld [vmem:[#allocation2 + $0x3c4] sm:$0xff]
        %v2586 = vld [vmem:[#allocation2 + $0x3d0] sm:$0xff]
        %v2587 = vld [vmem:[#allocation2 + $0x3dc] sm:$0xff]
        %v2588 = vld [vmem:[#allocation2 + $0x3e8] sm:$0xff]
        %v2589 = vld [vmem:[#allocation2 + $0x3f4] sm:$0xff]
        %v2590 = vld [vmem:[#allocation2 + $0x400] sm:$0xff]
        %v2591 = vld [vmem:[#allocation2 + $0x40c] sm:$0xff]
        %v2592 = vld [vmem:[#allocation2 + $0x418] sm:$0xff]
        %v2593 = vld [vmem:[#allocation2 + $0x424] sm:$0xff]
        %v2594 = vld [vmem:[#allocation2 + $0x430] sm:$0xff]
        %v2595 = vld [vmem:[#allocation2 + $0x43c] sm:$0xff]
        %v2596 = vld [vmem:[#allocation2 + $0x448] sm:$0xff]
        %v2597 = vld [vmem:[#allocation2 + $0x454] sm:$0xff]
        %v2598 = vld [vmem:[#allocation2 + $0x460] sm:$0xff]
        %v2599 = vld [vmem:[#allocation2 + $0x46c] sm:$0xff]
        %v2600 = vld [vmem:[#allocation2 + $0x478] sm:$0xff]
        %v2601 = vld [vmem:[%s5 + $0x1] sm:$0x3]
        %v2603 = vperm.slane %v2601, 0
        %v2604 = vperm.slane %v2601, 1
        %v2703 = vunpack.c.l.b16 %v2505
        %v2704 = vunpack.c.h.b16 %v2505
        %v2705 = vunpack.c.l.b16 %v2506
        %v2706 = vunpack.c.h.b16 %v2506
        %v2707 = vunpack.c.l.b16 %v2507
        %v2708 = vunpack.c.h.b16 %v2507
        %v2709 = vunpack.c.l.b16 %v2508
        %v2710 = vunpack.c.h.b16 %v2508
        %v2711 = vunpack.c.l.b16 %v2509
        %v2712 = vunpack.c.h.b16 %v2509
        %v2713 = vunpack.c.l.b16 %v2510
        %v2714 = vunpack.c.h.b16 %v2510
        %v2715 = vunpack.c.l.b16 %v2511
        %v2716 = vunpack.c.h.b16 %v2511
        %v2717 = vunpack.c.l.b16 %v2512
        %v2718 = vunpack.c.h.b16 %v2512
        %v2719 = vunpack.c.l.b16 %v2513
        %v2720 = vunpack.c.h.b16 %v2513
        %v2721 = vunpack.c.l.b16 %v2514
        %v2722 = vunpack.c.h.b16 %v2514
        %v2723 = vunpack.c.l.b16 %v2515
        %v2724 = vunpack.c.h.b16 %v2515
        %v2725 = vunpack.c.l.b16 %v2516
        %v2726 = vunpack.c.h.b16 %v2516
        %v2727 = vunpack.c.l.b16 %v2517
        %v2728 = vunpack.c.h.b16 %v2517
        %v2729 = vunpack.c.l.b16 %v2518
        %v2730 = vunpack.c.h.b16 %v2518
        %v2731 = vunpack.c.l.b16 %v2519
        %v2732 = vunpack.c.h.b16 %v2519
        %v2733 = vunpack.c.l.b16 %v2520
        %v2734 = vunpack.c.h.b16 %v2520
        %v2735 = vunpack.c.l.b16 %v2521
        %v2736 = vunpack.c.h.b16 %v2521
        %v2737 = vunpack.c.l.b16 %v2522
        %v2738 = vunpack.c.h.b16 %v2522
        %v2739 = vunpack.c.l.b16 %v2523
        %v2740 = vunpack.c.h.b16 %v2523
        %v2741 = vunpack.c.l.b16 %v2524
        %v2742 = vunpack.c.h.b16 %v2524
        %v2743 = vunpack.c.l.b16 %v2525
        %v2744 = vunpack.c.h.b16 %v2525
        %v2745 = vunpack.c.l.b16 %v2526
        %v2746 = vunpack.c.h.b16 %v2526
        %v2747 = vunpack.c.l.b16 %v2527
        %v2748 = vunpack.c.h.b16 %v2527
        %v2749 = vunpack.c.l.b16 %v2528
        %v2750 = vunpack.c.h.b16 %v2528
        %v2751 = vunpack.c.l.b16 %v2529
        %v2752 = vunpack.c.h.b16 %v2529
        %v2753 = vunpack.c.l.b16 %v2530
        %v2754 = vunpack.c.h.b16 %v2530
        %v2755 = vunpack.c.l.b16 %v2531
        %v2756 = vunpack.c.h.b16 %v2531
        %v2757 = vunpack.c.l.b16 %v2532
        %v2758 = vunpack.c.h.b16 %v2532
        %v2759 = vunpack.c.l.b16 %v2533
        %v2760 = vunpack.c.h.b16 %v2533
        %v2761 = vunpack.c.l.b16 %v2534
        %v2762 = vunpack.c.h.b16 %v2534
        %v2763 = vunpack.c.l.b16 %v2535
        %v2764 = vunpack.c.h.b16 %v2535
        %v2765 = vunpack.c.l.b16 %v2536
        %v2766 = vunpack.c.h.b16 %v2536
        %v2767 = vunpack.c.l.b16 %v2537
        %v2768 = vunpack.c.h.b16 %v2537
        %v2769 = vunpack.c.l.b16 %v2538
        %v2770 = vunpack.c.h.b16 %v2538
        %v2771 = vunpack.c.l.b16 %v2539
        %v2772 = vunpack.c.h.b16 %v2539
        %v2773 = vunpack.c.l.b16 %v2540
        %v2774 = vunpack.c.h.b16 %v2540
        %v2775 = vunpack.c.l.b16 %v2541
        %v2776 = vunpack.c.h.b16 %v2541
        %v2777 = vunpack.c.l.b16 %v2542
        %v2778 = vunpack.c.h.b16 %v2542
        %v2779 = vunpack.c.l.b16 %v2543
        %v2780 = vunpack.c.h.b16 %v2543
        %v2781 = vunpack.c.l.b16 %v2544
        %v2782 = vunpack.c.h.b16 %v2544
        %v2783 = vunpack.c.l.b16 %v2545
        %v2784 = vunpack.c.h.b16 %v2545
        %v2785 = vunpack.c.l.b16 %v2546
        %v2786 = vunpack.c.h.b16 %v2546
        %v2787 = vunpack.c.l.b16 %v2547
        %v2788 = vunpack.c.h.b16 %v2547
        %v2789 = vunpack.c.l.b16 %v2548
        %v2790 = vunpack.c.h.b16 %v2548
        %v2791 = vunpack.c.l.b16 %v2549
        %v2792 = vunpack.c.h.b16 %v2549
        %v2793 = vunpack.c.l.b16 %v2550
        %v2794 = vunpack.c.h.b16 %v2550
        %v2795 = vunpack.c.l.b16 %v2551
        %v2796 = vunpack.c.h.b16 %v2551
        %v2797 = vunpack.c.l.b16 %v2552
        %v2798 = vunpack.c.h.b16 %v2552
        %v2799 = vunpack.c.l.b16 %v2553
        %v2800 = vunpack.c.h.b16 %v2553
        %v2801 = vunpack.c.l.b16 %v2554
        %v2802 = vunpack.c.h.b16 %v2554
        %v2803 = vunpack.c.l.b16 %v2555
        %v2804 = vunpack.c.h.b16 %v2555
        %v2805 = vunpack.c.l.b16 %v2556
        %v2806 = vunpack.c.h.b16 %v2556
        %v2807 = vunpack.c.l.b16 %v2557
        %v2808 = vunpack.c.h.b16 %v2557
        %v2809 = vunpack.c.l.b16 %v2558
        %v2810 = vunpack.c.h.b16 %v2558
        %v2811 = vunpack.c.l.b16 %v2559
        %v2812 = vunpack.c.h.b16 %v2559
        %v2813 = vunpack.c.l.b16 %v2560
        %v2814 = vunpack.c.h.b16 %v2560
        %v2815 = vunpack.c.l.b16 %v2561
        %v2816 = vunpack.c.h.b16 %v2561
        %v2817 = vunpack.c.l.b16 %v2562
        %v2818 = vunpack.c.h.b16 %v2562
        %v2819 = vunpack.c.l.b16 %v2563
        %v2820 = vunpack.c.h.b16 %v2563
        %v2821 = vunpack.c.l.b16 %v2564
        %v2822 = vunpack.c.h.b16 %v2564
        %v2823 = vunpack.c.l.b16 %v2565
        %v2824 = vunpack.c.h.b16 %v2565
        %v2825 = vunpack.c.l.b16 %v2566
        %v2826 = vunpack.c.h.b16 %v2566
        %v2827 = vunpack.c.l.b16 %v2567
        %v2828 = vunpack.c.h.b16 %v2567
        %v2829 = vunpack.c.l.b16 %v2568
        %v2830 = vunpack.c.h.b16 %v2568
        %v2831 = vunpack.c.l.b16 %v2569
        %v2832 = vunpack.c.h.b16 %v2569
        %v2833 = vunpack.c.l.b16 %v2570
        %v2834 = vunpack.c.h.b16 %v2570
        %v2835 = vunpack.c.l.b16 %v2571
        %v2836 = vunpack.c.h.b16 %v2571
        %v2837 = vunpack.c.l.b16 %v2572
        %v2838 = vunpack.c.h.b16 %v2572
        %v2839 = vunpack.c.l.b16 %v2573
        %v2840 = vunpack.c.h.b16 %v2573
        %v2841 = vunpack.c.l.b16 %v2574
        %v2842 = vunpack.c.h.b16 %v2574
        %v2843 = vunpack.c.l.b16 %v2575
        %v2844 = vunpack.c.h.b16 %v2575
        %v2845 = vunpack.c.l.b16 %v2576
        %v2846 = vunpack.c.h.b16 %v2576
        %v2847 = vunpack.c.l.b16 %v2577
        %v2848 = vunpack.c.h.b16 %v2577
        %v2849 = vunpack.c.l.b16 %v2578
        %v2850 = vunpack.c.h.b16 %v2578
        %v2851 = vunpack.c.l.b16 %v2579
        %v2852 = vunpack.c.h.b16 %v2579
        %v2853 = vunpack.c.l.b16 %v2580
        %v2854 = vunpack.c.h.b16 %v2580
        %v2855 = vunpack.c.l.b16 %v2581
        %v2856 = vunpack.c.h.b16 %v2581
        %v2857 = vunpack.c.l.b16 %v2582
        %v2858 = vunpack.c.h.b16 %v2582
        %v2859 = vunpack.c.l.b16 %v2583
        %v2860 = vunpack.c.h.b16 %v2583
        %v2861 = vunpack.c.l.b16 %v2584
        %v2862 = vunpack.c.h.b16 %v2584
        %v2863 = vunpack.c.l.b16 %v2585
        %v2864 = vunpack.c.h.b16 %v2585
        %v2865 = vunpack.c.l.b16 %v2586
        %v2866 = vunpack.c.h.b16 %v2586
        %v2867 = vunpack.c.l.b16 %v2587
        %v2868 = vunpack.c.h.b16 %v2587
        %v2869 = vunpack.c.l.b16 %v2588
        %v2870 = vunpack.c.h.b16 %v2588
        %v2871 = vunpack.c.l.b16 %v2589
        %v2872 = vunpack.c.h.b16 %v2589
        %v2873 = vunpack.c.l.b16 %v2590
        %v2874 = vunpack.c.h.b16 %v2590
        %v2875 = vunpack.c.l.b16 %v2591
        %v2876 = vunpack.c.h.b16 %v2591
        %v2877 = vunpack.c.l.b16 %v2592
        %v2878 = vunpack.c.h.b16 %v2592
        %v2879 = vunpack.c.l.b16 %v2593
        %v2880 = vunpack.c.h.b16 %v2593
        %v2881 = vunpack.c.l.b16 %v2594
        %v2882 = vunpack.c.h.b16 %v2594
        %v2883 = vunpack.c.l.b16 %v2595
        %v2884 = vunpack.c.h.b16 %v2595
        %v2885 = vunpack.c.l.b16 %v2596
        %v2886 = vunpack.c.h.b16 %v2596
        %v2887 = vunpack.c.l.b16 %v2597
        %v2888 = vunpack.c.h.b16 %v2597
        %v2889 = vunpack.c.l.b16 %v2598
        %v2890 = vunpack.c.h.b16 %v2598
        %v2891 = vunpack.c.l.b16 %v2599
        %v2892 = vunpack.c.h.b16 %v2599
        %v2893 = vunpack.c.l.b16 %v2600
        %v2894 = vunpack.c.h.b16 %v2600
        %v2895 = vpack.c.b16 %v2705, %v2703
        %v2896 = vpack.c.b16 %v2706, %v2704
        %v2897 = vpack.c.b16 %v2709, %v2707
        %v2898 = vpack.c.b16 %v2710, %v2708
        %v2899 = vpack.c.b16 %v2713, %v2711
        %v2900 = vpack.c.b16 %v2714, %v2712
        %v2901 = vpack.c.b16 %v2717, %v2715
        %v2902 = vpack.c.b16 %v2718, %v2716
        %v2903 = vpack.c.b16 %v2721, %v2719
        %v2904 = vpack.c.b16 %v2722, %v2720
        %v2905 = vpack.c.b16 %v2725, %v2723
        %v2906 = vpack.c.b16 %v2726, %v2724
        %v2907 = vpack.c.b16 %v2729, %v2727
        %v2908 = vpack.c.b16 %v2730, %v2728
        %v2909 = vpack.c.b16 %v2733, %v2731
        %v2910 = vpack.c.b16 %v2734, %v2732
        %v2911 = vpack.c.b16 %v2737, %v2735
        %v2912 = vpack.c.b16 %v2738, %v2736
        %v2913 = vpack.c.b16 %v2741, %v2739
        %v2914 = vpack.c.b16 %v2742, %v2740
        %v2915 = vpack.c.b16 %v2745, %v2743
        %v2916 = vpack.c.b16 %v2746, %v2744
        %v2917 = vpack.c.b16 %v2749, %v2747
        %v2918 = vpack.c.b16 %v2750, %v2748
        %v2919 = vpack.c.b16 %v2753, %v2751
        %v2920 = vpack.c.b16 %v2754, %v2752
        %v2921 = vpack.c.b16 %v2757, %v2755
        %v2922 = vpack.c.b16 %v2758, %v2756
        %v2923 = vpack.c.b16 %v2761, %v2759
        %v2924 = vpack.c.b16 %v2762, %v2760
        %v2925 = vpack.c.b16 %v2765, %v2763
        %v2926 = vpack.c.b16 %v2766, %v2764
        %v2927 = vpack.c.b16 %v2769, %v2767
        %v2928 = vpack.c.b16 %v2770, %v2768
        %v2929 = vpack.c.b16 %v2773, %v2771
        %v2930 = vpack.c.b16 %v2774, %v2772
        %v2931 = vpack.c.b16 %v2777, %v2775
        %v2932 = vpack.c.b16 %v2778, %v2776
        %v2933 = vpack.c.b16 %v2781, %v2779
        %v2934 = vpack.c.b16 %v2782, %v2780
        %v2935 = vpack.c.b16 %v2785, %v2783
        %v2936 = vpack.c.b16 %v2786, %v2784
        %v2937 = vpack.c.b16 %v2789, %v2787
        %v2938 = vpack.c.b16 %v2790, %v2788
        %v2939 = vpack.c.b16 %v2793, %v2791
        %v2940 = vpack.c.b16 %v2794, %v2792
        %v2941 = vpack.c.b16 %v2797, %v2795
        %v2942 = vpack.c.b16 %v2798, %v2796
        %v2943 = vpack.c.b16 %v2801, %v2799
        %v2944 = vpack.c.b16 %v2802, %v2800
        %v2945 = vpack.c.b16 %v2805, %v2803
        %v2946 = vpack.c.b16 %v2806, %v2804
        %v2947 = vpack.c.b16 %v2809, %v2807
        %v2948 = vpack.c.b16 %v2810, %v2808
        %v2949 = vpack.c.b16 %v2813, %v2811
        %v2950 = vpack.c.b16 %v2814, %v2812
        %v2951 = vpack.c.b16 %v2817, %v2815
        %v2952 = vpack.c.b16 %v2818, %v2816
        %v2953 = vpack.c.b16 %v2821, %v2819
        %v2954 = vpack.c.b16 %v2822, %v2820
        %v2955 = vpack.c.b16 %v2825, %v2823
        %v2956 = vpack.c.b16 %v2826, %v2824
        %v2957 = vpack.c.b16 %v2829, %v2827
        %v2958 = vpack.c.b16 %v2830, %v2828
        %v2959 = vpack.c.b16 %v2833, %v2831
        %v2960 = vpack.c.b16 %v2834, %v2832
        %v2961 = vpack.c.b16 %v2837, %v2835
        %v2962 = vpack.c.b16 %v2838, %v2836
        %v2963 = vpack.c.b16 %v2841, %v2839
        %v2964 = vpack.c.b16 %v2842, %v2840
        %v2965 = vpack.c.b16 %v2845, %v2843
        %v2966 = vpack.c.b16 %v2846, %v2844
        %v2967 = vpack.c.b16 %v2849, %v2847
        %v2968 = vpack.c.b16 %v2850, %v2848
        %v2969 = vpack.c.b16 %v2853, %v2851
        %v2970 = vpack.c.b16 %v2854, %v2852
        %v2971 = vpack.c.b16 %v2857, %v2855
        %v2972 = vpack.c.b16 %v2858, %v2856
        %v2973 = vpack.c.b16 %v2861, %v2859
        %v2974 = vpack.c.b16 %v2862, %v2860
        %v2975 = vpack.c.b16 %v2865, %v2863
        %v2976 = vpack.c.b16 %v2866, %v2864
        %v2977 = vpack.c.b16 %v2869, %v2867
        %v2978 = vpack.c.b16 %v2870, %v2868
        %v2979 = vpack.c.b16 %v2873, %v2871
        %v2980 = vpack.c.b16 %v2874, %v2872
        %v2981 = vpack.c.b16 %v2877, %v2875
        %v2982 = vpack.c.b16 %v2878, %v2876
        %v2983 = vpack.c.b16 %v2881, %v2879
        %v2984 = vpack.c.b16 %v2882, %v2880
        %v2985 = vpack.c.b16 %v2885, %v2883
        %v2986 = vpack.c.b16 %v2886, %v2884
        %v2987 = vpack.c.b16 %v2889, %v2887
        %v2988 = vpack.c.b16 %v2890, %v2888
        %v2989 = vpack.c.b16 %v2893, %v2891
        %v2990 = vpack.c.b16 %v2894, %v2892
        %3087 = vmatpush.bf16.msra.mxu0 %v2909
        %3088 = vmatpush.bf16.msra.mxu0 %v2907
        %3089 = vmatpush.bf16.msra.mxu0 %v2905
        %3090 = vmatpush.bf16.msra.mxu0 %v2903
        %3091 = vmatpush.bf16.msra.mxu0 %v2901
        %3092 = vmatpush.bf16.msra.mxu0 %v2899
        %3093 = vmatpush.bf16.msra.mxu0 %v2897
        %3094 = vmatpush.bf16.msra.mxu0 %v2895
        %3095 = vmatmul.bf16.gmra.mxu0 %v2499
        %v3096 = vpop.f32.mrf.mxu0
        %v3097 = vadd.f32 %v2603, %v3096
        %v3098 = vpop.f32.mrf.mxu0
        %3099 = vdwg.mxu0
        %3100 = vmatpush.bf16.msra.mxu0 %v2925
        %3101 = vmatpush.bf16.msra.mxu0 %v2923
        %3102 = vmatpush.bf16.msra.mxu0 %v2921
        %3103 = vmatpush.bf16.msra.mxu0 %v2919
        %3104 = vmatpush.bf16.msra.mxu0 %v2917
        %3105 = vmatpush.bf16.msra.mxu0 %v2915
        %3106 = vmatpush.bf16.msra.mxu0 %v2913
        %3107 = vmatpush.bf16.msra.mxu0 %v2911
        %3108 = vmatmul.bf16.gmra.mxu0 %v2500
        %v3109 = vpop.f32.mrf.mxu0
        %v3110 = vadd.f32 %v3097, %v3109
        %v3111 = vpop.f32.mrf.mxu0
        %3112 = vdwg.mxu0
        %3113 = vmatpush.bf16.msra.mxu0 %v2941
        %3114 = vmatpush.bf16.msra.mxu0 %v2939
        %3115 = vmatpush.bf16.msra.mxu0 %v2937
        %3116 = vmatpush.bf16.msra.mxu0 %v2935
        %3117 = vmatpush.bf16.msra.mxu0 %v2933
        %3118 = vmatpush.bf16.msra.mxu0 %v2931
        %3119 = vmatpush.bf16.msra.mxu0 %v2929
        %3120 = vmatpush.bf16.msra.mxu0 %v2927
        %3121 = vmatmul.bf16.gmra.mxu0 %v2501
        %v3122 = vpop.f32.mrf.mxu0
        %v3123 = vadd.f32 %v3110, %v3122
        %v3124 = vpop.f32.mrf.mxu0
        %3125 = vdwg.mxu0
        %3126 = vmatpush.bf16.msra.mxu0 %v2957
        %3127 = vmatpush.bf16.msra.mxu0 %v2955
        %3128 = vmatpush.bf16.msra.mxu0 %v2953
        %3129 = vmatpush.bf16.msra.mxu0 %v2951
        %3130 = vmatpush.bf16.msra.mxu0 %v2949
        %3131 = vmatpush.bf16.msra.mxu0 %v2947
        %3132 = vmatpush.bf16.msra.mxu0 %v2945
        %3133 = vmatpush.bf16.msra.mxu0 %v2943
        %3134 = vmatmul.bf16.gmra.mxu0 %v2502
        %v3135 = vpop.f32.mrf.mxu0
        %v3136 = vadd.f32 %v3123, %v3135
        %v3137 = vpop.f32.mrf.mxu0
        %3138 = vdwg.mxu0
        %3139 = vmatpush.bf16.msra.mxu0 %v2973
        %3140 = vmatpush.bf16.msra.mxu0 %v2971
        %3141 = vmatpush.bf16.msra.mxu0 %v2969
        %3142 = vmatpush.bf16.msra.mxu0 %v2967
        %3143 = vmatpush.bf16.msra.mxu0 %v2965
        %3144 = vmatpush.bf16.msra.mxu0 %v2963
        %3145 = vmatpush.bf16.msra.mxu0 %v2961
        %3146 = vmatpush.bf16.msra.mxu0 %v2959
        %3147 = vmatmul.bf16.gmra.mxu0 %v2503
        %v3148 = vpop.f32.mrf.mxu0
        %v3149 = vadd.f32 %v3136, %v3148
        %v3150 = vpop.f32.mrf.mxu0
        %3151 = vdwg.mxu0
        %3152 = vmatpush.bf16.msra.mxu0 %v2989
        %3153 = vmatpush.bf16.msra.mxu0 %v2987
        %3154 = vmatpush.bf16.msra.mxu0 %v2985
        %3155 = vmatpush.bf16.msra.mxu0 %v2983
        %3156 = vmatpush.bf16.msra.mxu0 %v2981
        %3157 = vmatpush.bf16.msra.mxu0 %v2979
        %3158 = vmatpush.bf16.msra.mxu0 %v2977
        %3159 = vmatpush.bf16.msra.mxu0 %v2975
        %3160 = vmatmul.bf16.gmra.mxu0 %v2504
        %v3161 = vpop.f32.mrf.mxu0
        %v3162 = vadd.f32 %v3149, %v3161
        %v3163 = vpop.f32.mrf.mxu0
        %3164 = vdwg.mxu0
        %3165 = vmatpush.bf16.msra.mxu0 %v2910
        %3166 = vmatpush.bf16.msra.mxu0 %v2908
        %3167 = vmatpush.bf16.msra.mxu0 %v2906
        %3168 = vmatpush.bf16.msra.mxu0 %v2904
        %3169 = vmatpush.bf16.msra.mxu0 %v2902
        %3170 = vmatpush.bf16.msra.mxu0 %v2900
        %3171 = vmatpush.bf16.msra.mxu0 %v2898
        %3172 = vmatpush.bf16.msra.mxu0 %v2896
        %3173 = vmatmul.bf16.gmra.mxu0 %v2499
        %v3174 = vpop.f32.mrf.mxu0
        %v3175 = vadd.f32 %v2604, %v3174
        %v3176 = vpop.f32.mrf.mxu0
        %3177 = vdwg.mxu0
        %3178 = vmatpush.bf16.msra.mxu0 %v2926
        %3179 = vmatpush.bf16.msra.mxu0 %v2924
        %3180 = vmatpush.bf16.msra.mxu0 %v2922
        %3181 = vmatpush.bf16.msra.mxu0 %v2920
        %3182 = vmatpush.bf16.msra.mxu0 %v2918
        %3183 = vmatpush.bf16.msra.mxu0 %v2916
        %3184 = vmatpush.bf16.msra.mxu0 %v2914
        %3185 = vmatpush.bf16.msra.mxu0 %v2912
        %3186 = vmatmul.bf16.gmra.mxu0 %v2500
        %v3187 = vpop.f32.mrf.mxu0
        %v3188 = vadd.f32 %v3175, %v3187
        %v3189 = vpop.f32.mrf.mxu0
        %3190 = vdwg.mxu0
        %3191 = vmatpush.bf16.msra.mxu0 %v2942
        %3192 = vmatpush.bf16.msra.mxu0 %v2940
        %3193 = vmatpush.bf16.msra.mxu0 %v2938
        %3194 = vmatpush.bf16.msra.mxu0 %v2936
        %3195 = vmatpush.bf16.msra.mxu0 %v2934
        %3196 = vmatpush.bf16.msra.mxu0 %v2932
        %3197 = vmatpush.bf16.msra.mxu0 %v2930
        %3198 = vmatpush.bf16.msra.mxu0 %v2928
        %3199 = vmatmul.bf16.gmra.mxu0 %v2501
        %v3200 = vpop.f32.mrf.mxu0
        %v3201 = vadd.f32 %v3188, %v3200
        %v3202 = vpop.f32.mrf.mxu0
        %3203 = vdwg.mxu0
        %3204 = vmatpush.bf16.msra.mxu0 %v2958
        %3205 = vmatpush.bf16.msra.mxu0 %v2956
        %3206 = vmatpush.bf16.msra.mxu0 %v2954
        %3207 = vmatpush.bf16.msra.mxu0 %v2952
        %3208 = vmatpush.bf16.msra.mxu0 %v2950
        %3209 = vmatpush.bf16.msra.mxu0 %v2948
        %3210 = vmatpush.bf16.msra.mxu0 %v2946
        %3211 = vmatpush.bf16.msra.mxu0 %v2944
        %3212 = vmatmul.bf16.gmra.mxu0 %v2502
        %v3213 = vpop.f32.mrf.mxu0
        %v3214 = vadd.f32 %v3201, %v3213
        %v3215 = vpop.f32.mrf.mxu0
        %3216 = vdwg.mxu0
        %3217 = vmatpush.bf16.msra.mxu0 %v2974
        %3218 = vmatpush.bf16.msra.mxu0 %v2972
        %3219 = vmatpush.bf16.msra.mxu0 %v2970
        %3220 = vmatpush.bf16.msra.mxu0 %v2968
        %3221 = vmatpush.bf16.msra.mxu0 %v2966
        %3222 = vmatpush.bf16.msra.mxu0 %v2964
        %3223 = vmatpush.bf16.msra.mxu0 %v2962
        %3224 = vmatpush.bf16.msra.mxu0 %v2960
        %3225 = vmatmul.bf16.gmra.mxu0 %v2503
        %v3226 = vpop.f32.mrf.mxu0
        %v3227 = vadd.f32 %v3214, %v3226
        %v3228 = vpop.f32.mrf.mxu0
        %3229 = vdwg.mxu0
        %3230 = vmatpush.bf16.msra.mxu0 %v2990
        %3231 = vmatpush.bf16.msra.mxu0 %v2988
        %3232 = vmatpush.bf16.msra.mxu0 %v2986
        %3233 = vmatpush.bf16.msra.mxu0 %v2984
        %3234 = vmatpush.bf16.msra.mxu0 %v2982
        %3235 = vmatpush.bf16.msra.mxu0 %v2980
        %3236 = vmatpush.bf16.msra.mxu0 %v2978
        %3237 = vmatpush.bf16.msra.mxu0 %v2976
        %3238 = vmatmul.bf16.gmra.mxu0 %v2504
        %v3239 = vpop.f32.mrf.mxu0
        %v3240 = vadd.f32 %v3227, %v3239
        %v3241 = vpop.f32.mrf.mxu0
        %3242 = vdwg.mxu0
        %v3243 = vpack.c.bf16 %v3162, %v3162
        %v3245 = vrot.slane %v1697, 1
        %3247 = vmatpush.bf16.xpose.msra.mxu0 0
        %3248 = vmatpush.bf16.xpose.msra.mxu0 0
        %3249 = vmatpush.bf16.xpose.msra.mxu0 0
        %3250 = vmatpush.bf16.xpose.msra.mxu0 0
        %3251 = vmatpush.bf16.xpose.msra.mxu0 0
        %3252 = vmatpush.bf16.xpose.msra.mxu0 0
        %3253 = vmatpush.bf16.xpose.msra.mxu0 0
        %3254 = vmatpush.bf16.xpose.msra.mxu0 %v3243
        %3255 = vmatmul.bf16.gmra.mxu0 %v3245
        %v3256 = vpop.f32.mrf.mxu0
        %v3257 = vadd.f32 0.0, %v3256
        %v3258 = vpop.f32.mrf.mxu0
        %3259 = vdwg.mxu0
        %v3260 = vmul.f32 %v3257, 0.088388346
        %v3261 = vsel %vm1716, %v3260, -inf
        %3262 = vmax.xlane.f32.xlu0 %v3261
        %v3263 = vpop.xlane.xlu0 %3262
        %v3264 = vsub.f32 %v3260, %v3263
        %v3265 = vmul.f32 %v3264, 1.442695
        %v3266 = vpow.pop %v3265
        %v3267 = vsel %vm1716, %v3266, 0.0
        %3268 = vadd.xlane.f32.xlu0 %v3267
        %v3269 = vpop.xlane.xlu0 %3268
        %v3270 = vrcp.pop %v3269
        %v3271 = vmul.f32 %v3266, %v3270
        %v3272 = vpack.c.bf16 %v3271, %v3271
        %v3273 = vpack.c.bf16 %v3240, %v3240
        %v3275 = vsel %vm1732, %v3272, 0
        %v3278 = vsel %vm1736, %v3273, 0
        %3280 = vmatpush.bf16.msra.mxu0 0
        %3281 = vmatpush.bf16.msra.mxu0 0
        %3282 = vmatpush.bf16.msra.mxu0 0
        %3283 = vmatpush.bf16.msra.mxu0 0
        %3284 = vmatpush.bf16.msra.mxu0 0
        %3285 = vmatpush.bf16.msra.mxu0 0
        %3286 = vmatpush.bf16.msra.mxu0 0
        %3287 = vmatpush.bf16.msra.mxu0 %v3278
        %3288 = vmatmul.bf16.gmra.mxu0 %v3275
        %v3289 = vpop.f32.mrf.mxu0
        %v3290 = vadd.f32 0.0, %v3289
        %v3291 = vpop.f32.mrf.mxu0
        %3292 = vdwg.mxu0
        %v3294 = vrot.slane %v3290, 6
        %v3296 = vpack.c.bf16 %v3294, %v3294
        %v3298 = vrot.slane %v3296, 1
        %3300 = vmatpush.bf16.msra.mxu0 %v2193
        %3301 = vmatpush.bf16.msra.mxu0 %v2187
        %3302 = vmatpush.bf16.msra.mxu0 %v2181
        %3303 = vmatpush.bf16.msra.mxu0 %v2175
        %3304 = vmatpush.bf16.msra.mxu0 %v2169
        %3305 = vmatpush.bf16.msra.mxu0 %v2163
        %3306 = vmatpush.bf16.msra.mxu0 %v2157
        %3307 = vmatpush.bf16.msra.mxu0 %v2151
        %3308 = vmatmul.bf16.gmra.mxu0 %v3245
        %v3309 = vpop.f32.mrf.mxu0
        %v3310 = vadd.f32 %v1851, %v3309
        %v3311 = vpop.f32.mrf.mxu0
        %3312 = vdwg.mxu0
        %3313 = vmatpush.bf16.msra.mxu0 %v2241
        %3314 = vmatpush.bf16.msra.mxu0 %v2235
        %3315 = vmatpush.bf16.msra.mxu0 %v2229
        %3316 = vmatpush.bf16.msra.mxu0 %v2223
        %3317 = vmatpush.bf16.msra.mxu0 %v2217
        %3318 = vmatpush.bf16.msra.mxu0 %v2211
        %3319 = vmatpush.bf16.msra.mxu0 %v2205
        %3320 = vmatpush.bf16.msra.mxu0 %v2199
        %3321 = vmatmul.bf16.gmra.mxu0 %v3298
        %v3322 = vpop.f32.mrf.mxu0
        %v3323 = vadd.f32 %v3310, %v3322
        %v3324 = vpop.f32.mrf.mxu0
        %3325 = vdwg.mxu0
        %3326 = vmatpush.bf16.msra.mxu0 %v2194
        %3327 = vmatpush.bf16.msra.mxu0 %v2188
        %3328 = vmatpush.bf16.msra.mxu0 %v2182
        %3329 = vmatpush.bf16.msra.mxu0 %v2176
        %3330 = vmatpush.bf16.msra.mxu0 %v2170
        %3331 = vmatpush.bf16.msra.mxu0 %v2164
        %3332 = vmatpush.bf16.msra.mxu0 %v2158
        %3333 = vmatpush.bf16.msra.mxu0 %v2152
        %3334 = vmatmul.bf16.gmra.mxu0 %v3245
        %v3335 = vpop.f32.mrf.mxu0
        %v3336 = vadd.f32 %v1852, %v3335
        %v3337 = vpop.f32.mrf.mxu0
        %3338 = vdwg.mxu0
        %3339 = vmatpush.bf16.msra.mxu0 %v2242
        %3340 = vmatpush.bf16.msra.mxu0 %v2236
        %3341 = vmatpush.bf16.msra.mxu0 %v2230
        %3342 = vmatpush.bf16.msra.mxu0 %v2224
        %3343 = vmatpush.bf16.msra.mxu0 %v2218
        %3344 = vmatpush.bf16.msra.mxu0 %v2212
        %3345 = vmatpush.bf16.msra.mxu0 %v2206
        %3346 = vmatpush.bf16.msra.mxu0 %v2200
        %3347 = vmatmul.bf16.gmra.mxu0 %v3298
        %v3348 = vpop.f32.mrf.mxu0
        %v3349 = vadd.f32 %v3336, %v3348
        %v3350 = vpop.f32.mrf.mxu0
        %3351 = vdwg.mxu0
        %3352 = vmatpush.bf16.msra.mxu0 %v2195
        %3353 = vmatpush.bf16.msra.mxu0 %v2189
        %3354 = vmatpush.bf16.msra.mxu0 %v2183
        %3355 = vmatpush.bf16.msra.mxu0 %v2177
        %3356 = vmatpush.bf16.msra.mxu0 %v2171
        %3357 = vmatpush.bf16.msra.mxu0 %v2165
        %3358 = vmatpush.bf16.msra.mxu0 %v2159
        %3359 = vmatpush.bf16.msra.mxu0 %v2153
        %3360 = vmatmul.bf16.gmra.mxu0 %v3245
        %v3361 = vpop.f32.mrf.mxu0
        %v3362 = vadd.f32 %v1853, %v3361
        %v3363 = vpop.f32.mrf.mxu0
        %3364 = vdwg.mxu0
        %3365 = vmatpush.bf16.msra.mxu0 %v2243
        %3366 = vmatpush.bf16.msra.mxu0 %v2237
        %3367 = vmatpush.bf16.msra.mxu0 %v2231
        %3368 = vmatpush.bf16.msra.mxu0 %v2225
        %3369 = vmatpush.bf16.msra.mxu0 %v2219
        %3370 = vmatpush.bf16.msra.mxu0 %v2213
        %3371 = vmatpush.bf16.msra.mxu0 %v2207
        %3372 = vmatpush.bf16.msra.mxu0 %v2201
        %3373 = vmatmul.bf16.gmra.mxu0 %v3298
        %v3374 = vpop.f32.mrf.mxu0
        %v3375 = vadd.f32 %v3362, %v3374
        %v3376 = vpop.f32.mrf.mxu0
        %3377 = vdwg.mxu0
        %3378 = vmatpush.bf16.msra.mxu0 %v2196
        %3379 = vmatpush.bf16.msra.mxu0 %v2190
        %3380 = vmatpush.bf16.msra.mxu0 %v2184
        %3381 = vmatpush.bf16.msra.mxu0 %v2178
        %3382 = vmatpush.bf16.msra.mxu0 %v2172
        %3383 = vmatpush.bf16.msra.mxu0 %v2166
        %3384 = vmatpush.bf16.msra.mxu0 %v2160
        %3385 = vmatpush.bf16.msra.mxu0 %v2154
        %3386 = vmatmul.bf16.gmra.mxu0 %v3245
        %v3387 = vpop.f32.mrf.mxu0
        %v3388 = vadd.f32 %v1854, %v3387
        %v3389 = vpop.f32.mrf.mxu0
        %3390 = vdwg.mxu0
        %3391 = vmatpush.bf16.msra.mxu0 %v2244
        %3392 = vmatpush.bf16.msra.mxu0 %v2238
        %3393 = vmatpush.bf16.msra.mxu0 %v2232
        %3394 = vmatpush.bf16.msra.mxu0 %v2226
        %3395 = vmatpush.bf16.msra.mxu0 %v2220
        %3396 = vmatpush.bf16.msra.mxu0 %v2214
        %3397 = vmatpush.bf16.msra.mxu0 %v2208
        %3398 = vmatpush.bf16.msra.mxu0 %v2202
        %3399 = vmatmul.bf16.gmra.mxu0 %v3298
        %v3400 = vpop.f32.mrf.mxu0
        %v3401 = vadd.f32 %v3388, %v3400
        %v3402 = vpop.f32.mrf.mxu0
        %3403 = vdwg.mxu0
        %3404 = vmatpush.bf16.msra.mxu0 %v2197
        %3405 = vmatpush.bf16.msra.mxu0 %v2191
        %3406 = vmatpush.bf16.msra.mxu0 %v2185
        %3407 = vmatpush.bf16.msra.mxu0 %v2179
        %3408 = vmatpush.bf16.msra.mxu0 %v2173
        %3409 = vmatpush.bf16.msra.mxu0 %v2167
        %3410 = vmatpush.bf16.msra.mxu0 %v2161
        %3411 = vmatpush.bf16.msra.mxu0 %v2155
        %3412 = vmatmul.bf16.gmra.mxu0 %v3245
        %v3413 = vpop.f32.mrf.mxu0
        %v3414 = vadd.f32 %v1855, %v3413
        %v3415 = vpop.f32.mrf.mxu0
        %3416 = vdwg.mxu0
        %3417 = vmatpush.bf16.msra.mxu0 %v2245
        %3418 = vmatpush.bf16.msra.mxu0 %v2239
        %3419 = vmatpush.bf16.msra.mxu0 %v2233
        %3420 = vmatpush.bf16.msra.mxu0 %v2227
        %3421 = vmatpush.bf16.msra.mxu0 %v2221
        %3422 = vmatpush.bf16.msra.mxu0 %v2215
        %3423 = vmatpush.bf16.msra.mxu0 %v2209
        %3424 = vmatpush.bf16.msra.mxu0 %v2203
        %3425 = vmatmul.bf16.gmra.mxu0 %v3298
        %v3426 = vpop.f32.mrf.mxu0
        %v3427 = vadd.f32 %v3414, %v3426
        %v3428 = vpop.f32.mrf.mxu0
        %3429 = vdwg.mxu0
        %3430 = vmatpush.bf16.msra.mxu0 %v2198
        %3431 = vmatpush.bf16.msra.mxu0 %v2192
        %3432 = vmatpush.bf16.msra.mxu0 %v2186
        %3433 = vmatpush.bf16.msra.mxu0 %v2180
        %3434 = vmatpush.bf16.msra.mxu0 %v2174
        %3435 = vmatpush.bf16.msra.mxu0 %v2168
        %3436 = vmatpush.bf16.msra.mxu0 %v2162
        %3437 = vmatpush.bf16.msra.mxu0 %v2156
        %3438 = vmatmul.bf16.gmra.mxu0 %v3245
        %v3439 = vpop.f32.mrf.mxu0
        %v3440 = vadd.f32 %v1856, %v3439
        %v3441 = vpop.f32.mrf.mxu0
        %3442 = vdwg.mxu0
        %3443 = vmatpush.bf16.msra.mxu0 %v2246
        %3444 = vmatpush.bf16.msra.mxu0 %v2240
        %3445 = vmatpush.bf16.msra.mxu0 %v2234
        %3446 = vmatpush.bf16.msra.mxu0 %v2228
        %3447 = vmatpush.bf16.msra.mxu0 %v2222
        %3448 = vmatpush.bf16.msra.mxu0 %v2216
        %3449 = vmatpush.bf16.msra.mxu0 %v2210
        %3450 = vmatpush.bf16.msra.mxu0 %v2204
        %3451 = vmatmul.bf16.gmra.mxu0 %v3298
        %v3452 = vpop.f32.mrf.mxu0
        %v3453 = vadd.f32 %v3440, %v3452
        %v3454 = vpop.f32.mrf.mxu0
        %3455 = vdwg.mxu0
        %v3456 = vld [vmem:[%s453] sm:$0xff]
        %v3457 = vld [vmem:[%s453 + $0x8] sm:$0xff]
        %v3458 = vld [vmem:[%s453 + $0x10] sm:$0xff]
        %v3459 = vld [vmem:[%s453 + $0x18] sm:$0xff]
        %v3460 = vld [vmem:[%s453 + $0x20] sm:$0xff]
        %v3461 = vld [vmem:[%s453 + $0x28] sm:$0xff]
        %v3462 = vld [vmem:[%s453 + $0x30] sm:$0x3]
        %v3463 = vld [vmem:[%s453 + $0x38] sm:$0x3]
        %v3464 = vld [vmem:[%s453 + $0x40] sm:$0x3]
        %v3465 = vld [vmem:[%s453 + $0x48] sm:$0x3]
        %v3466 = vld [vmem:[%s453 + $0x50] sm:$0x3]
        %v3467 = vld [vmem:[%s453 + $0x58] sm:$0x3]
        %v3468 = vmul.f32 %v3456, %v3456
        %v3469 = vmul.f32 %v3457, %v3457
        %v3470 = vmul.f32 %v3458, %v3458
        %v3471 = vmul.f32 %v3459, %v3459
        %v3472 = vmul.f32 %v3460, %v3460
        %v3473 = vmul.f32 %v3461, %v3461
        %v3474 = vmul.f32 %v3462, %v3462
        %v3475 = vmul.f32 %v3463, %v3463
        %v3476 = vmul.f32 %v3464, %v3464
        %v3477 = vmul.f32 %v3465, %v3465
        %v3478 = vmul.f32 %v3466, %v3466
        %v3479 = vmul.f32 %v3467, %v3467
        %v3480 = vadd.f32 %v3468, %v3469
        %v3481 = vadd.f32 %v3480, %v3470
        %v3482 = vadd.f32 %v3481, %v3471
        %v3483 = vadd.f32 %v3482, %v3472
        %v3484 = vadd.f32 %v3483, %v3473
        %3485 = vadd.xlane.f32.xlu0 %v3484
        %v3486 = vpop.xlane.xlu0 %3485
        %vm3487 = vcmask 1041408
        %v3488 = vsel %vm3487, %v3474, 0.0
        %v3489 = vsel %vm3487, %v3475, 0.0
        %v3490 = vadd.f32 %v3488, %v3489
        %v3491 = vsel %vm3487, %v3476, 0.0
        %v3492 = vadd.f32 %v3490, %v3491
        %v3493 = vsel %vm3487, %v3477, 0.0
        %v3494 = vadd.f32 %v3492, %v3493
        %v3495 = vsel %vm3487, %v3478, 0.0
        %v3496 = vadd.f32 %v3494, %v3495
        %v3497 = vsel %vm3487, %v3479, 0.0
        %v3498 = vadd.f32 %v3496, %v3497
        %3499 = vadd.xlane.f32.xlu0 %v3498
        %v3500 = vpop.xlane.xlu0 %3499
        %v3501 = vmax.f32 %v3486, 1e-16
        %v3502 = vmax.f32 %v3500, 1e-16
        %v3503 = vrsqrt.pop %v3501
        %v3504 = vmul.f32 %v3503, %v3501
        %v3505 = vmul.f32 %v3504, %v3503
        %v3506 = vmul.f32 0.5, %v3505
        %v3507 = vsub.f32 1.5, %v3506
        %v3508 = vmul.f32 %v3503, %v3507
        %vm3509 = vweird.f32 %v3501
        %vm3510 = vweird.f32 %v3503
        %vm3511 = vmor %vm3509, %vm3510
        %v3512 = vsel %vm3511, %v3503, %v3508
        %v3513 = vrsqrt.pop %v3502
        %v3514 = vmul.f32 %v3513, %v3502
        %v3515 = vmul.f32 %v3514, %v3513
        %v3516 = vmul.f32 0.5, %v3515
        %v3517 = vsub.f32 1.5, %v3516
        %v3518 = vmul.f32 %v3513, %v3517
        %vm3519 = vweird.f32 %v3502
        %vm3520 = vweird.f32 %v3513
        %vm3521 = vmor %vm3519, %vm3520
        %v3522 = vsel %vm3521, %v3513, %v3518
        %v3523 = vmul.f32 %v3456, %v3512
        %v3524 = vmul.f32 %v3457, %v3512
        %v3525 = vmul.f32 %v3458, %v3512
        %v3526 = vmul.f32 %v3459, %v3512
        %v3527 = vmul.f32 %v3460, %v3512
        %v3528 = vmul.f32 %v3461, %v3512
        %v3529 = vmul.f32 %v3462, %v3522
        %v3530 = vmul.f32 %v3463, %v3522
        %v3531 = vmul.f32 %v3464, %v3522
        %v3532 = vmul.f32 %v3465, %v3522
        %v3533 = vmul.f32 %v3466, %v3522
        %v3534 = vmul.f32 %v3467, %v3522
        %v3535 = vld [vmem:[%s8] sm:$0xff]
        %v3536 = vld [vmem:[%s8 + $0x8] sm:$0xff]
        %v3537 = vld [vmem:[%s8 + $0x10] sm:$0xff]
        %v3538 = vld [vmem:[%s8 + $0x18] sm:$0xff]
        %v3539 = vld [vmem:[%s8 + $0x20] sm:$0xff]
        %v3540 = vld [vmem:[%s8 + $0x28] sm:$0xff]
        %v3541 = vld [vmem:[%s8 + $0x30] sm:$0x3]
        %v3542 = vld [vmem:[%s8 + $0x38] sm:$0x3]
        %v3543 = vld [vmem:[%s8 + $0x40] sm:$0x3]
        %v3544 = vld [vmem:[%s8 + $0x48] sm:$0x3]
        %v3545 = vld [vmem:[%s8 + $0x50] sm:$0x3]
        %v3546 = vld [vmem:[%s8 + $0x58] sm:$0x3]
        %v3547 = vmul.f32 %v3456, %v3535
        %v3548 = vmul.f32 %v3457, %v3536
        %v3549 = vmul.f32 %v3458, %v3537
        %v3550 = vmul.f32 %v3459, %v3538
        %v3551 = vmul.f32 %v3460, %v3539
        %v3552 = vmul.f32 %v3461, %v3540
        %v3553 = vmul.f32 %v3462, %v3541
        %v3554 = vmul.f32 %v3463, %v3542
        %v3555 = vmul.f32 %v3464, %v3543
        %v3556 = vmul.f32 %v3465, %v3544
        %v3557 = vmul.f32 %v3466, %v3545
        %v3558 = vmul.f32 %v3467, %v3546
        %v3559 = vmul.f32 %v3547, %v3547
        %v3560 = vmul.f32 %v3548, %v3548
        %v3561 = vmul.f32 %v3549, %v3549
        %v3562 = vmul.f32 %v3550, %v3550
        %v3563 = vmul.f32 %v3551, %v3551
        %v3564 = vmul.f32 %v3552, %v3552
        %v3565 = vmul.f32 %v3553, %v3553
        %v3566 = vmul.f32 %v3554, %v3554
        %v3567 = vmul.f32 %v3555, %v3555
        %v3568 = vmul.f32 %v3556, %v3556
        %v3569 = vmul.f32 %v3557, %v3557
        %v3570 = vmul.f32 %v3558, %v3558
        %v3571 = vadd.f32 %v3559, %v3560
        %v3572 = vadd.f32 %v3571, %v3561
        %v3573 = vadd.f32 %v3572, %v3562
        %v3574 = vadd.f32 %v3573, %v3563
        %v3575 = vadd.f32 %v3574, %v3564
        %3576 = vadd.xlane.f32.xlu0 %v3575
        %v3577 = vpop.xlane.xlu0 %3576
        %v3578 = vsel %vm3487, %v3565, 0.0
        %v3579 = vsel %vm3487, %v3566, 0.0
        %v3580 = vadd.f32 %v3578, %v3579
        %v3581 = vsel %vm3487, %v3567, 0.0
        %v3582 = vadd.f32 %v3580, %v3581
        %v3583 = vsel %vm3487, %v3568, 0.0
        %v3584 = vadd.f32 %v3582, %v3583
        %v3585 = vsel %vm3487, %v3569, 0.0
        %v3586 = vadd.f32 %v3584, %v3585
        %v3587 = vsel %vm3487, %v3570, 0.0
        %v3588 = vadd.f32 %v3586, %v3587
        %3589 = vadd.xlane.f32.xlu0 %v3588
        %v3590 = vpop.xlane.xlu0 %3589
        %v3591 = vmax.f32 %v3577, 1e-16
        %v3592 = vmax.f32 %v3590, 1e-16
        %v3593 = vrsqrt.pop %v3591
        %v3594 = vmul.f32 %v3593, %v3591
        %v3595 = vmul.f32 %v3594, %v3593
        %v3596 = vmul.f32 0.5, %v3595
        %v3597 = vsub.f32 1.5, %v3596
        %v3598 = vmul.f32 %v3593, %v3597
        %vm3599 = vweird.f32 %v3591
        %vm3600 = vweird.f32 %v3593
        %vm3601 = vmor %vm3599, %vm3600
        %v3602 = vsel %vm3601, %v3593, %v3598
        %v3603 = vrsqrt.pop %v3592
        %v3604 = vmul.f32 %v3603, %v3592
        %v3605 = vmul.f32 %v3604, %v3603
        %v3606 = vmul.f32 0.5, %v3605
        %v3607 = vsub.f32 1.5, %v3606
        %v3608 = vmul.f32 %v3603, %v3607
        %vm3609 = vweird.f32 %v3592
        %vm3610 = vweird.f32 %v3603
        %vm3611 = vmor %vm3609, %vm3610
        %v3612 = vsel %vm3611, %v3603, %v3608
        %v3613 = vmul.f32 %v3547, %v3602
        %v3614 = vmul.f32 %v3548, %v3602
        %v3615 = vmul.f32 %v3549, %v3602
        %v3616 = vmul.f32 %v3550, %v3602
        %v3617 = vmul.f32 %v3551, %v3602
        %v3618 = vmul.f32 %v3552, %v3602
        %v3619 = vmul.f32 %v3553, %v3612
        %v3620 = vmul.f32 %v3554, %v3612
        %v3621 = vmul.f32 %v3555, %v3612
        %v3622 = vmul.f32 %v3556, %v3612
        %v3623 = vmul.f32 %v3557, %v3612
        %v3624 = vmul.f32 %v3558, %v3612
        %v3625 = vmul.f32 %v2366, %v2366
        %v3626 = vmul.f32 %v2392, %v2392
        %v3627 = vmul.f32 %v2418, %v2418
        %v3628 = vmul.f32 %v2444, %v2444
        %v3629 = vmul.f32 %v2470, %v2470
        %v3630 = vmul.f32 %v2496, %v2496
        %v3631 = vsel %vm3487, %v3625, 0.0
        %v3632 = vsel %vm3487, %v3626, 0.0
        %v3633 = vadd.f32 %v3631, %v3632
        %v3634 = vsel %vm3487, %v3627, 0.0
        %v3635 = vadd.f32 %v3633, %v3634
        %v3636 = vsel %vm3487, %v3628, 0.0
        %v3637 = vadd.f32 %v3635, %v3636
        %v3638 = vsel %vm3487, %v3629, 0.0
        %v3639 = vadd.f32 %v3637, %v3638
        %v3640 = vsel %vm3487, %v3630, 0.0
        %v3641 = vadd.f32 %v3639, %v3640
        %3642 = vadd.xlane.f32.xlu0 %v3641
        %v3643 = vpop.xlane.xlu0 %3642
        %v3644 = vmax.f32 %v3643, 1e-16
        %v3645 = vrsqrt.pop %v3644
        %v3646 = vmul.f32 %v3645, %v3644
        %v3647 = vmul.f32 %v3646, %v3645
        %v3648 = vmul.f32 0.5, %v3647
        %v3649 = vsub.f32 1.5, %v3648
        %v3650 = vmul.f32 %v3645, %v3649
        %vm3651 = vweird.f32 %v3644
        %vm3652 = vweird.f32 %v3645
        %vm3653 = vmor %vm3651, %vm3652
        %v3654 = vsel %vm3653, %v3645, %v3650
        %v3655 = vmul.f32 %v2366, %v3654
        %v3656 = vmul.f32 %v2392, %v3654
        %v3657 = vmul.f32 %v2418, %v3654
        %v3658 = vmul.f32 %v2444, %v3654
        %v3659 = vmul.f32 %v2470, %v3654
        %v3660 = vmul.f32 %v2496, %v3654
        %v3661 = vld [vmem:[%s9] sm:$0x3f]
        %v3663 = vperm.slane %v3661, 0
        %v3664 = vperm.slane %v3661, 1
        %v3665 = vperm.slane %v3661, 2
        %v3666 = vperm.slane %v3661, 3
        %v3667 = vperm.slane %v3661, 4
        %v3668 = vperm.slane %v3661, 5
        %v3675 = vmul.f32 %v3323, %v3663
        %v3676 = vmul.f32 %v3349, %v3664
        %v3677 = vmul.f32 %v3375, %v3665
        %v3678 = vmul.f32 %v3401, %v3666
        %v3679 = vmul.f32 %v3427, %v3667
        %v3680 = vmul.f32 %v3453, %v3668
        %v3681 = vmul.f32 %v3675, %v3675
        %v3682 = vmul.f32 %v3676, %v3676
        %v3683 = vmul.f32 %v3677, %v3677
        %v3684 = vmul.f32 %v3678, %v3678
        %v3685 = vmul.f32 %v3679, %v3679
        %v3686 = vmul.f32 %v3680, %v3680
        %v3687 = vsel %vm3487, %v3681, 0.0
        %v3688 = vsel %vm3487, %v3682, 0.0
        %v3689 = vadd.f32 %v3687, %v3688
        %v3690 = vsel %vm3487, %v3683, 0.0
        %v3691 = vadd.f32 %v3689, %v3690
        %v3692 = vsel %vm3487, %v3684, 0.0
        %v3693 = vadd.f32 %v3691, %v3692
        %v3694 = vsel %vm3487, %v3685, 0.0
        %v3695 = vadd.f32 %v3693, %v3694
        %v3696 = vsel %vm3487, %v3686, 0.0
        %v3697 = vadd.f32 %v3695, %v3696
        %3698 = vadd.xlane.f32.xlu0 %v3697
        %v3699 = vpop.xlane.xlu0 %3698
        %v3700 = vmax.f32 %v3699, 1e-16
        %v3701 = vrsqrt.pop %v3700
        %v3702 = vmul.f32 %v3701, %v3700
        %v3703 = vmul.f32 %v3702, %v3701
        %v3704 = vmul.f32 0.5, %v3703
        %v3705 = vsub.f32 1.5, %v3704
        %v3706 = vmul.f32 %v3701, %v3705
        %vm3707 = vweird.f32 %v3700
        %vm3708 = vweird.f32 %v3701
        %vm3709 = vmor %vm3707, %vm3708
        %v3710 = vsel %vm3709, %v3701, %v3706
        %v3711 = vmul.f32 %v3675, %v3710
        %v3712 = vmul.f32 %v3676, %v3710
        %v3713 = vmul.f32 %v3677, %v3710
        %v3714 = vmul.f32 %v3678, %v3710
        %v3715 = vmul.f32 %v3679, %v3710
        %v3716 = vmul.f32 %v3680, %v3710
        %3717 = vmatpush.xpose.msra.mxu0 0.0
        %3718 = vmatpush.xpose.msra.mxu0 0.0
        %3719 = vmatpush.xpose.msra.mxu0 0.0
        %3720 = vmatpush.xpose.msra.mxu0 0.0
        %3721 = vmatpush.xpose.msra.mxu0 0.0
        %3722 = vmatpush.xpose.msra.mxu0 0.0
        %3723 = vmatpush.xpose.msra.mxu0 0.0
        %3724 = vmatpush.xpose.msra.mxu0 0.0
        %3725 = vmatpush.xpose.msra.mxu0 0.0
        %3726 = vmatpush.xpose.msra.mxu0 0.0
        %3727 = vmatpush.xpose.msra.mxu0 0.0
        %3728 = vmatpush.xpose.msra.mxu0 0.0
        %3729 = vmatpush.xpose.msra.mxu0 0.0
        %3730 = vmatpush.xpose.msra.mxu0 0.0
        %3731 = vmatpush.xpose.msra.mxu0 %v3529
        %3732 = vmatpush.xpose.msra.mxu0 %v3523
        %3733 = vmatmul.f32.gmra.mxu0 %v3655
        %v3734 = vpop.f32.mrf.mxu0
        %v3735 = vadd.f32 0.0, %v3734
        %3736 = vdwg.mxu0
        %3737 = vmatpush.xpose.msra.mxu0 0.0
        %3738 = vmatpush.xpose.msra.mxu0 0.0
        %3739 = vmatpush.xpose.msra.mxu0 0.0
        %3740 = vmatpush.xpose.msra.mxu0 0.0
        %3741 = vmatpush.xpose.msra.mxu0 0.0
        %3742 = vmatpush.xpose.msra.mxu0 0.0
        %3743 = vmatpush.xpose.msra.mxu0 0.0
        %3744 = vmatpush.xpose.msra.mxu0 0.0
        %3745 = vmatpush.xpose.msra.mxu0 0.0
        %3746 = vmatpush.xpose.msra.mxu0 0.0
        %3747 = vmatpush.xpose.msra.mxu0 0.0
        %3748 = vmatpush.xpose.msra.mxu0 0.0
        %3749 = vmatpush.xpose.msra.mxu0 0.0
        %3750 = vmatpush.xpose.msra.mxu0 0.0
        %3751 = vmatpush.xpose.msra.mxu0 %v3530
        %3752 = vmatpush.xpose.msra.mxu0 %v3524
        %3753 = vmatmul.f32.gmra.mxu0 %v3656
        %v3754 = vpop.f32.mrf.mxu0
        %v3755 = vadd.f32 %v3735, %v3754
        %3756 = vdwg.mxu0
        %3757 = vmatpush.xpose.msra.mxu0 0.0
        %3758 = vmatpush.xpose.msra.mxu0 0.0
        %3759 = vmatpush.xpose.msra.mxu0 0.0
        %3760 = vmatpush.xpose.msra.mxu0 0.0
        %3761 = vmatpush.xpose.msra.mxu0 0.0
        %3762 = vmatpush.xpose.msra.mxu0 0.0
        %3763 = vmatpush.xpose.msra.mxu0 0.0
        %3764 = vmatpush.xpose.msra.mxu0 0.0
        %3765 = vmatpush.xpose.msra.mxu0 0.0
        %3766 = vmatpush.xpose.msra.mxu0 0.0
        %3767 = vmatpush.xpose.msra.mxu0 0.0
        %3768 = vmatpush.xpose.msra.mxu0 0.0
        %3769 = vmatpush.xpose.msra.mxu0 0.0
        %3770 = vmatpush.xpose.msra.mxu0 0.0
        %3771 = vmatpush.xpose.msra.mxu0 %v3531
        %3772 = vmatpush.xpose.msra.mxu0 %v3525
        %3773 = vmatmul.f32.gmra.mxu0 %v3657
        %v3774 = vpop.f32.mrf.mxu0
        %v3775 = vadd.f32 %v3755, %v3774
        %3776 = vdwg.mxu0
        %3777 = vmatpush.xpose.msra.mxu0 0.0
        %3778 = vmatpush.xpose.msra.mxu0 0.0
        %3779 = vmatpush.xpose.msra.mxu0 0.0
        %3780 = vmatpush.xpose.msra.mxu0 0.0
        %3781 = vmatpush.xpose.msra.mxu0 0.0
        %3782 = vmatpush.xpose.msra.mxu0 0.0
        %3783 = vmatpush.xpose.msra.mxu0 0.0
        %3784 = vmatpush.xpose.msra.mxu0 0.0
        %3785 = vmatpush.xpose.msra.mxu0 0.0
        %3786 = vmatpush.xpose.msra.mxu0 0.0
        %3787 = vmatpush.xpose.msra.mxu0 0.0
        %3788 = vmatpush.xpose.msra.mxu0 0.0
        %3789 = vmatpush.xpose.msra.mxu0 0.0
        %3790 = vmatpush.xpose.msra.mxu0 0.0
        %3791 = vmatpush.xpose.msra.mxu0 %v3532
        %3792 = vmatpush.xpose.msra.mxu0 %v3526
        %3793 = vmatmul.f32.gmra.mxu0 %v3658
        %v3794 = vpop.f32.mrf.mxu0
        %v3795 = vadd.f32 %v3775, %v3794
        %3796 = vdwg.mxu0
        %3797 = vmatpush.xpose.msra.mxu0 0.0
        %3798 = vmatpush.xpose.msra.mxu0 0.0
        %3799 = vmatpush.xpose.msra.mxu0 0.0
        %3800 = vmatpush.xpose.msra.mxu0 0.0
        %3801 = vmatpush.xpose.msra.mxu0 0.0
        %3802 = vmatpush.xpose.msra.mxu0 0.0
        %3803 = vmatpush.xpose.msra.mxu0 0.0
        %3804 = vmatpush.xpose.msra.mxu0 0.0
        %3805 = vmatpush.xpose.msra.mxu0 0.0
        %3806 = vmatpush.xpose.msra.mxu0 0.0
        %3807 = vmatpush.xpose.msra.mxu0 0.0
        %3808 = vmatpush.xpose.msra.mxu0 0.0
        %3809 = vmatpush.xpose.msra.mxu0 0.0
        %3810 = vmatpush.xpose.msra.mxu0 0.0
        %3811 = vmatpush.xpose.msra.mxu0 %v3533
        %3812 = vmatpush.xpose.msra.mxu0 %v3527
        %3813 = vmatmul.f32.gmra.mxu0 %v3659
        %v3814 = vpop.f32.mrf.mxu0
        %v3815 = vadd.f32 %v3795, %v3814
        %3816 = vdwg.mxu0
        %3817 = vmatpush.xpose.msra.mxu0 0.0
        %3818 = vmatpush.xpose.msra.mxu0 0.0
        %3819 = vmatpush.xpose.msra.mxu0 0.0
        %3820 = vmatpush.xpose.msra.mxu0 0.0
        %3821 = vmatpush.xpose.msra.mxu0 0.0
        %3822 = vmatpush.xpose.msra.mxu0 0.0
        %3823 = vmatpush.xpose.msra.mxu0 0.0
        %3824 = vmatpush.xpose.msra.mxu0 0.0
        %3825 = vmatpush.xpose.msra.mxu0 0.0
        %3826 = vmatpush.xpose.msra.mxu0 0.0
        %3827 = vmatpush.xpose.msra.mxu0 0.0
        %3828 = vmatpush.xpose.msra.mxu0 0.0
        %3829 = vmatpush.xpose.msra.mxu0 0.0
        %3830 = vmatpush.xpose.msra.mxu0 0.0
        %3831 = vmatpush.xpose.msra.mxu0 %v3534
        %3832 = vmatpush.xpose.msra.mxu0 %v3528
        %3833 = vmatmul.f32.gmra.mxu0 %v3660
        %v3834 = vpop.f32.mrf.mxu0
        %v3835 = vadd.f32 %v3815, %v3834
        %3836 = vdwg.mxu0
        %3837 = vmatpush.xpose.msra.mxu0 0.0
        %3838 = vmatpush.xpose.msra.mxu0 0.0
        %3839 = vmatpush.xpose.msra.mxu0 0.0
        %3840 = vmatpush.xpose.msra.mxu0 0.0
        %3841 = vmatpush.xpose.msra.mxu0 0.0
        %3842 = vmatpush.xpose.msra.mxu0 0.0
        %3843 = vmatpush.xpose.msra.mxu0 0.0
        %3844 = vmatpush.xpose.msra.mxu0 0.0
        %3845 = vmatpush.xpose.msra.mxu0 0.0
        %3846 = vmatpush.xpose.msra.mxu0 0.0
        %3847 = vmatpush.xpose.msra.mxu0 0.0
        %3848 = vmatpush.xpose.msra.mxu0 0.0
        %3849 = vmatpush.xpose.msra.mxu0 0.0
        %3850 = vmatpush.xpose.msra.mxu0 0.0
        %3851 = vmatpush.xpose.msra.mxu0 %v3619
        %3852 = vmatpush.xpose.msra.mxu0 %v3613
        %3853 = vmatmul.f32.gmra.mxu0 %v3711
        %v3854 = vpop.f32.mrf.mxu0
        %v3855 = vadd.f32 0.0, %v3854
        %3856 = vdwg.mxu0
        %3857 = vmatpush.xpose.msra.mxu0 0.0
        %3858 = vmatpush.xpose.msra.mxu0 0.0
        %3859 = vmatpush.xpose.msra.mxu0 0.0
        %3860 = vmatpush.xpose.msra.mxu0 0.0
        %3861 = vmatpush.xpose.msra.mxu0 0.0
        %3862 = vmatpush.xpose.msra.mxu0 0.0
        %3863 = vmatpush.xpose.msra.mxu0 0.0
        %3864 = vmatpush.xpose.msra.mxu0 0.0
        %3865 = vmatpush.xpose.msra.mxu0 0.0
        %3866 = vmatpush.xpose.msra.mxu0 0.0
        %3867 = vmatpush.xpose.msra.mxu0 0.0
        %3868 = vmatpush.xpose.msra.mxu0 0.0
        %3869 = vmatpush.xpose.msra.mxu0 0.0
        %3870 = vmatpush.xpose.msra.mxu0 0.0
        %3871 = vmatpush.xpose.msra.mxu0 %v3620
        %3872 = vmatpush.xpose.msra.mxu0 %v3614
        %3873 = vmatmul.f32.gmra.mxu0 %v3712
        %v3874 = vpop.f32.mrf.mxu0
        %v3875 = vadd.f32 %v3855, %v3874
        %3876 = vdwg.mxu0
        %3877 = vmatpush.xpose.msra.mxu0 0.0
        %3878 = vmatpush.xpose.msra.mxu0 0.0
        %3879 = vmatpush.xpose.msra.mxu0 0.0
        %3880 = vmatpush.xpose.msra.mxu0 0.0
        %3881 = vmatpush.xpose.msra.mxu0 0.0
        %3882 = vmatpush.xpose.msra.mxu0 0.0
        %3883 = vmatpush.xpose.msra.mxu0 0.0
        %3884 = vmatpush.xpose.msra.mxu0 0.0
        %3885 = vmatpush.xpose.msra.mxu0 0.0
        %3886 = vmatpush.xpose.msra.mxu0 0.0
        %3887 = vmatpush.xpose.msra.mxu0 0.0
        %3888 = vmatpush.xpose.msra.mxu0 0.0
        %3889 = vmatpush.xpose.msra.mxu0 0.0
        %3890 = vmatpush.xpose.msra.mxu0 0.0
        %3891 = vmatpush.xpose.msra.mxu0 %v3621
        %3892 = vmatpush.xpose.msra.mxu0 %v3615
        %3893 = vmatmul.f32.gmra.mxu0 %v3713
        %v3894 = vpop.f32.mrf.mxu0
        %v3895 = vadd.f32 %v3875, %v3894
        %3896 = vdwg.mxu0
        %3897 = vmatpush.xpose.msra.mxu0 0.0
        %3898 = vmatpush.xpose.msra.mxu0 0.0
        %3899 = vmatpush.xpose.msra.mxu0 0.0
        %3900 = vmatpush.xpose.msra.mxu0 0.0
        %3901 = vmatpush.xpose.msra.mxu0 0.0
        %3902 = vmatpush.xpose.msra.mxu0 0.0
        %3903 = vmatpush.xpose.msra.mxu0 0.0
        %3904 = vmatpush.xpose.msra.mxu0 0.0
        %3905 = vmatpush.xpose.msra.mxu0 0.0
        %3906 = vmatpush.xpose.msra.mxu0 0.0
        %3907 = vmatpush.xpose.msra.mxu0 0.0
        %3908 = vmatpush.xpose.msra.mxu0 0.0
        %3909 = vmatpush.xpose.msra.mxu0 0.0
        %3910 = vmatpush.xpose.msra.mxu0 0.0
        %3911 = vmatpush.xpose.msra.mxu0 %v3622
        %3912 = vmatpush.xpose.msra.mxu0 %v3616
        %3913 = vmatmul.f32.gmra.mxu0 %v3714
        %v3914 = vpop.f32.mrf.mxu0
        %v3915 = vadd.f32 %v3895, %v3914
        %3916 = vdwg.mxu0
        %3917 = vmatpush.xpose.msra.mxu0 0.0
        %3918 = vmatpush.xpose.msra.mxu0 0.0
        %3919 = vmatpush.xpose.msra.mxu0 0.0
        %3920 = vmatpush.xpose.msra.mxu0 0.0
        %3921 = vmatpush.xpose.msra.mxu0 0.0
        %3922 = vmatpush.xpose.msra.mxu0 0.0
        %3923 = vmatpush.xpose.msra.mxu0 0.0
        %3924 = vmatpush.xpose.msra.mxu0 0.0
        %3925 = vmatpush.xpose.msra.mxu0 0.0
        %3926 = vmatpush.xpose.msra.mxu0 0.0
        %3927 = vmatpush.xpose.msra.mxu0 0.0
        %3928 = vmatpush.xpose.msra.mxu0 0.0
        %3929 = vmatpush.xpose.msra.mxu0 0.0
        %3930 = vmatpush.xpose.msra.mxu0 0.0
        %3931 = vmatpush.xpose.msra.mxu0 %v3623
        %3932 = vmatpush.xpose.msra.mxu0 %v3617
        %3933 = vmatmul.f32.gmra.mxu0 %v3715
        %v3934 = vpop.f32.mrf.mxu0
        %v3935 = vadd.f32 %v3915, %v3934
        %3936 = vdwg.mxu0
        %3937 = vmatpush.xpose.msra.mxu0 0.0
        %3938 = vmatpush.xpose.msra.mxu0 0.0
        %3939 = vmatpush.xpose.msra.mxu0 0.0
        %3940 = vmatpush.xpose.msra.mxu0 0.0
        %3941 = vmatpush.xpose.msra.mxu0 0.0
        %3942 = vmatpush.xpose.msra.mxu0 0.0
        %3943 = vmatpush.xpose.msra.mxu0 0.0
        %3944 = vmatpush.xpose.msra.mxu0 0.0
        %3945 = vmatpush.xpose.msra.mxu0 0.0
        %3946 = vmatpush.xpose.msra.mxu0 0.0
        %3947 = vmatpush.xpose.msra.mxu0 0.0
        %3948 = vmatpush.xpose.msra.mxu0 0.0
        %3949 = vmatpush.xpose.msra.mxu0 0.0
        %3950 = vmatpush.xpose.msra.mxu0 0.0
        %3951 = vmatpush.xpose.msra.mxu0 %v3624
        %3952 = vmatpush.xpose.msra.mxu0 %v3618
        %3953 = vmatmul.f32.gmra.mxu0 %v3716
        %v3954 = vpop.f32.mrf.mxu0
        %v3955 = vadd.f32 %v3935, %v3954
        %3956 = vdwg.mxu0
        %v3957 = vld [vmem:[%s458] sm:$0xff]
        %v3958 = vld [vmem:[%s458 + $0x8] sm:$0xff]
        %v3959 = vld [vmem:[%s458 + $0x10] sm:$0xff]
        %v3960 = vld [vmem:[%s10] sm:$0x3f]
        %v3962 = vperm.slane %v3960, 0
        %v3963 = vperm.slane %v3960, 1
        %v3964 = vperm.slane %v3960, 2
        %v3965 = vperm.slane %v3960, 3
        %v3966 = vperm.slane %v3960, 4
        %v3967 = vperm.slane %v3960, 5
        %v3968 = vrot.slane %v3963, 4
        %v3969 = vrot.slane %v3965, 4
        %v3970 = vrot.slane %v3967, 4
        %vm3971 = vcmask 1043456
        %v3972 = vsel %vm3971, %v3962, %v3968
        %v3973 = vsel %vm3971, %v3964, %v3969
        %v3974 = vsel %vm3971, %v3966, %v3970
        %v3978 = vmul.f32 %v3957, %v3972
        %v3979 = vmul.f32 %v3958, %v3973
        %v3980 = vmul.f32 %v3959, %v3974
        %v3981 = vmul.f32 %v3978, %v3978
        %v3982 = vmul.f32 %v3979, %v3979
        %v3983 = vmul.f32 %v3980, %v3980
        %3987 = vst [vmem:[#allocation1] ss:$2 sm:$0xff] %v3981
        %s3988 = scalar_lea.vmem [#allocation1], 16
        %3989 = vst [vmem:[%s3988] ss:$2 sm:$0xff] %v3982
        %s3990 = scalar_lea.vmem [#allocation1], 32
        %3991 = vst [vmem:[%s3990] ss:$2 sm:$0xff] %v3983
        %v3992 = vld.sshfl [vmem:[#allocation1] sm:$0xff pattern:$0x75316420]
        %v3993 = vld.sshfl [vmem:[#allocation1 + $0x8] sm:$0xff pattern:$0x75316420]
        %v3994 = vld.sshfl [vmem:[#allocation1 + $0x10] sm:$0xff pattern:$0x75316420]
        %v3995 = vld.sshfl [vmem:[#allocation1 + $0x18] sm:$0xff pattern:$0x75316420]
        %v3996 = vld.sshfl [vmem:[#allocation1 + $0x20] sm:$0xff pattern:$0x75316420]
        %v3997 = vld.sshfl [vmem:[#allocation1 + $0x28] sm:$0xff pattern:$0x75316420]
        %v4004 = vsel %vm3971, %v3992, 0.0
        %v4005 = vsel %vm3971, %v3993, 0.0
        %v4006 = vadd.f32 %v4004, %v4005
        %v4007 = vsel %vm3971, %v3994, 0.0
        %v4008 = vadd.f32 %v4006, %v4007
        %v4009 = vsel %vm3971, %v3995, 0.0
        %v4010 = vadd.f32 %v4008, %v4009
        %v4011 = vsel %vm3971, %v3996, 0.0
        %v4012 = vadd.f32 %v4010, %v4011
        %v4013 = vsel %vm3971, %v3997, 0.0
        %v4014 = vadd.f32 %v4012, %v4013
        %4015 = vadd.xlane.f32.xlu0 %v4014
        %v4016 = vpop.xlane.xlu0 %4015
        %v4017 = vmax.f32 %v4016, 1e-16
        %v4018 = vrsqrt.pop %v4017
        %v4019 = vmul.f32 %v4018, %v4017
        %v4020 = vmul.f32 %v4019, %v4018
        %v4021 = vmul.f32 0.5, %v4020
        %v4022 = vsub.f32 1.5, %v4021
        %v4023 = vmul.f32 %v4018, %v4022
        %vm4024 = vweird.f32 %v4017
        %vm4025 = vweird.f32 %v4018
        %vm4026 = vmor %vm4024, %vm4025
        %v4027 = vsel %vm4026, %v4018, %v4023
        %v4030 = vunpack.c.l.s4 839922192
        %v4031 = vunpack.c.0.s8 %v4030
        %v4032 = vperm.slane %v4027, %v4031
        %v4034 = vmul.f32 %v3978, %v4032
        %v4035 = vmul.f32 %v3979, %v4032
        %v4036 = vmul.f32 %v3980, %v4032
        %4040 = vst [vmem:[#allocation1] ss:$2 sm:$0xff] %v4034
        %s4041 = scalar_lea.vmem [#allocation1], 16
        %4042 = vst [vmem:[%s4041] ss:$2 sm:$0xff] %v4035
        %s4043 = scalar_lea.vmem [#allocation1], 32
        %4044 = vst [vmem:[%s4043] ss:$2 sm:$0xff] %v4036
        %v4045 = vld.sshfl [vmem:[#allocation1] sm:$0xff pattern:$0x75316420]
        %v4046 = vld.sshfl [vmem:[#allocation1 + $0x8] sm:$0xff pattern:$0x75316420]
        %v4047 = vld.sshfl [vmem:[#allocation1 + $0x10] sm:$0xff pattern:$0x75316420]
        %v4048 = vld.sshfl [vmem:[#allocation1 + $0x18] sm:$0xff pattern:$0x75316420]
        %v4049 = vld.sshfl [vmem:[#allocation1 + $0x20] sm:$0xff pattern:$0x75316420]
        %v4050 = vld.sshfl [vmem:[#allocation1 + $0x28] sm:$0xff pattern:$0x75316420]
        %v4057 = vsel %vm3971, %v4045, 0.0
        %v4058 = vrot.slane %v4057, 4
        %v4059 = vadd.f32 %v4057, %v4058
        %v4060 = vrot.slane %v4059, 2
        %v4061 = vadd.f32 %v4059, %v4060
        %v4062 = vrot.slane %v4061, 1
        %v4063 = vadd.f32 %v4061, %v4062
        %v4064 = vsel %vm3971, %v4046, 0.0
        %v4065 = vrot.slane %v4064, 4
        %v4066 = vadd.f32 %v4064, %v4065
        %v4067 = vrot.slane %v4066, 2
        %v4068 = vadd.f32 %v4066, %v4067
        %v4069 = vrot.slane %v4068, 1
        %v4070 = vadd.f32 %v4068, %v4069
        %v4071 = vsel %vm3971, %v4047, 0.0
        %v4072 = vrot.slane %v4071, 4
        %v4073 = vadd.f32 %v4071, %v4072
        %v4074 = vrot.slane %v4073, 2
        %v4075 = vadd.f32 %v4073, %v4074
        %v4076 = vrot.slane %v4075, 1
        %v4077 = vadd.f32 %v4075, %v4076
        %v4078 = vsel %vm3971, %v4048, 0.0
        %v4079 = vrot.slane %v4078, 4
        %v4080 = vadd.f32 %v4078, %v4079
        %v4081 = vrot.slane %v4080, 2
        %v4082 = vadd.f32 %v4080, %v4081
        %v4083 = vrot.slane %v4082, 1
        %v4084 = vadd.f32 %v4082, %v4083
        %v4085 = vsel %vm3971, %v4049, 0.0
        %v4086 = vrot.slane %v4085, 4
        %v4087 = vadd.f32 %v4085, %v4086
        %v4088 = vrot.slane %v4087, 2
        %v4089 = vadd.f32 %v4087, %v4088
        %v4090 = vrot.slane %v4089, 1
        %v4091 = vadd.f32 %v4089, %v4090
        %v4092 = vsel %vm3971, %v4050, 0.0
        %v4093 = vrot.slane %v4092, 4
        %v4094 = vadd.f32 %v4092, %v4093
        %v4095 = vrot.slane %v4094, 2
        %v4096 = vadd.f32 %v4094, %v4095
        %v4097 = vrot.slane %v4096, 1
        %v4098 = vadd.f32 %v4096, %v4097
        %4099 = vmatpush.xpose.msra.mxu0 0.0
        %4100 = vmatpush.xpose.msra.mxu0 0.0
        %4101 = vmatpush.xpose.msra.mxu0 0.0
        %4102 = vmatpush.xpose.msra.mxu0 0.0
        %4103 = vmatpush.xpose.msra.mxu0 0.0
        %4104 = vmatpush.xpose.msra.mxu0 0.0
        %4105 = vmatpush.xpose.msra.mxu0 0.0
        %4106 = vmatpush.xpose.msra.mxu0 0.0
        %4107 = vmatpush.xpose.msra.mxu0 0.0
        %4108 = vmatpush.xpose.msra.mxu0 0.0
        %4109 = vmatpush.xpose.msra.mxu0 0.0
        %4110 = vmatpush.xpose.msra.mxu0 0.0
        %4111 = vmatpush.xpose.msra.mxu0 0.0
        %4112 = vmatpush.xpose.msra.mxu0 0.0
        %4113 = vmatpush.xpose.msra.mxu0 %v3619
        %4114 = vmatpush.xpose.msra.mxu0 %v3613
        %4115 = vmatmul.f32.gmra.mxu0 %v4063
        %v4116 = vpop.f32.mrf.mxu0
        %v4117 = vadd.f32 0.0, %v4116
        %4118 = vdwg.mxu0
        %4119 = vmatpush.xpose.msra.mxu0 0.0
        %4120 = vmatpush.xpose.msra.mxu0 0.0
        %4121 = vmatpush.xpose.msra.mxu0 0.0
        %4122 = vmatpush.xpose.msra.mxu0 0.0
        %4123 = vmatpush.xpose.msra.mxu0 0.0
        %4124 = vmatpush.xpose.msra.mxu0 0.0
        %4125 = vmatpush.xpose.msra.mxu0 0.0
        %4126 = vmatpush.xpose.msra.mxu0 0.0
        %4127 = vmatpush.xpose.msra.mxu0 0.0
        %4128 = vmatpush.xpose.msra.mxu0 0.0
        %4129 = vmatpush.xpose.msra.mxu0 0.0
        %4130 = vmatpush.xpose.msra.mxu0 0.0
        %4131 = vmatpush.xpose.msra.mxu0 0.0
        %4132 = vmatpush.xpose.msra.mxu0 0.0
        %4133 = vmatpush.xpose.msra.mxu0 %v3620
        %4134 = vmatpush.xpose.msra.mxu0 %v3614
        %4135 = vmatmul.f32.gmra.mxu0 %v4070
        %v4136 = vpop.f32.mrf.mxu0
        %v4137 = vadd.f32 %v4117, %v4136
        %4138 = vdwg.mxu0
        %4139 = vmatpush.xpose.msra.mxu0 0.0
        %4140 = vmatpush.xpose.msra.mxu0 0.0
        %4141 = vmatpush.xpose.msra.mxu0 0.0
        %4142 = vmatpush.xpose.msra.mxu0 0.0
        %4143 = vmatpush.xpose.msra.mxu0 0.0
        %4144 = vmatpush.xpose.msra.mxu0 0.0
        %4145 = vmatpush.xpose.msra.mxu0 0.0
        %4146 = vmatpush.xpose.msra.mxu0 0.0
        %4147 = vmatpush.xpose.msra.mxu0 0.0
        %4148 = vmatpush.xpose.msra.mxu0 0.0
        %4149 = vmatpush.xpose.msra.mxu0 0.0
        %4150 = vmatpush.xpose.msra.mxu0 0.0
        %4151 = vmatpush.xpose.msra.mxu0 0.0
        %4152 = vmatpush.xpose.msra.mxu0 0.0
        %4153 = vmatpush.xpose.msra.mxu0 %v3621
        %4154 = vmatpush.xpose.msra.mxu0 %v3615
        %4155 = vmatmul.f32.gmra.mxu0 %v4077
        %v4156 = vpop.f32.mrf.mxu0
        %v4157 = vadd.f32 %v4137, %v4156
        %4158 = vdwg.mxu0
        %4159 = vmatpush.xpose.msra.mxu0 0.0
        %4160 = vmatpush.xpose.msra.mxu0 0.0
        %4161 = vmatpush.xpose.msra.mxu0 0.0
        %4162 = vmatpush.xpose.msra.mxu0 0.0
        %4163 = vmatpush.xpose.msra.mxu0 0.0
        %4164 = vmatpush.xpose.msra.mxu0 0.0
        %4165 = vmatpush.xpose.msra.mxu0 0.0
        %4166 = vmatpush.xpose.msra.mxu0 0.0
        %4167 = vmatpush.xpose.msra.mxu0 0.0
        %4168 = vmatpush.xpose.msra.mxu0 0.0
        %4169 = vmatpush.xpose.msra.mxu0 0.0
        %4170 = vmatpush.xpose.msra.mxu0 0.0
        %4171 = vmatpush.xpose.msra.mxu0 0.0
        %4172 = vmatpush.xpose.msra.mxu0 0.0
        %4173 = vmatpush.xpose.msra.mxu0 %v3622
        %4174 = vmatpush.xpose.msra.mxu0 %v3616
        %4175 = vmatmul.f32.gmra.mxu0 %v4084
        %v4176 = vpop.f32.mrf.mxu0
        %v4177 = vadd.f32 %v4157, %v4176
        %4178 = vdwg.mxu0
        %4179 = vmatpush.xpose.msra.mxu0 0.0
        %4180 = vmatpush.xpose.msra.mxu0 0.0
        %4181 = vmatpush.xpose.msra.mxu0 0.0
        %4182 = vmatpush.xpose.msra.mxu0 0.0
        %4183 = vmatpush.xpose.msra.mxu0 0.0
        %4184 = vmatpush.xpose.msra.mxu0 0.0
        %4185 = vmatpush.xpose.msra.mxu0 0.0
        %4186 = vmatpush.xpose.msra.mxu0 0.0
        %4187 = vmatpush.xpose.msra.mxu0 0.0
        %4188 = vmatpush.xpose.msra.mxu0 0.0
        %4189 = vmatpush.xpose.msra.mxu0 0.0
        %4190 = vmatpush.xpose.msra.mxu0 0.0
        %4191 = vmatpush.xpose.msra.mxu0 0.0
        %4192 = vmatpush.xpose.msra.mxu0 0.0
        %4193 = vmatpush.xpose.msra.mxu0 %v3623
        %4194 = vmatpush.xpose.msra.mxu0 %v3617
        %4195 = vmatmul.f32.gmra.mxu0 %v4091
        %v4196 = vpop.f32.mrf.mxu0
        %v4197 = vadd.f32 %v4177, %v4196
        %4198 = vdwg.mxu0
        %4199 = vmatpush.xpose.msra.mxu0 0.0
        %4200 = vmatpush.xpose.msra.mxu0 0.0
        %4201 = vmatpush.xpose.msra.mxu0 0.0
        %4202 = vmatpush.xpose.msra.mxu0 0.0
        %4203 = vmatpush.xpose.msra.mxu0 0.0
        %4204 = vmatpush.xpose.msra.mxu0 0.0
        %4205 = vmatpush.xpose.msra.mxu0 0.0
        %4206 = vmatpush.xpose.msra.mxu0 0.0
        %4207 = vmatpush.xpose.msra.mxu0 0.0
        %4208 = vmatpush.xpose.msra.mxu0 0.0
        %4209 = vmatpush.xpose.msra.mxu0 0.0
        %4210 = vmatpush.xpose.msra.mxu0 0.0
        %4211 = vmatpush.xpose.msra.mxu0 0.0
        %4212 = vmatpush.xpose.msra.mxu0 0.0
        %4213 = vmatpush.xpose.msra.mxu0 %v3624
        %4214 = vmatpush.xpose.msra.mxu0 %v3618
        %4215 = vmatmul.f32.gmra.mxu0 %v4098
        %v4216 = vpop.f32.mrf.mxu0
        %v4217 = vadd.f32 %v4197, %v4216
        %4218 = vdwg.mxu0
        %v4219 = vmul.f32 %v4217, 0.25
        %v4220 = vld [vmem:[%s448] sm:$0xff]
        %v4221 = vld [vmem:[%s448 + $0x8] sm:$0xf]
        %v4222 = vrot.slane %v465, 2
        %v4223 = vrot.slane %v466, 4
        %v4224 = vrot.slane %v466, 6
        %v4225 = vrot.slane %v467, 2
        %v4226 = vsel %vm3487, %v465, %v4222
        %vm4227 = vcmask 1045508
        %v4228 = vsel %vm4227, %v4223, %v4224
        %v4229 = vsel %vm3971, %v4226, %v4228
        %v4230 = vsel %vm3487, %v467, %v4225
        %v4233 = vmul.f32 %v4220, %v4229
        %v4234 = vmul.f32 %v4221, %v4230
        %4237 = vst [vmem:[#allocation1] ss:$4 sm:$0xff] %v4233
        %s4238 = scalar_lea.vmem [#allocation1], 32
        %4239 = vst [vmem:[%s4238] ss:$4 sm:$0xff] %v4234
        %v4240 = vld.sshfl [vmem:[#allocation1] sm:$0xff pattern:$0x73625140]
        %v4241 = vld.sshfl [vmem:[#allocation1 + $0x8] sm:$0xff pattern:$0x73625140]
        %v4242 = vld.sshfl [vmem:[#allocation1 + $0x10] sm:$0xff pattern:$0x73625140]
        %v4243 = vld.sshfl [vmem:[#allocation1 + $0x18] sm:$0xff pattern:$0x73625140]
        %v4244 = vld.sshfl [vmem:[#allocation1 + $0x20] sm:$0xff pattern:$0x73625140]
        %v4245 = vld.sshfl [vmem:[#allocation1 + $0x28] sm:$0xff pattern:$0x73625140]
        %v4252 = vsel %vm3487, %v4240, 0.0
        %v4253 = vsel %vm3487, %v4241, 0.0
        %v4254 = vadd.f32 %v4252, %v4253
        %v4255 = vsel %vm3487, %v4242, 0.0
        %v4256 = vadd.f32 %v4254, %v4255
        %v4257 = vsel %vm3487, %v4243, 0.0
        %v4258 = vadd.f32 %v4256, %v4257
        %v4259 = vsel %vm3487, %v4244, 0.0
        %v4260 = vadd.f32 %v4258, %v4259
        %v4261 = vsel %vm3487, %v4245, 0.0
        %v4262 = vadd.f32 %v4260, %v4261
        %4263 = vadd.xlane.f32.xlu0 %v4262
        %v4264 = vpop.xlane.xlu0 %4263
        %v4265 = vmul.f32 %v4220, %v4220
        %v4266 = vmul.f32 %v4221, %v4221
        %4269 = vst [vmem:[#allocation1] ss:$4 sm:$0xff] %v4265
        %s4270 = scalar_lea.vmem [#allocation1], 32
        %4271 = vst [vmem:[%s4270] ss:$4 sm:$0xff] %v4266
        %v4272 = vld.sshfl [vmem:[#allocation1] sm:$0xff pattern:$0x73625140]
        %v4273 = vld.sshfl [vmem:[#allocation1 + $0x8] sm:$0xff pattern:$0x73625140]
        %v4274 = vld.sshfl [vmem:[#allocation1 + $0x10] sm:$0xff pattern:$0x73625140]
        %v4275 = vld.sshfl [vmem:[#allocation1 + $0x18] sm:$0xff pattern:$0x73625140]
        %v4276 = vld.sshfl [vmem:[#allocation1 + $0x20] sm:$0xff pattern:$0x73625140]
        %v4277 = vld.sshfl [vmem:[#allocation1 + $0x28] sm:$0xff pattern:$0x73625140]
        %v4284 = vsel %vm3487, %v4272, 0.0
        %v4285 = vsel %vm3487, %v4273, 0.0
        %v4286 = vadd.f32 %v4284, %v4285
        %v4287 = vsel %vm3487, %v4274, 0.0
        %v4288 = vadd.f32 %v4286, %v4287
        %v4289 = vsel %vm3487, %v4275, 0.0
        %v4290 = vadd.f32 %v4288, %v4289
        %v4291 = vsel %vm3487, %v4276, 0.0
        %v4292 = vadd.f32 %v4290, %v4291
        %v4293 = vsel %vm3487, %v4277, 0.0
        %v4294 = vadd.f32 %v4292, %v4293
        %4295 = vadd.xlane.f32.xlu0 %v4294
        %v4296 = vpop.xlane.xlu0 %4295
        %v4297 = vmax.f32 %v4296, 1e-16
        %v4298 = vrsqrt.pop %v4297
        %v4299 = vmul.f32 %v4298, %v4297
        %v4300 = vmul.f32 %v4299, %v4298
        %v4301 = vmul.f32 0.5, %v4300
        %v4302 = vsub.f32 1.5, %v4301
        %v4303 = vmul.f32 %v4298, %v4302
        %vm4304 = vweird.f32 %v4297
        %vm4305 = vweird.f32 %v4298
        %vm4306 = vmor %vm4304, %vm4305
        %v4307 = vsel %vm4306, %v4298, %v4303
        %v4308 = vmul.f32 %v4264, %v4307
        %v4309 = vmul.f32 %v465, %v465
        %v4310 = vmul.f32 %v466, %v466
        %v4311 = vmul.f32 %v467, %v467
        %4315 = vst [vmem:[#allocation1] ss:$2 sm:$0xff] %v4309
        %s4316 = scalar_lea.vmem [#allocation1], 16
        %4317 = vst [vmem:[%s4316] ss:$2 sm:$0xff] %v4310
        %s4318 = scalar_lea.vmem [#allocation1], 32
        %4319 = vst [vmem:[%s4318] ss:$2 sm:$0xff] %v4311
        %v4320 = vld.sshfl [vmem:[#allocation1] sm:$0xff pattern:$0x75316420]
        %v4321 = vld.sshfl [vmem:[#allocation1 + $0x8] sm:$0xff pattern:$0x75316420]
        %v4322 = vld.sshfl [vmem:[#allocation1 + $0x10] sm:$0xff pattern:$0x75316420]
        %v4323 = vld.sshfl [vmem:[#allocation1 + $0x18] sm:$0xff pattern:$0x75316420]
        %v4324 = vld.sshfl [vmem:[#allocation1 + $0x20] sm:$0xff pattern:$0x75316420]
        %v4325 = vld.sshfl [vmem:[#allocation1 + $0x28] sm:$0xff pattern:$0x75316420]
        %v4332 = vsel %vm3487, %v4320, 0.0
        %v4333 = vsel %vm3487, %v4321, 0.0
        %v4334 = vadd.f32 %v4332, %v4333
        %v4335 = vsel %vm3487, %v4322, 0.0
        %v4336 = vadd.f32 %v4334, %v4335
        %v4337 = vsel %vm3487, %v4323, 0.0
        %v4338 = vadd.f32 %v4336, %v4337
        %v4339 = vsel %vm3487, %v4324, 0.0
        %v4340 = vadd.f32 %v4338, %v4339
        %v4341 = vsel %vm3487, %v4325, 0.0
        %v4342 = vadd.f32 %v4340, %v4341
        %4343 = vadd.xlane.f32.xlu0 %v4342
        %v4344 = vpop.xlane.xlu0 %4343
        %v4345 = vmax.f32 %v4344, 1e-16
        %v4346 = vrsqrt.pop %v4345
        %v4347 = vmul.f32 %v4346, %v4345
        %v4348 = vmul.f32 %v4347, %v4346
        %v4349 = vmul.f32 0.5, %v4348
        %v4350 = vsub.f32 1.5, %v4349
        %v4351 = vmul.f32 %v4346, %v4350
        %vm4352 = vweird.f32 %v4345
        %vm4353 = vweird.f32 %v4346
        %vm4354 = vmor %vm4352, %vm4353
        %v4355 = vsel %vm4354, %v4346, %v4351
        %v4356 = vmul.f32 %v4308, %v4355
        %vm4357 = vcmask 74752
        %4358 = vst.msk [vmem:[%s463] sm:$0x3] %vm4357, %v3835
        %s4359 = scalar_lea.vmem %s463, 2
        %4360 = vst.msk [vmem:[%s4359] sm:$0x3] %vm4357, %v3955
        %v4361 = vperm.slane %v4219, 0
        %s4362 = scalar_lea.vmem %s463, 4
        %4363 = vst.msk [vmem:[%s4362] sm:$0x3] %vm4357, %v4361
        %s4364 = scalar_lea.vmem %s463, 6
        %4365 = vst.msk [vmem:[%s4364] sm:$0x3] %vm4357, %v4356
        %p4366 = scmp.lt.s32.totalorder %s23, 2
        %s4367 = scalar_select %p4366, %s23, 2
        %s4368 = smul.addr %s4367, 4
        %s4369 = smul.addr %s4368, 2
        %s4370 = scalar_lea.vmem %s11, %s4369
        // Predicated region
        $region69: #{reranker_forward_batched.1} parent=63 // pred_check
          %p4371 = pneg %p292
        $region70: #{reranker_forward_batched.1} parent=63 // pred_check_branch
          %4373 = sbr.rel (%p4371) target = $region72
        $region71: #{reranker_forward_batched.1} parent=63 // pred_region
          _
        $region72: #{reranker_forward_batched.1} parent=63 // pred_fallthru
          _
      $region64: #{reranker_forward_batched.1} parent=5 // pred_fallthru
        _
      %p4374 = scmp.le.s32.totalorder 2, %s18
      // Predicated region
      $region73: #{reranker_forward_batched.1} parent=5 // pred_check
        %p4375 = pneg %p4374
      $region74: #{reranker_forward_batched.1} parent=5 // pred_check_branch
        %4377 = sbr.rel (%p4375) target = $region76
      $region75: #{reranker_forward_batched.1} parent=5 // pred_region
        %s4378 = ssub.s32 %s18, 2
        // Predicated region
        $region77: #{reranker_forward_batched.1} parent=75 // pred_check
          %p4379 = pneg %p298
        $region78: #{reranker_forward_batched.1} parent=75 // pred_check_branch
          %4381 = sbr.rel (%p4379) target = $region80
        $region79: #{reranker_forward_batched.1} parent=75 // pred_region
          %p4382 = scmp.lt.s32.totalorder %s24, 2
          %s4383 = scalar_select %p4382, %s24, 2
          %s4384 = smul.addr %s4383, 4
          %s4385 = smul.addr %s4384, 2
          %s4386 = scalar_lea.vmem %s11, %s4385
        $region80: #{reranker_forward_batched.1} parent=75 // pred_fallthru
          _
      $region76: #{reranker_forward_batched.1} parent=5 // pred_fallthru
        _
    $region6: #{reranker_forward_batched.1} parent=1 // loop_footer
      %s22 = sadd.s32 1, %s18
    $region7: #{reranker_forward_batched.1} parent=1 // loop_footer_branch
      %17 = sbr.rel target = $region3
    $region8: #{reranker_forward_batched.1} parent=1 // loop_exit
      _
    %4387 = vsyncpa [#allocation3], 1
    %s4388 = scalar_lea.sflag [#allocation3], 1
    %4389 = vsyncpa %s4388, 1

</llo_original>
